<compile_context>
chip_gen: v5e
topology: v5e:2x2
jax: 0.10.0
libtpu: 0.0.40
codegen_flags: <defaults>
</compile_context>

<pallas_src>
import math
import functools

import jax
import jax.numpy as jnp
from jax import lax
from jax.experimental import pallas as pl
from jax.experimental.pallas import tpu as pltpu


# ----------------------------------------------------------------------------
# Tiling helper
# ----------------------------------------------------------------------------

_MAX_LANE_TILE = 16384  # multiple of 128; (8, 16384) f32 block = 0.5 MiB


def _pick_tile(hw, parallel_hint=1):
    """Lane tile (multiple of 128, or the full extent) and tile count."""
    if hw <= _MAX_LANE_TILE:
        tn, nt = hw, 1
    else:
        tn, nt = _MAX_LANE_TILE, pl.cdiv(hw, _MAX_LANE_TILE)
    # v7x megacore: make sure the parallel grid has >= 2 blocks when it is cheap.
    if parallel_hint * nt < 2 and hw >= 256 and hw % 256 == 0:
        tn, nt = hw // 2, 2
    return tn, nt


# ----------------------------------------------------------------------------
# Pallas kernels (all f32; small-K matmuls on the MXU, epilogues on VPU/EUP)
# ----------------------------------------------------------------------------

def _fre_conv_pair_kernel(over_ref, under_ref, w_ref, b_ref, o_ref, *, eps):
    # FreBlock: y = conv1x1(x) + eps, for both branches in one pass.
    y0 = jnp.dot(w_ref[0], over_ref[...], preferred_element_type=jnp.float32)
    o_ref[0] = y0 + b_ref[0] + eps
    y1 = jnp.dot(w_ref[1], under_ref[...], preferred_element_type=jnp.float32)
    o_ref[1] = y1 + b_ref[1] + eps


def _freq_fuse_kernel(amp_ref, pha_ref, aw_ref, ab_ref, pw_ref, pb_ref,
                      real_ref, imag_ref, *, slope):
    # amp_fuse chain: split-K over the [over | under] halves of the first conv.
    ha = (jnp.dot(aw_ref[0], amp_ref[0], preferred_element_type=jnp.float32)
          + jnp.dot(aw_ref[1], amp_ref[1], preferred_element_type=jnp.float32)
          + ab_ref[0])
    ha = jnp.where(ha >= 0.0, ha, slope * ha)                      # LeakyReLU(0.1)
    fre_amp = jnp.dot(aw_ref[2], ha, preferred_element_type=jnp.float32) + ab_ref[1]

    # pha_fuse chain.
    hp = (jnp.dot(pw_ref[0], pha_ref[0], preferred_element_type=jnp.float32)
          + jnp.dot(pw_ref[1], pha_ref[1], preferred_element_type=jnp.float32)
          + pb_ref[0])
    hp = jnp.where(hp >= 0.0, hp, slope * hp)
    fre_pha = jnp.dot(pw_ref[2], hp, preferred_element_type=jnp.float32) + pb_ref[1]

    # torch: real = amp*cos(pha)+1e-8; imag = amp*sin(pha)+1e-8;
    #        complex(real, imag) + 1e-8 adds another 1e-8 to the real part.
    real_ref[...] = fre_amp * jnp.cos(fre_pha) + 2e-8
    imag_ref[...] = fre_amp * jnp.sin(fre_pha) + 1e-8


def _abs_conv1x1_kernel(x_ref, w_ref, b_ref, o_ref):
    # fre_output(torch.abs(irfft2(...))): abs fused into the conv kernel.
    xa = jnp.abs(x_ref[...])
    y = jnp.dot(w_ref[...], xa, preferred_element_type=jnp.float32)
    o_ref[...] = y + b_ref[...]


# ----------------------------------------------------------------------------
# pallas_call wrappers
# ----------------------------------------------------------------------------

def fre_conv_pair(over, under, w, b, *, eps=1e-8):
    """over/under: (B, C, HW) f32; w: (2, C, C); b: (2, C, 1) -> (2, B, C, HW)."""
    B, C, HW = over.shape
    tn, nt = _pick_tile(HW, parallel_hint=B)
    flops = 2 * 2 * B * C * C * HW
    bytes_acc = (over.size + under.size + w.size + b.size + 2 * B * C * HW) * 4
    return pl.pallas_call(
        functools.partial(_fre_conv_pair_kernel, eps=float(eps)),
        grid=(B, nt),
        in_specs=[
            pl.BlockSpec((None, C, tn), lambda bb, t: (bb, 0, t)),
            pl.BlockSpec((None, C, tn), lambda bb, t: (bb, 0, t)),
            pl.BlockSpec((2, C, C), lambda bb, t: (0, 0, 0)),
            pl.BlockSpec((2, C, 1), lambda bb, t: (0, 0, 0)),
        ],
        out_specs=pl.BlockSpec((2, None, C, tn), lambda bb, t: (0, bb, 0, t)),
        out_shape=jax.ShapeDtypeStruct((2, B, C, HW), jnp.float32),
        compiler_params=pltpu.CompilerParams(
            dimension_semantics=("parallel", "parallel")),
        cost_estimate=pl.CostEstimate(flops=flops, transcendentals=0,
                                      bytes_accessed=bytes_acc),
    )(over, under, w, b)


def freq_fuse(amp, pha, amp_w, amp_b, pha_w, pha_b, *, slope=0.1):
    """amp/pha: (2, B, C, HWp) f32; *_w: (3, C, C) = [w1_over, w1_under, w2];
       *_b: (2, C, 1) = [b1, b2]  ->  (real, imag) each (B, C, HWp) f32."""
    _, B, C, HWp = amp.shape
    tn, nt = _pick_tile(HWp, parallel_hint=B)
    flops = 2 * B * HWp * (3 * C * C) * 2
    bytes_acc = (amp.size + pha.size + 2 * B * C * HWp
                 + amp_w.size + amp_b.size + pha_w.size + pha_b.size) * 4
    out_sds = jax.ShapeDtypeStruct((B, C, HWp), jnp.float32)
    return pl.pallas_call(
        functools.partial(_freq_fuse_kernel, slope=float(slope)),
        grid=(B, nt),
        in_specs=[
            pl.BlockSpec((2, None, C, tn), lambda bb, t: (0, bb, 0, t)),
            pl.BlockSpec((2, None, C, tn), lambda bb, t: (0, bb, 0, t)),
            pl.BlockSpec((3, C, C), lambda bb, t: (0, 0, 0)),
            pl.BlockSpec((2, C, 1), lambda bb, t: (0, 0, 0)),
            pl.BlockSpec((3, C, C), lambda bb, t: (0, 0, 0)),
            pl.BlockSpec((2, C, 1), lambda bb, t: (0, 0, 0)),
        ],
        out_specs=[
            pl.BlockSpec((None, C, tn), lambda bb, t: (bb, 0, t)),
            pl.BlockSpec((None, C, tn), lambda bb, t: (bb, 0, t)),
        ],
        out_shape=(out_sds, out_sds),
        compiler_params=pltpu.CompilerParams(
            dimension_semantics=("parallel", "parallel")),
        cost_estimate=pl.CostEstimate(flops=flops,
                                      transcendentals=2 * B * C * HWp,
                                      bytes_accessed=bytes_acc),
    )(amp, pha, amp_w, amp_b, pha_w, pha_b)


def abs_conv1x1(x, w, b):
    """x: (B, Cin, HW) f32; w: (Cout, Cin); b: (Cout, 1) -> (B, Cout, HW)."""
    B, Cin, HW = x.shape
    Cout = w.shape[0]
    tn, nt = _pick_tile(HW, parallel_hint=B)
    flops = 2 * B * Cout * Cin * HW
    bytes_acc = (x.size + w.size + b.size + B * Cout * HW) * 4
    return pl.pallas_call(
        _abs_conv1x1_kernel,
        grid=(B, nt),
        in_specs=[
            pl.BlockSpec((None, Cin, tn), lambda bb, t: (bb, 0, t)),
            pl.BlockSpec((Cout, Cin), lambda bb, t: (0, 0)),
            pl.BlockSpec((Cout, 1), lambda bb, t: (0, 0)),
        ],
        out_specs=pl.BlockSpec((None, Cout, tn), lambda bb, t: (bb, 0, t)),
        out_shape=jax.ShapeDtypeStruct((B, Cout, HW), jnp.float32),
        compiler_params=pltpu.CompilerParams(
            dimension_semantics=("parallel", "parallel")),
        cost_estimate=pl.CostEstimate(flops=flops, transcendentals=0,
                                      bytes_accessed=bytes_acc),
    )(x, w, b)


# ----------------------------------------------------------------------------
# Parameter init: torch-Conv2d-like uniform(-1/sqrt(fan_in), 1/sqrt(fan_in)),
# pre-stacked once into the exact layouts the kernels consume (all f32).
# ----------------------------------------------------------------------------

def init_fre_layer_params(key, in_channels, out_channels):
    C = in_channels

    def u(k, shape, fan_in):
        bound = 1.0 / math.sqrt(fan_in)
        return jax.random.uniform(k, shape, jnp.float32, -bound, bound)

    ks = jax.random.split(key, 16)
    return {
        # FreBlock convs, stacked [over, under]
        "fre_w": jnp.stack([u(ks[0], (C, C), C), u(ks[1], (C, C), C)]),
        "fre_b": jnp.stack([u(ks[2], (C, 1), C), u(ks[3], (C, 1), C)]),
        # amp_fuse: first conv (C, 2C) stored as its two (C, C) halves, then second conv
        "amp_w": jnp.stack([u(ks[4], (C, C), 2 * C), u(ks[5], (C, C), 2 * C),
                            u(ks[6], (C, C), C)]),
        "amp_b": jnp.stack([u(ks[7], (C, 1), 2 * C), u(ks[8], (C, 1), C)]),
        # pha_fuse
        "pha_w": jnp.stack([u(ks[9], (C, C), 2 * C), u(ks[10], (C, C), 2 * C),
                            u(ks[11], (C, C), C)]),
        "pha_b": jnp.stack([u(ks[12], (C, 1), 2 * C), u(ks[13], (C, 1), C)]),
        # output conv
        "out_w": u(ks[14], (out_channels, C), C),
        "out_b": u(ks[15], (out_channels, 1), C),
    }


# ----------------------------------------------------------------------------
# FreLayer forward (mirrors the PyTorch module, NCHW)
# ----------------------------------------------------------------------------

def fre_layer_forward(params, over, under):
    B, C, H, W = over.shape
    HW = H * W

    # --- FreBlock 1x1 convs (+1e-8), both branches in one Pallas kernel ---
    y = fre_conv_pair(over.reshape(B, C, HW), under.reshape(B, C, HW),
                      params["fre_w"], params["fre_b"], eps=1e-8)   # (2,B,C,HW)

    # --- rfft2 + amp/angle (jnp.fft glue; no Pallas equivalent) ---
    yf = jnp.fft.rfft2(y.reshape(2, B, C, H, W), axes=(-2, -1))     # (2,B,C,H,Wf)
    Wf = yf.shape[-1]
    HWf = H * Wf
    amp = jnp.abs(yf).reshape(2, B, C, HWf)
    pha = jnp.angle(yf).reshape(2, B, C, HWf)

    # Pad the rFFT-domain lane dim to a multiple of 128 -> unmasked (lane-dense) stores.
    HWp = -(-HWf // 128) * 128
    if HWp != HWf:
        pad = ((0, 0), (0, 0), (0, 0), (0, HWp - HWf))
        amp = jnp.pad(amp, pad)
        pha = jnp.pad(pha, pad)

    # --- amp_fuse + pha_fuse + cos/sin complex re-assembly, all in one kernel ---
    real, imag = freq_fuse(amp, pha, params["amp_w"], params["amp_b"],
                           params["pha_w"], params["pha_b"], slope=0.1)
    real = real[..., :HWf].reshape(B, C, H, Wf)
    imag = imag[..., :HWf].reshape(B, C, H, Wf)
    fusion_fre = lax.complex(real, imag)

    # --- inverse FFT (jnp.fft glue), then abs() + output conv fused in Pallas ---
    spat = jnp.fft.irfft2(fusion_fre, s=(H, W), axes=(-2, -1))      # (B,C,H,W)
    out = abs_conv1x1(spat.reshape(B, C, HW), params["out_w"], params["out_b"])
    return out.reshape(B, -1, H, W)


# ----------------------------------------------------------------------------

if __name__ == "__main__":
    B, C, H, W = 2, 8, 16, 16
    out_channels = 8

    key = jax.random.PRNGKey(0)
    k_over, k_under, k_param = jax.random.split(key, 3)
    over = jax.random.normal(k_over, (B, C, H, W), jnp.float32)
    under = jax.random.normal(k_under, (B, C, H, W), jnp.float32)

    params = init_fre_layer_params(k_param, C, out_channels)

    fwd = jax.jit(fre_layer_forward)
    out = jax.block_until_ready(fwd(params, over, under))

    assert out.shape == (B, out_channels, H, W), out.shape
    assert bool(jnp.all(jnp.isfinite(out)))
    print("KERNEL_OK")
</pallas_src>

<mosaic_0001>
module attributes {stable_mosaic.version = 11 : i64} {
  func.func @_fre_conv_pair_kernel(%arg0: i32, %arg1: i32, %arg2: memref<1x8x256xf32, #tpu.memory_space<vmem>>, %arg3: memref<1x8x256xf32, #tpu.memory_space<vmem>>, %arg4: memref<2x8x8xf32, #tpu.memory_space<vmem>>, %arg5: memref<2x8x1xf32, #tpu.memory_space<vmem>>, %arg6: memref<2x1x8x256xf32, #tpu.memory_space<vmem>>) attributes {dimension_semantics = [#tpu.dimension_semantics<parallel>, #tpu.dimension_semantics<parallel>], iteration_bounds = array<i64: 2, 1>, scalar_prefetch = 0 : i64, scratch_operands = 0 : i64, tpu.core_type = #tpu.core_type<tc>, window_params = [{transform_indices = @transform_0, window_bounds = array<i64: 1, 8, 256>}, {transform_indices = @transform_1, window_bounds = array<i64: 1, 8, 256>}, {pipeline_mode = #tpu.pipeline_mode<synchronous>, transform_indices = @transform_2, window_bounds = array<i64: 2, 8, 8>}, {pipeline_mode = #tpu.pipeline_mode<synchronous>, transform_indices = @transform_3, window_bounds = array<i64: 2, 8, 1>}, {transform_indices = @transform_4, window_bounds = array<i64: 2, 1, 8, 256>}]} {
    %c0 = arith.constant 0 : index
    %c0_0 = arith.constant 0 : index
    %c0_1 = arith.constant 0 : index
    %0 = vector.load %arg4[%c0, %c0_0, %c0_1] : memref<2x8x8xf32, #tpu.memory_space<vmem>>, vector<1x8x8xf32>
    %1 = vector.shape_cast %0 : vector<1x8x8xf32> to vector<8x8xf32>
    %c0_2 = arith.constant 0 : index
    %c0_3 = arith.constant 0 : index
    %c0_4 = arith.constant 0 : index
    %2 = vector.load %arg2[%c0_2, %c0_3, %c0_4] : memref<1x8x256xf32, #tpu.memory_space<vmem>>, vector<1x8x256xf32>
    %3 = vector.shape_cast %2 : vector<1x8x256xf32> to vector<8x256xf32>
    %cst = arith.constant dense<0.000000e+00> : vector<8x256xf32>
    %4 = tpu.matmul %1, %3, %cst {dimension_numbers = #tpu.dot_dimension_numbers<[1], [0], [0], [1], [0, 0, 1, 1], [], []>} : vector<8x8xf32>, vector<8x256xf32>, vector<8x256xf32> -> vector<8x256xf32>
    %c0_5 = arith.constant 0 : index
    %c0_6 = arith.constant 0 : index
    %c0_7 = arith.constant 0 : index
    %5 = vector.load %arg5[%c0_5, %c0_6, %c0_7] : memref<2x8x1xf32, #tpu.memory_space<vmem>>, vector<1x8x1xf32>
    %6 = vector.shape_cast %5 : vector<1x8x1xf32> to vector<8x1xf32>
    %7 = vector.broadcast %6 : vector<8x1xf32> to vector<8x256xf32>
    %8 = arith.addf %4, %7 : vector<8x256xf32>
    %cst_8 = arith.constant 9.99999993E-9 : f32
    %9 = vector.broadcast %cst_8 : f32 to vector<8x256xf32>
    %10 = arith.addf %8, %9 : vector<8x256xf32>
    %c0_9 = arith.constant 0 : index
    %c0_10 = arith.constant 0 : index
    %c0_11 = arith.constant 0 : index
    %c0_12 = arith.constant 0 : index
    %11 = vector.load %arg6[%c0_9, %c0_10, %c0_11, %c0_12] : memref<2x1x8x256xf32, #tpu.memory_space<vmem>>, vector<1x1x8x256xf32>
    %12 = vector.shape_cast %11 : vector<1x1x8x256xf32> to vector<8x256xf32>
    %13 = vector.shape_cast %10 : vector<8x256xf32> to vector<1x1x8x256xf32>
    tpu.vector_store %arg6[%c0_9, %c0_10, %c0_11, %c0_12], %13 {strides = array<i32>} : memref<2x1x8x256xf32, #tpu.memory_space<vmem>>, vector<1x1x8x256xf32>,
    %c1 = arith.constant 1 : index
    %c0_13 = arith.constant 0 : index
    %c0_14 = arith.constant 0 : index
    %14 = vector.load %arg4[%c1, %c0_13, %c0_14] : memref<2x8x8xf32, #tpu.memory_space<vmem>>, vector<1x8x8xf32>
    %15 = vector.shape_cast %14 : vector<1x8x8xf32> to vector<8x8xf32>
    %c0_15 = arith.constant 0 : index
    %c0_16 = arith.constant 0 : index
    %c0_17 = arith.constant 0 : index
    %16 = vector.load %arg3[%c0_15, %c0_16, %c0_17] : memref<1x8x256xf32, #tpu.memory_space<vmem>>, vector<1x8x256xf32>
    %17 = vector.shape_cast %16 : vector<1x8x256xf32> to vector<8x256xf32>
    %cst_18 = arith.constant dense<0.000000e+00> : vector<8x256xf32>
    %18 = tpu.matmul %15, %17, %cst_18 {dimension_numbers = #tpu.dot_dimension_numbers<[1], [0], [0], [1], [0, 0, 1, 1], [], []>} : vector<8x8xf32>, vector<8x256xf32>, vector<8x256xf32> -> vector<8x256xf32>
    %c1_19 = arith.constant 1 : index
    %c0_20 = arith.constant 0 : index
    %c0_21 = arith.constant 0 : index
    %19 = vector.load %arg5[%c1_19, %c0_20, %c0_21] : memref<2x8x1xf32, #tpu.memory_space<vmem>>, vector<1x8x1xf32>
    %20 = vector.shape_cast %19 : vector<1x8x1xf32> to vector<8x1xf32>
    %21 = vector.broadcast %20 : vector<8x1xf32> to vector<8x256xf32>
    %22 = arith.addf %18, %21 : vector<8x256xf32>
    %cst_22 = arith.constant 9.99999993E-9 : f32
    %23 = vector.broadcast %cst_22 : f32 to vector<8x256xf32>
    %24 = arith.addf %22, %23 : vector<8x256xf32>
    %c1_23 = arith.constant 1 : index
    %c0_24 = arith.constant 0 : index
    %c0_25 = arith.constant 0 : index
    %c0_26 = arith.constant 0 : index
    %25 = vector.load %arg6[%c1_23, %c0_24, %c0_25, %c0_26] : memref<2x1x8x256xf32, #tpu.memory_space<vmem>>, vector<1x1x8x256xf32>
    %26 = vector.shape_cast %25 : vector<1x1x8x256xf32> to vector<8x256xf32>
    %27 = vector.shape_cast %24 : vector<8x256xf32> to vector<1x1x8x256xf32>
    tpu.vector_store %arg6[%c1_23, %c0_24, %c0_25, %c0_26], %27 {strides = array<i32>} : memref<2x1x8x256xf32, #tpu.memory_space<vmem>>, vector<1x1x8x256xf32>,
    return
  }
  func.func @transform_0(%arg0: i32, %arg1: i32) -> (i32, i32, i32) {
    %c0_i32 = arith.constant 0 : i32
    %c0_i32_0 = arith.constant 0 : i32
    return %arg0, %c0_i32, %arg1 : i32, i32, i32
  }
  func.func @transform_1(%arg0: i32, %arg1: i32) -> (i32, i32, i32) {
    %c0_i32 = arith.constant 0 : i32
    %c0_i32_0 = arith.constant 0 : i32
    return %arg0, %c0_i32, %arg1 : i32, i32, i32
  }
  func.func @transform_2(%arg0: i32, %arg1: i32) -> (i32, i32, i32) {
    %c0_i32 = arith.constant 0 : i32
    %c0_i32_0 = arith.constant 0 : i32
    %c0_i32_1 = arith.constant 0 : i32
    %c0_i32_2 = arith.constant 0 : i32
    return %c0_i32, %c0_i32_0, %c0_i32_1 : i32, i32, i32
  }
  func.func @transform_3(%arg0: i32, %arg1: i32) -> (i32, i32, i32) {
    %c0_i32 = arith.constant 0 : i32
    %c0_i32_0 = arith.constant 0 : i32
    %c0_i32_1 = arith.constant 0 : i32
    %c0_i32_2 = arith.constant 0 : i32
    return %c0_i32, %c0_i32_0, %c0_i32_1 : i32, i32, i32
  }
  func.func @transform_4(%arg0: i32, %arg1: i32) -> (i32, i32, i32, i32) {
    %c0_i32 = arith.constant 0 : i32
    %c0_i32_0 = arith.constant 0 : i32
    %c0_i32_1 = arith.constant 0 : i32
    return %c0_i32, %arg0, %c0_i32_0, %arg1 : i32, i32, i32, i32
  }
}

module attributes {stable_mosaic.version = 11 : i64} {
  func.func @_freq_fuse_kernel(%arg0: i32, %arg1: i32, %arg2: memref<2x1x8x256xf32, #tpu.memory_space<vmem>>, %arg3: memref<2x1x8x256xf32, #tpu.memory_space<vmem>>, %arg4: memref<3x8x8xf32, #tpu.memory_space<vmem>>, %arg5: memref<2x8x1xf32, #tpu.memory_space<vmem>>, %arg6: memref<3x8x8xf32, #tpu.memory_space<vmem>>, %arg7: memref<2x8x1xf32, #tpu.memory_space<vmem>>, %arg8: memref<1x8x256xf32, #tpu.memory_space<vmem>>, %arg9: memref<1x8x256xf32, #tpu.memory_space<vmem>>) attributes {dimension_semantics = [#tpu.dimension_semantics<parallel>, #tpu.dimension_semantics<parallel>], iteration_bounds = array<i64: 2, 1>, scalar_prefetch = 0 : i64, scratch_operands = 0 : i64, tpu.core_type = #tpu.core_type<tc>, window_params = [{transform_indices = @transform_0, window_bounds = array<i64: 2, 1, 8, 256>}, {transform_indices = @transform_1, window_bounds = array<i64: 2, 1, 8, 256>}, {pipeline_mode = #tpu.pipeline_mode<synchronous>, transform_indices = @transform_2, window_bounds = array<i64: 3, 8, 8>}, {pipeline_mode = #tpu.pipeline_mode<synchronous>, transform_indices = @transform_3, window_bounds = array<i64: 2, 8, 1>}, {pipeline_mode = #tpu.pipeline_mode<synchronous>, transform_indices = @transform_4, window_bounds = array<i64: 3, 8, 8>}, {pipeline_mode = #tpu.pipeline_mode<synchronous>, transform_indices = @transform_5, window_bounds = array<i64: 2, 8, 1>}, {transform_indices = @transform_6, window_bounds = array<i64: 1, 8, 256>}, {transform_indices = @transform_7, window_bounds = array<i64: 1, 8, 256>}]} {
    %c0 = arith.constant 0 : index
    %c0_0 = arith.constant 0 : index
    %c0_1 = arith.constant 0 : index
    %0 = vector.load %arg4[%c0, %c0_0, %c0_1] : memref<3x8x8xf32, #tpu.memory_space<vmem>>, vector<1x8x8xf32>
    %1 = vector.shape_cast %0 : vector<1x8x8xf32> to vector<8x8xf32>
    %c0_2 = arith.constant 0 : index
    %c0_3 = arith.constant 0 : index
    %c0_4 = arith.constant 0 : index
    %c0_5 = arith.constant 0 : index
    %2 = vector.load %arg2[%c0_2, %c0_3, %c0_4, %c0_5] : memref<2x1x8x256xf32, #tpu.memory_space<vmem>>, vector<1x1x8x256xf32>
    %3 = vector.shape_cast %2 : vector<1x1x8x256xf32> to vector<8x256xf32>
    %cst = arith.constant dense<0.000000e+00> : vector<8x256xf32>
    %4 = tpu.matmul %1, %3, %cst {dimension_numbers = #tpu.dot_dimension_numbers<[1], [0], [0], [1], [0, 0, 1, 1], [], []>} : vector<8x8xf32>, vector<8x256xf32>, vector<8x256xf32> -> vector<8x256xf32>
    %c1 = arith.constant 1 : index
    %c0_6 = arith.constant 0 : index
    %c0_7 = arith.constant 0 : index
    %5 = vector.load %arg4[%c1, %c0_6, %c0_7] : memref<3x8x8xf32, #tpu.memory_space<vmem>>, vector<1x8x8xf32>
    %6 = vector.shape_cast %5 : vector<1x8x8xf32> to vector<8x8xf32>
    %c1_8 = arith.constant 1 : index
    %c0_9 = arith.constant 0 : index
    %c0_10 = arith.constant 0 : index
    %c0_11 = arith.constant 0 : index
    %7 = vector.load %arg2[%c1_8, %c0_9, %c0_10, %c0_11] : memref<2x1x8x256xf32, #tpu.memory_space<vmem>>, vector<1x1x8x256xf32>
    %8 = vector.shape_cast %7 : vector<1x1x8x256xf32> to vector<8x256xf32>
    %cst_12 = arith.constant dense<0.000000e+00> : vector<8x256xf32>
    %9 = tpu.matmul %6, %8, %cst_12 {dimension_numbers = #tpu.dot_dimension_numbers<[1], [0], [0], [1], [0, 0, 1, 1], [], []>} : vector<8x8xf32>, vector<8x256xf32>, vector<8x256xf32> -> vector<8x256xf32>
    %10 = arith.addf %4, %9 : vector<8x256xf32>
    %c0_13 = arith.constant 0 : index
    %c0_14 = arith.constant 0 : index
    %c0_15 = arith.constant 0 : index
    %11 = vector.load %arg5[%c0_13, %c0_14, %c0_15] : memref<2x8x1xf32, #tpu.memory_space<vmem>>, vector<1x8x1xf32>
    %12 = vector.shape_cast %11 : vector<1x8x1xf32> to vector<8x1xf32>
    %13 = vector.broadcast %12 : vector<8x1xf32> to vector<8x256xf32>
    %14 = arith.addf %10, %13 : vector<8x256xf32>
    %cst_16 = arith.constant 0.000000e+00 : f32
    %15 = vector.broadcast %cst_16 : f32 to vector<8x256xf32>
    %16 = arith.cmpf oge, %14, %15 : vector<8x256xf32>
    %cst_17 = arith.constant 1.000000e-01 : f32
    %17 = vector.broadcast %cst_17 : f32 to vector<8x256xf32>
    %18 = arith.mulf %17, %14 : vector<8x256xf32>
    %19 = arith.select %16, %14, %18 : vector<8x256xi1>, vector<8x256xf32>
    %c2 = arith.constant 2 : index
    %c0_18 = arith.constant 0 : index
    %c0_19 = arith.constant 0 : index
    %20 = vector.load %arg4[%c2, %c0_18, %c0_19] : memref<3x8x8xf32, #tpu.memory_space<vmem>>, vector<1x8x8xf32>
    %21 = vector.shape_cast %20 : vector<1x8x8xf32> to vector<8x8xf32>
    %cst_20 = arith.constant dense<0.000000e+00> : vector<8x256xf32>
    %22 = tpu.matmul %21, %19, %cst_20 {dimension_numbers = #tpu.dot_dimension_numbers<[1], [0], [0], [1], [0, 0, 1, 1], [], []>} : vector<8x8xf32>, vector<8x256xf32>, vector<8x256xf32> -> vector<8x256xf32>
    %c1_21 = arith.constant 1 : index
    %c0_22 = arith.constant 0 : index
    %c0_23 = arith.constant 0 : index
    %23 = vector.load %arg5[%c1_21, %c0_22, %c0_23] : memref<2x8x1xf32, #tpu.memory_space<vmem>>, vector<1x8x1xf32>
    %24 = vector.shape_cast %23 : vector<1x8x1xf32> to vector<8x1xf32>
    %25 = vector.broadcast %24 : vector<8x1xf32> to vector<8x256xf32>
    %26 = arith.addf %22, %25 : vector<8x256xf32>
    %c0_24 = arith.constant 0 : index
    %c0_25 = arith.constant 0 : index
    %c0_26 = arith.constant 0 : index
    %27 = vector.load %arg6[%c0_24, %c0_25, %c0_26] : memref<3x8x8xf32, #tpu.memory_space<vmem>>, vector<1x8x8xf32>
    %28 = vector.shape_cast %27 : vector<1x8x8xf32> to vector<8x8xf32>
    %c0_27 = arith.constant 0 : index
    %c0_28 = arith.constant 0 : index
    %c0_29 = arith.constant 0 : index
    %c0_30 = arith.constant 0 : index
    %29 = vector.load %arg3[%c0_27, %c0_28, %c0_29, %c0_30] : memref<2x1x8x256xf32, #tpu.memory_space<vmem>>, vector<1x1x8x256xf32>
    %30 = vector.shape_cast %29 : vector<1x1x8x256xf32> to vector<8x256xf32>
    %cst_31 = arith.constant dense<0.000000e+00> : vector<8x256xf32>
    %31 = tpu.matmul %28, %30, %cst_31 {dimension_numbers = #tpu.dot_dimension_numbers<[1], [0], [0], [1], [0, 0, 1, 1], [], []>} : vector<8x8xf32>, vector<8x256xf32>, vector<8x256xf32> -> vector<8x256xf32>
    %c1_32 = arith.constant 1 : index
    %c0_33 = arith.constant 0 : index
    %c0_34 = arith.constant 0 : index
    %32 = vector.load %arg6[%c1_32, %c0_33, %c0_34] : memref<3x8x8xf32, #tpu.memory_space<vmem>>, vector<1x8x8xf32>
    %33 = vector.shape_cast %32 : vector<1x8x8xf32> to vector<8x8xf32>
    %c1_35 = arith.constant 1 : index
    %c0_36 = arith.constant 0 : index
    %c0_37 = arith.constant 0 : index
    %c0_38 = arith.constant 0 : index
    %34 = vector.load %arg3[%c1_35, %c0_36, %c0_37, %c0_38] : memref<2x1x8x256xf32, #tpu.memory_space<vmem>>, vector<1x1x8x256xf32>
    %35 = vector.shape_cast %34 : vector<1x1x8x256xf32> to vector<8x256xf32>
    %cst_39 = arith.constant dense<0.000000e+00> : vector<8x256xf32>
    %36 = tpu.matmul %33, %35, %cst_39 {dimension_numbers = #tpu.dot_dimension_numbers<[1], [0], [0], [1], [0, 0, 1, 1], [], []>} : vector<8x8xf32>, vector<8x256xf32>, vector<8x256xf32> -> vector<8x256xf32>
    %37 = arith.addf %31, %36 : vector<8x256xf32>
    %c0_40 = arith.constant 0 : index
    %c0_41 = arith.constant 0 : index
    %c0_42 = arith.constant 0 : index
    %38 = vector.load %arg7[%c0_40, %c0_41, %c0_42] : memref<2x8x1xf32, #tpu.memory_space<vmem>>, vector<1x8x1xf32>
    %39 = vector.shape_cast %38 : vector<1x8x1xf32> to vector<8x1xf32>
    %40 = vector.broadcast %39 : vector<8x1xf32> to vector<8x256xf32>
    %41 = arith.addf %37, %40 : vector<8x256xf32>
    %cst_43 = arith.constant 0.000000e+00 : f32
    %42 = vector.broadcast %cst_43 : f32 to vector<8x256xf32>
    %43 = arith.cmpf oge, %41, %42 : vector<8x256xf32>
    %cst_44 = arith.constant 1.000000e-01 : f32
    %44 = vector.broadcast %cst_44 : f32 to vector<8x256xf32>
    %45 = arith.mulf %44, %41 : vector<8x256xf32>
    %46 = arith.select %43, %41, %45 : vector<8x256xi1>, vector<8x256xf32>
    %c2_45 = arith.constant 2 : index
    %c0_46 = arith.constant 0 : index
    %c0_47 = arith.constant 0 : index
    %47 = vector.load %arg6[%c2_45, %c0_46, %c0_47] : memref<3x8x8xf32, #tpu.memory_space<vmem>>, vector<1x8x8xf32>
    %48 = vector.shape_cast %47 : vector<1x8x8xf32> to vector<8x8xf32>
    %cst_48 = arith.constant dense<0.000000e+00> : vector<8x256xf32>
    %49 = tpu.matmul %48, %46, %cst_48 {dimension_numbers = #tpu.dot_dimension_numbers<[1], [0], [0], [1], [0, 0, 1, 1], [], []>} : vector<8x8xf32>, vector<8x256xf32>, vector<8x256xf32> -> vector<8x256xf32>
    %c1_49 = arith.constant 1 : index
    %c0_50 = arith.constant 0 : index
    %c0_51 = arith.constant 0 : index
    %50 = vector.load %arg7[%c1_49, %c0_50, %c0_51] : memref<2x8x1xf32, #tpu.memory_space<vmem>>, vector<1x8x1xf32>
    %51 = vector.shape_cast %50 : vector<1x8x1xf32> to vector<8x1xf32>
    %52 = vector.broadcast %51 : vector<8x1xf32> to vector<8x256xf32>
    %53 = arith.addf %49, %52 : vector<8x256xf32>
    %54 = math.cos %53 : vector<8x256xf32>
    %55 = arith.mulf %26, %54 : vector<8x256xf32>
    %cst_52 = arith.constant 2.000000e-08 : f32
    %56 = vector.broadcast %cst_52 : f32 to vector<8x256xf32>
    %57 = arith.addf %55, %56 : vector<8x256xf32>
    %c0_53 = arith.constant 0 : index
    %c0_54 = arith.constant 0 : index
    %c0_55 = arith.constant 0 : index
    %58 = vector.load %arg8[%c0_53, %c0_54, %c0_55] : memref<1x8x256xf32, #tpu.memory_space<vmem>>, vector<1x8x256xf32>
    %59 = vector.shape_cast %58 : vector<1x8x256xf32> to vector<8x256xf32>
    %60 = vector.shape_cast %57 : vector<8x256xf32> to vector<1x8x256xf32>
    tpu.vector_store %arg8[%c0_53, %c0_54, %c0_55], %60 {strides = array<i32>} : memref<1x8x256xf32, #tpu.memory_space<vmem>>, vector<1x8x256xf32>,
    %61 = math.sin %53 : vector<8x256xf32>
    %62 = arith.mulf %26, %61 : vector<8x256xf32>
    %cst_56 = arith.constant 9.99999993E-9 : f32
    %63 = vector.broadcast %cst_56 : f32 to vector<8x256xf32>
    %64 = arith.addf %62, %63 : vector<8x256xf32>
    %c0_57 = arith.constant 0 : index
    %c0_58 = arith.constant 0 : index
    %c0_59 = arith.constant 0 : index
    %65 = vector.load %arg9[%c0_57, %c0_58, %c0_59] : memref<1x8x256xf32, #tpu.memory_space<vmem>>, vector<1x8x256xf32>
    %66 = vector.shape_cast %65 : vector<1x8x256xf32> to vector<8x256xf32>
    %67 = vector.shape_cast %64 : vector<8x256xf32> to vector<1x8x256xf32>
    tpu.vector_store %arg9[%c0_57, %c0_58, %c0_59], %67 {strides = array<i32>} : memref<1x8x256xf32, #tpu.memory_space<vmem>>, vector<1x8x256xf32>,
    return
  }
  func.func @transform_0(%arg0: i32, %arg1: i32) -> (i32, i32, i32, i32) {
    %c0_i32 = arith.constant 0 : i32
    %c0_i32_0 = arith.constant 0 : i32
    %c0_i32_1 = arith.constant 0 : i32
    return %c0_i32, %arg0, %c0_i32_0, %arg1 : i32, i32, i32, i32
  }
  func.func @transform_1(%arg0: i32, %arg1: i32) -> (i32, i32, i32, i32) {
    %c0_i32 = arith.constant 0 : i32
    %c0_i32_0 = arith.constant 0 : i32
    %c0_i32_1 = arith.constant 0 : i32
    return %c0_i32, %arg0, %c0_i32_0, %arg1 : i32, i32, i32, i32
  }
  func.func @transform_2(%arg0: i32, %arg1: i32) -> (i32, i32, i32) {
    %c0_i32 = arith.constant 0 : i32
    %c0_i32_0 = arith.constant 0 : i32
    %c0_i32_1 = arith.constant 0 : i32
    %c0_i32_2 = arith.constant 0 : i32
    return %c0_i32, %c0_i32_0, %c0_i32_1 : i32, i32, i32
  }
  func.func @transform_3(%arg0: i32, %arg1: i32) -> (i32, i32, i32) {
    %c0_i32 = arith.constant 0 : i32
    %c0_i32_0 = arith.constant 0 : i32
    %c0_i32_1 = arith.constant 0 : i32
    %c0_i32_2 = arith.constant 0 : i32
    return %c0_i32, %c0_i32_0, %c0_i32_1 : i32, i32, i32
  }
  func.func @transform_4(%arg0: i32, %arg1: i32) -> (i32, i32, i32) {
    %c0_i32 = arith.constant 0 : i32
    %c0_i32_0 = arith.constant 0 : i32
    %c0_i32_1 = arith.constant 0 : i32
    %c0_i32_2 = arith.constant 0 : i32
    return %c0_i32, %c0_i32_0, %c0_i32_1 : i32, i32, i32
  }
  func.func @transform_5(%arg0: i32, %arg1: i32) -> (i32, i32, i32) {
    %c0_i32 = arith.constant 0 : i32
    %c0_i32_0 = arith.constant 0 : i32
    %c0_i32_1 = arith.constant 0 : i32
    %c0_i32_2 = arith.constant 0 : i32
    return %c0_i32, %c0_i32_0, %c0_i32_1 : i32, i32, i32
  }
  func.func @transform_6(%arg0: i32, %arg1: i32) -> (i32, i32, i32) {
    %c0_i32 = arith.constant 0 : i32
    %c0_i32_0 = arith.constant 0 : i32
    return %arg0, %c0_i32, %arg1 : i32, i32, i32
  }
  func.func @transform_7(%arg0: i32, %arg1: i32) -> (i32, i32, i32) {
    %c0_i32 = arith.constant 0 : i32
    %c0_i32_0 = arith.constant 0 : i32
    return %arg0, %c0_i32, %arg1 : i32, i32, i32
  }
}

module attributes {stable_mosaic.version = 11 : i64} {
  func.func @_abs_conv1x1_kernel(%arg0: i32, %arg1: i32, %arg2: memref<1x8x256xf32, #tpu.memory_space<vmem>>, %arg3: memref<8x8xf32, #tpu.memory_space<vmem>>, %arg4: memref<8x1xf32, #tpu.memory_space<vmem>>, %arg5: memref<1x8x256xf32, #tpu.memory_space<vmem>>) attributes {dimension_semantics = [#tpu.dimension_semantics<parallel>, #tpu.dimension_semantics<parallel>], iteration_bounds = array<i64: 2, 1>, scalar_prefetch = 0 : i64, scratch_operands = 0 : i64, tpu.core_type = #tpu.core_type<tc>, window_params = [{transform_indices = @transform_0, window_bounds = array<i64: 1, 8, 256>}, {pipeline_mode = #tpu.pipeline_mode<synchronous>, transform_indices = @transform_1, window_bounds = array<i64: 8, 8>}, {pipeline_mode = #tpu.pipeline_mode<synchronous>, transform_indices = @transform_2, window_bounds = array<i64: 8, 1>}, {transform_indices = @transform_3, window_bounds = array<i64: 1, 8, 256>}]} {
    %c0 = arith.constant 0 : index
    %c0_0 = arith.constant 0 : index
    %c0_1 = arith.constant 0 : index
    %0 = vector.load %arg2[%c0, %c0_0, %c0_1] : memref<1x8x256xf32, #tpu.memory_space<vmem>>, vector<1x8x256xf32>
    %1 = vector.shape_cast %0 : vector<1x8x256xf32> to vector<8x256xf32>
    %2 = math.absf %1 : vector<8x256xf32>
    %c0_2 = arith.constant 0 : index
    %c0_3 = arith.constant 0 : index
    %3 = vector.load %arg3[%c0_2, %c0_3] : memref<8x8xf32, #tpu.memory_space<vmem>>, vector<8x8xf32>
    %cst = arith.constant dense<0.000000e+00> : vector<8x256xf32>
    %4 = tpu.matmul %3, %2, %cst {dimension_numbers = #tpu.dot_dimension_numbers<[1], [0], [0], [1], [0, 0, 1, 1], [], []>} : vector<8x8xf32>, vector<8x256xf32>, vector<8x256xf32> -> vector<8x256xf32>
    %c0_4 = arith.constant 0 : index
    %c0_5 = arith.constant 0 : index
    %5 = vector.load %arg4[%c0_4, %c0_5] : memref<8x1xf32, #tpu.memory_space<vmem>>, vector<8x1xf32>
    %6 = vector.broadcast %5 : vector<8x1xf32> to vector<8x256xf32>
    %7 = arith.addf %4, %6 : vector<8x256xf32>
    %c0_6 = arith.constant 0 : index
    %c0_7 = arith.constant 0 : index
    %c0_8 = arith.constant 0 : index
    %8 = vector.load %arg5[%c0_6, %c0_7, %c0_8] : memref<1x8x256xf32, #tpu.memory_space<vmem>>, vector<1x8x256xf32>
    %9 = vector.shape_cast %8 : vector<1x8x256xf32> to vector<8x256xf32>
    %10 = vector.shape_cast %7 : vector<8x256xf32> to vector<1x8x256xf32>
    tpu.vector_store %arg5[%c0_6, %c0_7, %c0_8], %10 {strides = array<i32>} : memref<1x8x256xf32, #tpu.memory_space<vmem>>, vector<1x8x256xf32>,
    return
  }
  func.func @transform_0(%arg0: i32, %arg1: i32) -> (i32, i32, i32) {
    %c0_i32 = arith.constant 0 : i32
    %c0_i32_0 = arith.constant 0 : i32
    return %arg0, %c0_i32, %arg1 : i32, i32, i32
  }
  func.func @transform_1(%arg0: i32, %arg1: i32) -> (i32, i32) {
    %c0_i32 = arith.constant 0 : i32
    %c0_i32_0 = arith.constant 0 : i32
    %c0_i32_1 = arith.constant 0 : i32
    return %c0_i32, %c0_i32_0 : i32, i32
  }
  func.func @transform_2(%arg0: i32, %arg1: i32) -> (i32, i32) {
    %c0_i32 = arith.constant 0 : i32
    %c0_i32_0 = arith.constant 0 : i32
    %c0_i32_1 = arith.constant 0 : i32
    return %c0_i32, %c0_i32_0 : i32, i32
  }
  func.func @transform_3(%arg0: i32, %arg1: i32) -> (i32, i32, i32) {
    %c0_i32 = arith.constant 0 : i32
    %c0_i32_0 = arith.constant 0 : i32
    return %arg0, %c0_i32, %arg1 : i32, i32, i32
  }
}

</mosaic_0001>

<llo_original>
// kernel: fre_layer_forward.3
$region0: #{fre_layer_forward.3}
  #allocation0 [shape = 'u32[]', space=smem, size = 0x4, offset = 0x4, fixed_abs, tag = 'smem constant byte address 0x4 - core index']
  #allocation1 [shape = 'u32[72,128]{1,0:T(1,128)}', space=vmem, size = 0x9000, scoped, tag = 'internal scratch']
  %s0 = inlined_call_operand.vmem [shape: f32[2,8,256], index: 0, kind: input, shape index: {}]
  %s1 = inlined_call_operand.vmem [shape: f32[2,8,256], index: 1, kind: input, shape index: {}]
  %s2 = inlined_call_operand.vmem [shape: f32[2,8,8], index: 2, kind: input, shape index: {}]
  %s3 = inlined_call_operand.vmem [shape: f32[2,8,1], index: 3, kind: input, shape index: {}]
  %s4 = inlined_call_operand.vmem [shape: f32[2,2,8,256], index: 4, kind: output, shape index: {}]
  %s5 = sld [smem:[#allocation0]]
  $region68: #{fre_layer_forward.3} parent=0
    _
  %s7 = ssub.s32 1, %s5
  %s8 = scalar_select 0, %s7, %s5
  $region1: #{fre_layer_forward.3} parent=0
    #allocation2 [shape = 'u8[32768]{0}', space=vmem, size = 0x8000, scoped, tag = 'output window, operand 0']
    loop: start=0, step=1, limit=4
    $region2: #{fre_layer_forward.3} parent=1 // loop_pre_header
      _
    $region3: #{fre_layer_forward.3} parent=1 // loop_header
      %s10 = sphi 0, %s14
      %p11 = scmp.ge.s32.totalorder %s10, 4
      %s17 = sphi 0, %s29
      %s18 = sphi 0, %s25
      %s19 = sphi 0, %s17
      %s20 = sphi 0, %s18
      %s21 = sphi 0, %s19
      %s22 = sphi 0, %s20
      %s34 = sphi 0, %s36
      %s37 = sphi 0, %s34
      %s38 = sphi 0, %s37
      %s54 = sphi 0, %s38
      %s62 = sphi 0, %s64
      %s65 = sphi 0, %s62
      %s66 = sphi 0, %s65
      %s82 = sphi 0, %s66
      %s86 = sphi 0, %s86
      %s88 = sphi 0, %s86
      %s89 = sphi 0, %s88
      %s103 = sphi 0, %s89
      %s107 = sphi 0, %s107
      %s109 = sphi 0, %s107
      %s110 = sphi 0, %s109
      %s124 = sphi 0, %s110
      %s132 = sphi 0, %s134
      %s135 = sphi 0, %s132
      %s136 = sphi 0, %s135
      %s152 = sphi 0, %s136
    $region4: #{fre_layer_forward.3} parent=1 // loop_header_branch
      %13 = sbr.rel (%p11) target = $region8
    $region5: #{fre_layer_forward.3} parent=1 // loop_body
      %s15 = ssub.s32 %s10, 1
      %s16 = ssub.s32 %s10, 2
      %s23 = sadd.s32 1, %s18
      %p24 = scmp.ge.s32.totalorder %s23, 1
      %s25 = scalar_select %p24, 0, %s23
      %s26 = sadd.s32 1, %s17
      %s27 = scalar_select %p24, %s26, %s17
      %p28 = scmp.ge.s32.totalorder %s27, 2
      %s29 = scalar_select %p28, 0, %s27
      %s30 = ssub.s32 %s17, %s29
      %s31 = ssub.s32 %s18, %s25
      %s32 = sor.u32 %s30, %s31
      %p33 = scmp.eq.s32.totalorder %s32, 0
      %s35 = sadd.s32 %s34, 1
      %s36 = scalar_select %p33, %s34, %s35
      %p39 = pneg %p33
      %p40 = scmp.eq.s32.totalorder %s10, 1
      %p41 = por %p39, %p40
      %p42 = scmp.ne.s32.totalorder %s34, %s37
      %p43 = scmp.eq.s32.totalorder %s10, 0
      %p44 = por %p42, %p43
      %p45 = scmp.ne.s32.totalorder %s34, %s37
      %p46 = scmp.eq.s32.totalorder %s15, 1
      %p47 = por %p45, %p46
      %p48 = scmp.ne.s32.totalorder %s37, %s38
      %p49 = scmp.eq.s32.totalorder %s15, 0
      %p50 = por %p48, %p49
      %p51 = scmp.ne.s32.totalorder %s37, %s38
      %p52 = scmp.eq.s32.totalorder %s16, 1
      %p53 = por %p51, %p52
      %p55 = scmp.ne.s32.totalorder %s38, %s54
      %p56 = scmp.eq.s32.totalorder %s16, 0
      %p57 = por %p55, %p56
      %s58 = ssub.s32 %s17, %s29
      %s59 = ssub.s32 %s18, %s25
      %s60 = sor.u32 %s58, %s59
      %p61 = scmp.eq.s32.totalorder %s60, 0
      %s63 = sadd.s32 %s62, 1
      %s64 = scalar_select %p61, %s62, %s63
      %p67 = pneg %p61
      %p68 = scmp.eq.s32.totalorder %s10, 1
      %p69 = por %p67, %p68
      %p70 = scmp.ne.s32.totalorder %s62, %s65
      %p71 = scmp.eq.s32.totalorder %s10, 0
      %p72 = por %p70, %p71
      %p73 = scmp.ne.s32.totalorder %s62, %s65
      %p74 = scmp.eq.s32.totalorder %s15, 1
      %p75 = por %p73, %p74
      %p76 = scmp.ne.s32.totalorder %s65, %s66
      %p77 = scmp.eq.s32.totalorder %s15, 0
      %p78 = por %p76, %p77
      %p79 = scmp.ne.s32.totalorder %s65, %s66
      %p80 = scmp.eq.s32.totalorder %s16, 1
      %p81 = por %p79, %p80
      %p83 = scmp.ne.s32.totalorder %s66, %s82
      %p84 = scmp.eq.s32.totalorder %s16, 0
      %p85 = por %p83, %p84
      %s87 = sadd.s32 %s86, 1
      %p90 = scmp.eq.s32.totalorder %s10, 1
      %p91 = scmp.ne.s32.totalorder %s86, %s88
      %p92 = scmp.eq.s32.totalorder %s10, 0
      %p93 = por %p91, %p92
      %p94 = scmp.ne.s32.totalorder %s86, %s88
      %p95 = scmp.eq.s32.totalorder %s15, 1
      %p96 = por %p94, %p95
      %p97 = scmp.ne.s32.totalorder %s88, %s89
      %p98 = scmp.eq.s32.totalorder %s15, 0
      %p99 = por %p97, %p98
      %p100 = scmp.ne.s32.totalorder %s88, %s89
      %p101 = scmp.eq.s32.totalorder %s16, 1
      %p102 = por %p100, %p101
      %p104 = scmp.ne.s32.totalorder %s89, %s103
      %p105 = scmp.eq.s32.totalorder %s16, 0
      %p106 = por %p104, %p105
      %s108 = sadd.s32 %s107, 1
      %p111 = scmp.eq.s32.totalorder %s10, 1
      %p112 = scmp.ne.s32.totalorder %s107, %s109
      %p113 = scmp.eq.s32.totalorder %s10, 0
      %p114 = por %p112, %p113
      %p115 = scmp.ne.s32.totalorder %s107, %s109
      %p116 = scmp.eq.s32.totalorder %s15, 1
      %p117 = por %p115, %p116
      %p118 = scmp.ne.s32.totalorder %s109, %s110
      %p119 = scmp.eq.s32.totalorder %s15, 0
      %p120 = por %p118, %p119
      %p121 = scmp.ne.s32.totalorder %s109, %s110
      %p122 = scmp.eq.s32.totalorder %s16, 1
      %p123 = por %p121, %p122
      %p125 = scmp.ne.s32.totalorder %s110, %s124
      %p126 = scmp.eq.s32.totalorder %s16, 0
      %p127 = por %p125, %p126
      %s128 = ssub.s32 %s17, %s29
      %s129 = ssub.s32 %s18, %s25
      %s130 = sor.u32 %s128, %s129
      %p131 = scmp.eq.s32.totalorder %s130, 0
      %s133 = sadd.s32 %s132, 1
      %s134 = scalar_select %p131, %s132, %s133
      %p137 = pneg %p131
      %p138 = scmp.eq.s32.totalorder %s10, 1
      %p139 = por %p137, %p138
      %p140 = scmp.ne.s32.totalorder %s132, %s135
      %p141 = scmp.eq.s32.totalorder %s10, 0
      %p142 = por %p140, %p141
      %p143 = scmp.ne.s32.totalorder %s132, %s135
      %p144 = scmp.eq.s32.totalorder %s15, 1
      %p145 = por %p143, %p144
      %p146 = scmp.ne.s32.totalorder %s135, %s136
      %p147 = scmp.eq.s32.totalorder %s15, 0
      %p148 = por %p146, %p147
      %p149 = scmp.ne.s32.totalorder %s135, %s136
      %p150 = scmp.eq.s32.totalorder %s16, 1
      %p151 = por %p149, %p150
      %p153 = scmp.ne.s32.totalorder %s136, %s152
      %p154 = scmp.eq.s32.totalorder %s16, 0
      %p155 = por %p153, %p154
      %p156 = scmp.le.s32.totalorder 1, %s10
      %p157 = scmp.lt.s32.totalorder %s10, 3
      %p158 = pnand %p156, %p157
      %p159 = pneg %p158
      // Predicated region
      $region9: #{fre_layer_forward.3} parent=5 // pred_check
        _
      $region10: #{fre_layer_forward.3} parent=5 // pred_check_branch
        %161 = sbr.rel (%p158) target = $region12
      $region11: #{fre_layer_forward.3} parent=5 // pred_region
        %s162 = ssub.s32 %s10, 1
        // Predicated region
        $region13: #{fre_layer_forward.3} parent=11 // pred_check
          %p163 = pneg %p99
        $region14: #{fre_layer_forward.3} parent=11 // pred_check_branch
          %165 = sbr.rel (%p163) target = $region16
        $region15: #{fre_layer_forward.3} parent=11 // pred_region
          _
        $region16: #{fre_layer_forward.3} parent=11 // pred_fallthru
          _
        // Predicated region
        $region17: #{fre_layer_forward.3} parent=11 // pred_check
          %p166 = pneg %p120
        $region18: #{fre_layer_forward.3} parent=11 // pred_check_branch
          %168 = sbr.rel (%p166) target = $region20
        $region19: #{fre_layer_forward.3} parent=11 // pred_region
          _
        $region20: #{fre_layer_forward.3} parent=11 // pred_fallthru
          _
      $region12: #{fre_layer_forward.3} parent=5 // pred_fallthru
        _
      %p169 = scmp.lt.s32.totalorder %s10, 2
      // Predicated region
      $region21: #{fre_layer_forward.3} parent=5 // pred_check
        %p170 = pneg %p169
      $region22: #{fre_layer_forward.3} parent=5 // pred_check_branch
        %172 = sbr.rel (%p170) target = $region24
      $region23: #{fre_layer_forward.3} parent=5 // pred_region
        // Predicated region
        $region25: #{fre_layer_forward.3} parent=23 // pred_check
          %p173 = pneg %p44
        $region26: #{fre_layer_forward.3} parent=23 // pred_check_branch
          %175 = sbr.rel (%p173) target = $region28
        $region27: #{fre_layer_forward.3} parent=23 // pred_region
          %s176 = smul.u32 2, %s18
          %p177 = scmp.lt.s32.totalorder %s17, 1
          %s178 = scalar_select %p177, %s17, 1
          %p179 = scmp.lt.s32.totalorder %s176, 1
          %s180 = scalar_select %p179, %s176, 1
          %s181 = smul.addr %s178, 2
          %s182 = sadd.s32 %s180, %s181
          %s183 = smul.addr %s182, 8
          %s184 = scalar_lea.vmem %s0, %s183
          %s185 = smul.u32 2, %s18
        $region28: #{fre_layer_forward.3} parent=23 // pred_fallthru
          _
        // Predicated region
        $region29: #{fre_layer_forward.3} parent=23 // pred_check
          %p186 = pneg %p72
        $region30: #{fre_layer_forward.3} parent=23 // pred_check_branch
          %188 = sbr.rel (%p186) target = $region32
        $region31: #{fre_layer_forward.3} parent=23 // pred_region
          %s189 = smul.u32 2, %s18
          %p190 = scmp.lt.s32.totalorder %s17, 1
          %s191 = scalar_select %p190, %s17, 1
          %p192 = scmp.lt.s32.totalorder %s189, 1
          %s193 = scalar_select %p192, %s189, 1
          %s194 = smul.addr %s191, 2
          %s195 = sadd.s32 %s193, %s194
          %s196 = smul.addr %s195, 8
          %s197 = scalar_lea.vmem %s1, %s196
          %s198 = smul.u32 2, %s18
        $region32: #{fre_layer_forward.3} parent=23 // pred_fallthru
          _
      $region24: #{fre_layer_forward.3} parent=5 // pred_fallthru
        _
      %p199 = scmp.le.s32.totalorder 1, %s10
      %p200 = scmp.lt.s32.totalorder %s10, 3
      %p201 = pnand %p199, %p200
      %p202 = pneg %p201
      // Predicated region
      $region33: #{fre_layer_forward.3} parent=5 // pred_check
        _
      $region34: #{fre_layer_forward.3} parent=5 // pred_check_branch
        %204 = sbr.rel (%p201) target = $region36
      $region35: #{fre_layer_forward.3} parent=5 // pred_region
        %s205 = ssub.s32 %s10, 1
        %s206 = smul.u32 2, %s20
        %p207 = scmp.lt.s32.totalorder %s19, 1
        %s208 = scalar_select %p207, %s19, 1
        %p209 = scmp.lt.s32.totalorder %s206, 1
        %s210 = scalar_select %p209, %s206, 1
        %s211 = smul.addr %s208, 2
        %s212 = sadd.s32 %s210, %s211
        %s213 = smul.addr %s212, 8
        %s214 = scalar_lea.vmem %s0, %s213
        %p215 = pneg %p50
        %p216 = pneg %p47
        %s217 = smul.u32 2, %s20
        %p218 = scmp.lt.s32.totalorder %s19, 1
        %s219 = scalar_select %p218, %s19, 1
        %p220 = scmp.lt.s32.totalorder %s217, 1
        %s221 = scalar_select %p220, %s217, 1
        %s222 = smul.addr %s219, 2
        %s223 = sadd.s32 %s221, %s222
        %s224 = smul.addr %s223, 8
        %s225 = scalar_lea.vmem %s1, %s224
        %p226 = pneg %p78
        %p227 = pneg %p75
        %p228 = pneg %p99
        %p229 = pneg %p96
        %p230 = pneg %p120
        %p231 = pneg %p117
        %p232 = pneg %p148
        %p233 = pneg %p145
        %s234 = sand.u32 %s135, 1
        %s235 = sand.u32 %s135, 1
        %s236 = smul.addr %s235, 32
        %s237 = scalar_lea.vmem [#allocation2], %s236
        %s238 = smul.u32 2, %s20
        %p239 = scmp.lt.s32.totalorder %s19, 1
        %s240 = scalar_select %p239, %s19, 1
        %p241 = scmp.lt.s32.totalorder %s238, 1
        %s242 = scalar_select %p241, %s238, 1
        %s243 = smul.addr %s240, 2
        %s244 = sadd.s32 %s242, %s243
        %s245 = smul.addr %s244, 8
        %s246 = scalar_lea.vmem %s0, %s245
        %s247 = smul.u32 2, %s20
        %s248 = smul.u32 2, %s20
        %p249 = scmp.lt.s32.totalorder %s19, 1
        %s250 = scalar_select %p249, %s19, 1
        %p251 = scmp.lt.s32.totalorder %s248, 1
        %s252 = scalar_select %p251, %s248, 1
        %s253 = smul.addr %s250, 2
        %s254 = sadd.s32 %s252, %s253
        %s255 = smul.addr %s254, 8
        %s256 = scalar_lea.vmem %s1, %s255
        %s257 = smul.u32 2, %s20
        %s258 = smul.u32 2, %s20
        %v259 = vld [vmem:[%s2] sm:$0xff]
        %v260 = vld [vmem:[%s246] sm:$0xff]
        %v261 = vld [vmem:[%s246 + $0x8] sm:$0xff]
        %v262 = vld [vmem:[%s3] sm:$0xff]
        %264 = vset.pattern.permute.xlu0 0
        %265 = vperm.xlu0 %264, %v262
        %v266 = vpop.permute.xlu0 %265
        %vm268 = vcmask 64512
        %v270 = vsel %vm268, %v259, 0
        %272 = vmatpush.msra.mxu0 0.0
        %273 = vmatpush.msra.mxu0 0.0
        %274 = vmatpush.msra.mxu0 0.0
        %275 = vmatpush.msra.mxu0 0.0
        %276 = vmatpush.msra.mxu0 0.0
        %277 = vmatpush.msra.mxu0 0.0
        %278 = vmatpush.msra.mxu0 0.0
        %279 = vmatpush.msra.mxu0 0.0
        %280 = vmatpush.msra.mxu0 0.0
        %281 = vmatpush.msra.mxu0 0.0
        %282 = vmatpush.msra.mxu0 0.0
        %283 = vmatpush.msra.mxu0 0.0
        %284 = vmatpush.msra.mxu0 0.0
        %285 = vmatpush.msra.mxu0 0.0
        %286 = vmatpush.msra.mxu0 0.0
        %287 = vmatpush.msra.mxu0 %v260
        %288 = vmatmul.f32.gmra.mxu0 %v270
        %v289 = vpop.f32.mrf.mxu0
        %v290 = vadd.f32 %v266, %v289
        %291 = vdwg.mxu0
        %292 = vmatpush.msra.mxu0 0.0
        %293 = vmatpush.msra.mxu0 0.0
        %294 = vmatpush.msra.mxu0 0.0
        %295 = vmatpush.msra.mxu0 0.0
        %296 = vmatpush.msra.mxu0 0.0
        %297 = vmatpush.msra.mxu0 0.0
        %298 = vmatpush.msra.mxu0 0.0
        %299 = vmatpush.msra.mxu0 0.0
        %300 = vmatpush.msra.mxu0 0.0
        %301 = vmatpush.msra.mxu0 0.0
        %302 = vmatpush.msra.mxu0 0.0
        %303 = vmatpush.msra.mxu0 0.0
        %304 = vmatpush.msra.mxu0 0.0
        %305 = vmatpush.msra.mxu0 0.0
        %306 = vmatpush.msra.mxu0 0.0
        %307 = vmatpush.msra.mxu0 %v261
        %308 = vmatmul.f32.gmra.mxu0 %v270
        %v309 = vpop.f32.mrf.mxu0
        %v310 = vadd.f32 %v266, %v309
        %311 = vdwg.mxu0
        %v312 = vadd.f32 %v290, 1e-08
        %v313 = vadd.f32 %v310, 1e-08
        %314 = vst [vmem:[%s237] sm:$0xff] %v312
        %315 = vst [vmem:[%s237 + $0x8] sm:$0xff] %v313
        %s316 = scalar_lea.vmem %s2, 8
        %v317 = vld [vmem:[%s316] sm:$0xff]
        %v318 = vld [vmem:[%s256] sm:$0xff]
        %v319 = vld [vmem:[%s256 + $0x8] sm:$0xff]
        %s320 = scalar_lea.vmem %s3, 8
        %v321 = vld [vmem:[%s320] sm:$0xff]
        %323 = vset.pattern.permute.xlu0 0
        %324 = vperm.xlu0 %323, %v321
        %v325 = vpop.permute.xlu0 %324
        %v328 = vsel %vm268, %v317, 0
        %330 = vmatpush.msra.mxu0 0.0
        %331 = vmatpush.msra.mxu0 0.0
        %332 = vmatpush.msra.mxu0 0.0
        %333 = vmatpush.msra.mxu0 0.0
        %334 = vmatpush.msra.mxu0 0.0
        %335 = vmatpush.msra.mxu0 0.0
        %336 = vmatpush.msra.mxu0 0.0
        %337 = vmatpush.msra.mxu0 0.0
        %338 = vmatpush.msra.mxu0 0.0
        %339 = vmatpush.msra.mxu0 0.0
        %340 = vmatpush.msra.mxu0 0.0
        %341 = vmatpush.msra.mxu0 0.0
        %342 = vmatpush.msra.mxu0 0.0
        %343 = vmatpush.msra.mxu0 0.0
        %344 = vmatpush.msra.mxu0 0.0
        %345 = vmatpush.msra.mxu0 %v318
        %346 = vmatmul.f32.gmra.mxu0 %v328
        %v347 = vpop.f32.mrf.mxu0
        %v348 = vadd.f32 %v325, %v347
        %349 = vdwg.mxu0
        %350 = vmatpush.msra.mxu0 0.0
        %351 = vmatpush.msra.mxu0 0.0
        %352 = vmatpush.msra.mxu0 0.0
        %353 = vmatpush.msra.mxu0 0.0
        %354 = vmatpush.msra.mxu0 0.0
        %355 = vmatpush.msra.mxu0 0.0
        %356 = vmatpush.msra.mxu0 0.0
        %357 = vmatpush.msra.mxu0 0.0
        %358 = vmatpush.msra.mxu0 0.0
        %359 = vmatpush.msra.mxu0 0.0
        %360 = vmatpush.msra.mxu0 0.0
        %361 = vmatpush.msra.mxu0 0.0
        %362 = vmatpush.msra.mxu0 0.0
        %363 = vmatpush.msra.mxu0 0.0
        %364 = vmatpush.msra.mxu0 0.0
        %365 = vmatpush.msra.mxu0 %v319
        %366 = vmatmul.f32.gmra.mxu0 %v328
        %v367 = vpop.f32.mrf.mxu0
        %v368 = vadd.f32 %v325, %v367
        %369 = vdwg.mxu0
        %v370 = vadd.f32 %v348, 1e-08
        %v371 = vadd.f32 %v368, 1e-08
        %s372 = scalar_lea.vmem %s237, 16 [#allocation2]
        %373 = vst [vmem:[%s372] sm:$0xff] %v370
        %374 = vst [vmem:[%s372 + $0x8] sm:$0xff] %v371
        %s375 = sand.u32 %s135, 1
        %s376 = sand.u32 %s135, 1
        %s377 = smul.addr %s376, 32
        %s378 = scalar_lea.vmem [#allocation2], %s377
        // Predicated region
        $region37: #{fre_layer_forward.3} parent=35 // pred_check
          %p379 = pneg %p145
        $region38: #{fre_layer_forward.3} parent=35 // pred_check_branch
          %381 = sbr.rel (%p379) target = $region40
        $region39: #{fre_layer_forward.3} parent=35 // pred_region
          %s382 = smul.u32 2, %s20
          %s383 = smul.addr %s19, 2
          %s384 = sadd.s32 %s382, %s383
          %s385 = smul.addr %s384, 8
          %s386 = scalar_lea.vmem %s4, %s385
          // Predicated region
          $region41: #{fre_layer_forward.3} parent=39 // pred_check
            _
          $region42: #{fre_layer_forward.3} parent=39 // pred_check_branch
            %388 = sbr.rel (0) target = $region44
          $region43: #{fre_layer_forward.3} parent=39 // pred_region
            // Predicated region
            $region45: #{fre_layer_forward.3} parent=43 // pred_check
              _
            $region46: #{fre_layer_forward.3} parent=43 // pred_check_branch
              %390 = sbr.rel (0) target = $region48
            $region47: #{fre_layer_forward.3} parent=43 // pred_region
              loop: start=0, step=1, limit=1
              $region49: #{fre_layer_forward.3} parent=47 // loop_pre_header
                _
              $region50: #{fre_layer_forward.3} parent=47 // loop_header
                %s392 = sphi 0, %s396
                %p393 = scmp.ge.s32.totalorder %s392, 1
                %s397 = sphi %s378, %s378
                %s398 = sphi %s386, %s386
              $region51: #{fre_layer_forward.3} parent=47 // loop_header_branch
                %395 = sbr.rel (%p393) target = $region55
              $region52: #{fre_layer_forward.3} parent=47 // loop_body
                %v399 = vld [vmem:[%s397] sm:$0xff]
                %400 = vst [vmem:[%s398] sm:$0xff] %v399
                %v401 = vld [vmem:[%s397 + $0x8] sm:$0xff]
                %402 = vst [vmem:[%s398 + $0x8] sm:$0xff] %v401
                %v403 = vld [vmem:[%s397 + $0x10] sm:$0xff]
                %404 = vst [vmem:[%s398 + $0x20] sm:$0xff] %v403
                %v405 = vld [vmem:[%s397 + $0x18] sm:$0xff]
                %406 = vst [vmem:[%s398 + $0x28] sm:$0xff] %v405
              $region53: #{fre_layer_forward.3} parent=47 // loop_footer
                %s396 = sadd.s32 1, %s392
              $region54: #{fre_layer_forward.3} parent=47 // loop_footer_branch
                %391 = sbr.rel target = $region50
              $region55: #{fre_layer_forward.3} parent=47 // loop_exit
                _
            $region48: #{fre_layer_forward.3} parent=43 // pred_fallthru
              _
            // Predicated region
            $region56: #{fre_layer_forward.3} parent=43 // pred_check
              _
            $region57: #{fre_layer_forward.3} parent=43 // pred_check_branch
              %408 = sbr.rel target = $region59
            $region58: #{fre_layer_forward.3} parent=43 // pred_region
              _
            $region59: #{fre_layer_forward.3} parent=43 // pred_fallthru
              _
          $region44: #{fre_layer_forward.3} parent=39 // pred_fallthru
            _
          %409 = vnop
        $region40: #{fre_layer_forward.3} parent=35 // pred_fallthru
          _
      $region36: #{fre_layer_forward.3} parent=5 // pred_fallthru
        _
      %p410 = scmp.le.s32.totalorder 2, %s10
      // Predicated region
      $region60: #{fre_layer_forward.3} parent=5 // pred_check
        %p411 = pneg %p410
      $region61: #{fre_layer_forward.3} parent=5 // pred_check_branch
        %413 = sbr.rel (%p411) target = $region63
      $region62: #{fre_layer_forward.3} parent=5 // pred_region
        %s414 = ssub.s32 %s10, 2
        // Predicated region
        $region64: #{fre_layer_forward.3} parent=62 // pred_check
          %p415 = pneg %p151
        $region65: #{fre_layer_forward.3} parent=62 // pred_check_branch
          %417 = sbr.rel (%p415) target = $region67
        $region66: #{fre_layer_forward.3} parent=62 // pred_region
          %s418 = sand.u32 %s136, 1
          %s419 = sand.u32 %s136, 1
          %s420 = smul.addr %s419, 32
          %s421 = scalar_lea.vmem [#allocation2], %s420
        $region67: #{fre_layer_forward.3} parent=62 // pred_fallthru
          _
      $region63: #{fre_layer_forward.3} parent=5 // pred_fallthru
        _
    $region6: #{fre_layer_forward.3} parent=1 // loop_footer
      %s14 = sadd.s32 1, %s10
    $region7: #{fre_layer_forward.3} parent=1 // loop_footer_branch
      %9 = sbr.rel target = $region3
    $region8: #{fre_layer_forward.3} parent=1 // loop_exit
      _

// kernel: fre_layer_forward.4
$region0: #{fre_layer_forward.4}
  #allocation0 [shape = 'u32[]', space=smem, size = 0x4, offset = 0x4, fixed_abs, tag = 'smem constant byte address 0x4 - core index']
  #allocation1 [shape = 'u32[72,128]{1,0:T(1,128)}', space=vmem, size = 0x9000, scoped, tag = 'internal scratch']
  %s0 = inlined_call_operand.vmem [shape: f32[2,2,8,256], index: 0, kind: input, shape index: {}]
  %s1 = inlined_call_operand.vmem [shape: f32[2,2,8,256], index: 1, kind: input, shape index: {}]
  %s2 = inlined_call_operand.vmem [shape: f32[3,8,8], index: 2, kind: input, shape index: {}]
  %s3 = inlined_call_operand.vmem [shape: f32[2,8,1], index: 3, kind: input, shape index: {}]
  %s4 = inlined_call_operand.vmem [shape: f32[3,8,8], index: 4, kind: input, shape index: {}]
  %s5 = inlined_call_operand.vmem [shape: f32[2,8,1], index: 5, kind: input, shape index: {}]
  %s6 = inlined_call_operand.vmem [shape: f32[2,8,256], index: 6, kind: output, shape index: {0}]
  %s7 = inlined_call_operand.vmem [shape: f32[2,8,256], index: 7, kind: output, shape index: {1}]
  %8 = xla_tuple %s6, %s7
  %s9 = sld [smem:[#allocation0]]
  $region111: #{fre_layer_forward.4} parent=0
    _
  %s11 = ssub.s32 1, %s9
  %s12 = scalar_select 0, %s11, %s9
  $region1: #{fre_layer_forward.4} parent=0
    #allocation2 [shape = 'u8[32768]{0}', space=vmem, size = 0x8000, scoped, tag = 'input window, operand 0']
    #allocation3 [shape = 'u8[32768]{0}', space=vmem, size = 0x8000, scoped, tag = 'input window, operand 1']
    loop: start=0, step=1, limit=4
    $region2: #{fre_layer_forward.4} parent=1 // loop_pre_header
      _
    $region3: #{fre_layer_forward.4} parent=1 // loop_header
      %s14 = sphi 0, %s18
      %p15 = scmp.ge.s32.totalorder %s14, 4
      %s21 = sphi 0, %s33
      %s22 = sphi 0, %s29
      %s23 = sphi 0, %s21
      %s24 = sphi 0, %s22
      %s25 = sphi 0, %s23
      %s26 = sphi 0, %s24
      %s38 = sphi 0, %s40
      %s41 = sphi 0, %s38
      %s42 = sphi 0, %s41
      %s58 = sphi 0, %s42
      %s66 = sphi 0, %s68
      %s69 = sphi 0, %s66
      %s70 = sphi 0, %s69
      %s86 = sphi 0, %s70
      %s90 = sphi 0, %s90
      %s92 = sphi 0, %s90
      %s93 = sphi 0, %s92
      %s107 = sphi 0, %s93
      %s111 = sphi 0, %s111
      %s113 = sphi 0, %s111
      %s114 = sphi 0, %s113
      %s128 = sphi 0, %s114
      %s132 = sphi 0, %s132
      %s134 = sphi 0, %s132
      %s135 = sphi 0, %s134
      %s149 = sphi 0, %s135
      %s153 = sphi 0, %s153
      %s155 = sphi 0, %s153
      %s156 = sphi 0, %s155
      %s170 = sphi 0, %s156
      %s178 = sphi 0, %s180
      %s181 = sphi 0, %s178
      %s182 = sphi 0, %s181
      %s198 = sphi 0, %s182
      %s206 = sphi 0, %s208
      %s209 = sphi 0, %s206
      %s210 = sphi 0, %s209
      %s226 = sphi 0, %s210
    $region4: #{fre_layer_forward.4} parent=1 // loop_header_branch
      %17 = sbr.rel (%p15) target = $region8
    $region5: #{fre_layer_forward.4} parent=1 // loop_body
      %s19 = ssub.s32 %s14, 1
      %s20 = ssub.s32 %s14, 2
      %s27 = sadd.s32 1, %s22
      %p28 = scmp.ge.s32.totalorder %s27, 1
      %s29 = scalar_select %p28, 0, %s27
      %s30 = sadd.s32 1, %s21
      %s31 = scalar_select %p28, %s30, %s21
      %p32 = scmp.ge.s32.totalorder %s31, 2
      %s33 = scalar_select %p32, 0, %s31
      %s34 = ssub.s32 %s21, %s33
      %s35 = ssub.s32 %s22, %s29
      %s36 = sor.u32 %s34, %s35
      %p37 = scmp.eq.s32.totalorder %s36, 0
      %s39 = sadd.s32 %s38, 1
      %s40 = scalar_select %p37, %s38, %s39
      %p43 = pneg %p37
      %p44 = scmp.eq.s32.totalorder %s14, 1
      %p45 = por %p43, %p44
      %p46 = scmp.ne.s32.totalorder %s38, %s41
      %p47 = scmp.eq.s32.totalorder %s14, 0
      %p48 = por %p46, %p47
      %p49 = scmp.ne.s32.totalorder %s38, %s41
      %p50 = scmp.eq.s32.totalorder %s19, 1
      %p51 = por %p49, %p50
      %p52 = scmp.ne.s32.totalorder %s41, %s42
      %p53 = scmp.eq.s32.totalorder %s19, 0
      %p54 = por %p52, %p53
      %p55 = scmp.ne.s32.totalorder %s41, %s42
      %p56 = scmp.eq.s32.totalorder %s20, 1
      %p57 = por %p55, %p56
      %p59 = scmp.ne.s32.totalorder %s42, %s58
      %p60 = scmp.eq.s32.totalorder %s20, 0
      %p61 = por %p59, %p60
      %s62 = ssub.s32 %s21, %s33
      %s63 = ssub.s32 %s22, %s29
      %s64 = sor.u32 %s62, %s63
      %p65 = scmp.eq.s32.totalorder %s64, 0
      %s67 = sadd.s32 %s66, 1
      %s68 = scalar_select %p65, %s66, %s67
      %p71 = pneg %p65
      %p72 = scmp.eq.s32.totalorder %s14, 1
      %p73 = por %p71, %p72
      %p74 = scmp.ne.s32.totalorder %s66, %s69
      %p75 = scmp.eq.s32.totalorder %s14, 0
      %p76 = por %p74, %p75
      %p77 = scmp.ne.s32.totalorder %s66, %s69
      %p78 = scmp.eq.s32.totalorder %s19, 1
      %p79 = por %p77, %p78
      %p80 = scmp.ne.s32.totalorder %s69, %s70
      %p81 = scmp.eq.s32.totalorder %s19, 0
      %p82 = por %p80, %p81
      %p83 = scmp.ne.s32.totalorder %s69, %s70
      %p84 = scmp.eq.s32.totalorder %s20, 1
      %p85 = por %p83, %p84
      %p87 = scmp.ne.s32.totalorder %s70, %s86
      %p88 = scmp.eq.s32.totalorder %s20, 0
      %p89 = por %p87, %p88
      %s91 = sadd.s32 %s90, 1
      %p94 = scmp.eq.s32.totalorder %s14, 1
      %p95 = scmp.ne.s32.totalorder %s90, %s92
      %p96 = scmp.eq.s32.totalorder %s14, 0
      %p97 = por %p95, %p96
      %p98 = scmp.ne.s32.totalorder %s90, %s92
      %p99 = scmp.eq.s32.totalorder %s19, 1
      %p100 = por %p98, %p99
      %p101 = scmp.ne.s32.totalorder %s92, %s93
      %p102 = scmp.eq.s32.totalorder %s19, 0
      %p103 = por %p101, %p102
      %p104 = scmp.ne.s32.totalorder %s92, %s93
      %p105 = scmp.eq.s32.totalorder %s20, 1
      %p106 = por %p104, %p105
      %p108 = scmp.ne.s32.totalorder %s93, %s107
      %p109 = scmp.eq.s32.totalorder %s20, 0
      %p110 = por %p108, %p109
      %s112 = sadd.s32 %s111, 1
      %p115 = scmp.eq.s32.totalorder %s14, 1
      %p116 = scmp.ne.s32.totalorder %s111, %s113
      %p117 = scmp.eq.s32.totalorder %s14, 0
      %p118 = por %p116, %p117
      %p119 = scmp.ne.s32.totalorder %s111, %s113
      %p120 = scmp.eq.s32.totalorder %s19, 1
      %p121 = por %p119, %p120
      %p122 = scmp.ne.s32.totalorder %s113, %s114
      %p123 = scmp.eq.s32.totalorder %s19, 0
      %p124 = por %p122, %p123
      %p125 = scmp.ne.s32.totalorder %s113, %s114
      %p126 = scmp.eq.s32.totalorder %s20, 1
      %p127 = por %p125, %p126
      %p129 = scmp.ne.s32.totalorder %s114, %s128
      %p130 = scmp.eq.s32.totalorder %s20, 0
      %p131 = por %p129, %p130
      %s133 = sadd.s32 %s132, 1
      %p136 = scmp.eq.s32.totalorder %s14, 1
      %p137 = scmp.ne.s32.totalorder %s132, %s134
      %p138 = scmp.eq.s32.totalorder %s14, 0
      %p139 = por %p137, %p138
      %p140 = scmp.ne.s32.totalorder %s132, %s134
      %p141 = scmp.eq.s32.totalorder %s19, 1
      %p142 = por %p140, %p141
      %p143 = scmp.ne.s32.totalorder %s134, %s135
      %p144 = scmp.eq.s32.totalorder %s19, 0
      %p145 = por %p143, %p144
      %p146 = scmp.ne.s32.totalorder %s134, %s135
      %p147 = scmp.eq.s32.totalorder %s20, 1
      %p148 = por %p146, %p147
      %p150 = scmp.ne.s32.totalorder %s135, %s149
      %p151 = scmp.eq.s32.totalorder %s20, 0
      %p152 = por %p150, %p151
      %s154 = sadd.s32 %s153, 1
      %p157 = scmp.eq.s32.totalorder %s14, 1
      %p158 = scmp.ne.s32.totalorder %s153, %s155
      %p159 = scmp.eq.s32.totalorder %s14, 0
      %p160 = por %p158, %p159
      %p161 = scmp.ne.s32.totalorder %s153, %s155
      %p162 = scmp.eq.s32.totalorder %s19, 1
      %p163 = por %p161, %p162
      %p164 = scmp.ne.s32.totalorder %s155, %s156
      %p165 = scmp.eq.s32.totalorder %s19, 0
      %p166 = por %p164, %p165
      %p167 = scmp.ne.s32.totalorder %s155, %s156
      %p168 = scmp.eq.s32.totalorder %s20, 1
      %p169 = por %p167, %p168
      %p171 = scmp.ne.s32.totalorder %s156, %s170
      %p172 = scmp.eq.s32.totalorder %s20, 0
      %p173 = por %p171, %p172
      %s174 = ssub.s32 %s21, %s33
      %s175 = ssub.s32 %s22, %s29
      %s176 = sor.u32 %s174, %s175
      %p177 = scmp.eq.s32.totalorder %s176, 0
      %s179 = sadd.s32 %s178, 1
      %s180 = scalar_select %p177, %s178, %s179
      %p183 = pneg %p177
      %p184 = scmp.eq.s32.totalorder %s14, 1
      %p185 = por %p183, %p184
      %p186 = scmp.ne.s32.totalorder %s178, %s181
      %p187 = scmp.eq.s32.totalorder %s14, 0
      %p188 = por %p186, %p187
      %p189 = scmp.ne.s32.totalorder %s178, %s181
      %p190 = scmp.eq.s32.totalorder %s19, 1
      %p191 = por %p189, %p190
      %p192 = scmp.ne.s32.totalorder %s181, %s182
      %p193 = scmp.eq.s32.totalorder %s19, 0
      %p194 = por %p192, %p193
      %p195 = scmp.ne.s32.totalorder %s181, %s182
      %p196 = scmp.eq.s32.totalorder %s20, 1
      %p197 = por %p195, %p196
      %p199 = scmp.ne.s32.totalorder %s182, %s198
      %p200 = scmp.eq.s32.totalorder %s20, 0
      %p201 = por %p199, %p200
      %s202 = ssub.s32 %s21, %s33
      %s203 = ssub.s32 %s22, %s29
      %s204 = sor.u32 %s202, %s203
      %p205 = scmp.eq.s32.totalorder %s204, 0
      %s207 = sadd.s32 %s206, 1
      %s208 = scalar_select %p205, %s206, %s207
      %p211 = pneg %p205
      %p212 = scmp.eq.s32.totalorder %s14, 1
      %p213 = por %p211, %p212
      %p214 = scmp.ne.s32.totalorder %s206, %s209
      %p215 = scmp.eq.s32.totalorder %s14, 0
      %p216 = por %p214, %p215
      %p217 = scmp.ne.s32.totalorder %s206, %s209
      %p218 = scmp.eq.s32.totalorder %s19, 1
      %p219 = por %p217, %p218
      %p220 = scmp.ne.s32.totalorder %s209, %s210
      %p221 = scmp.eq.s32.totalorder %s19, 0
      %p222 = por %p220, %p221
      %p223 = scmp.ne.s32.totalorder %s209, %s210
      %p224 = scmp.eq.s32.totalorder %s20, 1
      %p225 = por %p223, %p224
      %p227 = scmp.ne.s32.totalorder %s210, %s226
      %p228 = scmp.eq.s32.totalorder %s20, 0
      %p229 = por %p227, %p228
      %p230 = scmp.le.s32.totalorder 1, %s14
      %p231 = scmp.lt.s32.totalorder %s14, 3
      %p232 = pnand %p230, %p231
      %p233 = pneg %p232
      // Predicated region
      $region9: #{fre_layer_forward.4} parent=5 // pred_check
        _
      $region10: #{fre_layer_forward.4} parent=5 // pred_check_branch
        %235 = sbr.rel (%p232) target = $region12
      $region11: #{fre_layer_forward.4} parent=5 // pred_region
        %s236 = ssub.s32 %s14, 1
        // Predicated region
        $region13: #{fre_layer_forward.4} parent=11 // pred_check
          %p237 = pneg %p103
        $region14: #{fre_layer_forward.4} parent=11 // pred_check_branch
          %239 = sbr.rel (%p237) target = $region16
        $region15: #{fre_layer_forward.4} parent=11 // pred_region
          _
        $region16: #{fre_layer_forward.4} parent=11 // pred_fallthru
          _
        // Predicated region
        $region17: #{fre_layer_forward.4} parent=11 // pred_check
          %p240 = pneg %p124
        $region18: #{fre_layer_forward.4} parent=11 // pred_check_branch
          %242 = sbr.rel (%p240) target = $region20
        $region19: #{fre_layer_forward.4} parent=11 // pred_region
          _
        $region20: #{fre_layer_forward.4} parent=11 // pred_fallthru
          _
        // Predicated region
        $region21: #{fre_layer_forward.4} parent=11 // pred_check
          %p243 = pneg %p145
        $region22: #{fre_layer_forward.4} parent=11 // pred_check_branch
          %245 = sbr.rel (%p243) target = $region24
        $region23: #{fre_layer_forward.4} parent=11 // pred_region
          _
        $region24: #{fre_layer_forward.4} parent=11 // pred_fallthru
          _
        // Predicated region
        $region25: #{fre_layer_forward.4} parent=11 // pred_check
          %p246 = pneg %p166
        $region26: #{fre_layer_forward.4} parent=11 // pred_check_branch
          %248 = sbr.rel (%p246) target = $region28
        $region27: #{fre_layer_forward.4} parent=11 // pred_region
          _
        $region28: #{fre_layer_forward.4} parent=11 // pred_fallthru
          _
      $region12: #{fre_layer_forward.4} parent=5 // pred_fallthru
        _
      %p249 = scmp.lt.s32.totalorder %s14, 2
      // Predicated region
      $region29: #{fre_layer_forward.4} parent=5 // pred_check
        %p250 = pneg %p249
      $region30: #{fre_layer_forward.4} parent=5 // pred_check_branch
        %252 = sbr.rel (%p250) target = $region32
      $region31: #{fre_layer_forward.4} parent=5 // pred_region
        // Predicated region
        $region33: #{fre_layer_forward.4} parent=31 // pred_check
          %p253 = pneg %p48
        $region34: #{fre_layer_forward.4} parent=31 // pred_check_branch
          %255 = sbr.rel (%p253) target = $region36
        $region35: #{fre_layer_forward.4} parent=31 // pred_region
          %s256 = sand.u32 %s38, 1
          %s257 = sand.u32 %s38, 1
          %s258 = smul.addr %s257, 32
          %s259 = scalar_lea.vmem [#allocation2], %s258
          %s260 = smul.u32 2, %s22
          %s261 = smul.addr %s21, 2
          %s262 = sadd.s32 %s260, %s261
          %s263 = smul.addr %s262, 8
          %s264 = scalar_lea.vmem %s0, %s263
          // Predicated region
          $region37: #{fre_layer_forward.4} parent=35 // pred_check
            _
          $region38: #{fre_layer_forward.4} parent=35 // pred_check_branch
            %266 = sbr.rel (0) target = $region40
          $region39: #{fre_layer_forward.4} parent=35 // pred_region
            // Predicated region
            $region41: #{fre_layer_forward.4} parent=39 // pred_check
              _
            $region42: #{fre_layer_forward.4} parent=39 // pred_check_branch
              %268 = sbr.rel (0) target = $region44
            $region43: #{fre_layer_forward.4} parent=39 // pred_region
              loop: start=0, step=1, limit=1
              $region45: #{fre_layer_forward.4} parent=43 // loop_pre_header
                _
              $region46: #{fre_layer_forward.4} parent=43 // loop_header
                %s270 = sphi 0, %s274
                %p271 = scmp.ge.s32.totalorder %s270, 1
                %s275 = sphi %s264, %s264
                %s276 = sphi %s259, %s259
              $region47: #{fre_layer_forward.4} parent=43 // loop_header_branch
                %273 = sbr.rel (%p271) target = $region51
              $region48: #{fre_layer_forward.4} parent=43 // loop_body
                %v277 = vld [vmem:[%s275] sm:$0xff]
                %278 = vst [vmem:[%s276] sm:$0xff] %v277
                %v279 = vld [vmem:[%s275 + $0x8] sm:$0xff]
                %280 = vst [vmem:[%s276 + $0x8] sm:$0xff] %v279
                %v281 = vld [vmem:[%s275 + $0x20] sm:$0xff]
                %282 = vst [vmem:[%s276 + $0x10] sm:$0xff] %v281
                %v283 = vld [vmem:[%s275 + $0x28] sm:$0xff]
                %284 = vst [vmem:[%s276 + $0x18] sm:$0xff] %v283
              $region49: #{fre_layer_forward.4} parent=43 // loop_footer
                %s274 = sadd.s32 1, %s270
              $region50: #{fre_layer_forward.4} parent=43 // loop_footer_branch
                %269 = sbr.rel target = $region46
              $region51: #{fre_layer_forward.4} parent=43 // loop_exit
                _
            $region44: #{fre_layer_forward.4} parent=39 // pred_fallthru
              _
            // Predicated region
            $region52: #{fre_layer_forward.4} parent=39 // pred_check
              _
            $region53: #{fre_layer_forward.4} parent=39 // pred_check_branch
              %286 = sbr.rel target = $region55
            $region54: #{fre_layer_forward.4} parent=39 // pred_region
              _
            $region55: #{fre_layer_forward.4} parent=39 // pred_fallthru
              _
          $region40: #{fre_layer_forward.4} parent=35 // pred_fallthru
            _
          %287 = vnop
        $region36: #{fre_layer_forward.4} parent=31 // pred_fallthru
          _
        // Predicated region
        $region56: #{fre_layer_forward.4} parent=31 // pred_check
          %p288 = pneg %p76
        $region57: #{fre_layer_forward.4} parent=31 // pred_check_branch
          %290 = sbr.rel (%p288) target = $region59
        $region58: #{fre_layer_forward.4} parent=31 // pred_region
          %s291 = sand.u32 %s66, 1
          %s292 = sand.u32 %s66, 1
          %s293 = smul.addr %s292, 32
          %s294 = scalar_lea.vmem [#allocation3], %s293
          %s295 = smul.u32 2, %s22
          %s296 = smul.addr %s21, 2
          %s297 = sadd.s32 %s295, %s296
          %s298 = smul.addr %s297, 8
          %s299 = scalar_lea.vmem %s1, %s298
          // Predicated region
          $region60: #{fre_layer_forward.4} parent=58 // pred_check
            _
          $region61: #{fre_layer_forward.4} parent=58 // pred_check_branch
            %301 = sbr.rel (0) target = $region63
          $region62: #{fre_layer_forward.4} parent=58 // pred_region
            // Predicated region
            $region64: #{fre_layer_forward.4} parent=62 // pred_check
              _
            $region65: #{fre_layer_forward.4} parent=62 // pred_check_branch
              %303 = sbr.rel (0) target = $region67
            $region66: #{fre_layer_forward.4} parent=62 // pred_region
              loop: start=0, step=1, limit=1
              $region68: #{fre_layer_forward.4} parent=66 // loop_pre_header
                _
              $region69: #{fre_layer_forward.4} parent=66 // loop_header
                %s305 = sphi 0, %s309
                %p306 = scmp.ge.s32.totalorder %s305, 1
                %s310 = sphi %s299, %s299
                %s311 = sphi %s294, %s294
              $region70: #{fre_layer_forward.4} parent=66 // loop_header_branch
                %308 = sbr.rel (%p306) target = $region74
              $region71: #{fre_layer_forward.4} parent=66 // loop_body
                %v312 = vld [vmem:[%s310] sm:$0xff]
                %313 = vst [vmem:[%s311] sm:$0xff] %v312
                %v314 = vld [vmem:[%s310 + $0x8] sm:$0xff]
                %315 = vst [vmem:[%s311 + $0x8] sm:$0xff] %v314
                %v316 = vld [vmem:[%s310 + $0x20] sm:$0xff]
                %317 = vst [vmem:[%s311 + $0x10] sm:$0xff] %v316
                %v318 = vld [vmem:[%s310 + $0x28] sm:$0xff]
                %319 = vst [vmem:[%s311 + $0x18] sm:$0xff] %v318
              $region72: #{fre_layer_forward.4} parent=66 // loop_footer
                %s309 = sadd.s32 1, %s305
              $region73: #{fre_layer_forward.4} parent=66 // loop_footer_branch
                %304 = sbr.rel target = $region69
              $region74: #{fre_layer_forward.4} parent=66 // loop_exit
                _
            $region67: #{fre_layer_forward.4} parent=62 // pred_fallthru
              _
            // Predicated region
            $region75: #{fre_layer_forward.4} parent=62 // pred_check
              _
            $region76: #{fre_layer_forward.4} parent=62 // pred_check_branch
              %321 = sbr.rel target = $region78
            $region77: #{fre_layer_forward.4} parent=62 // pred_region
              _
            $region78: #{fre_layer_forward.4} parent=62 // pred_fallthru
              _
          $region63: #{fre_layer_forward.4} parent=58 // pred_fallthru
            _
          %322 = vnop
        $region59: #{fre_layer_forward.4} parent=31 // pred_fallthru
          _
      $region32: #{fre_layer_forward.4} parent=5 // pred_fallthru
        _
      %p323 = scmp.le.s32.totalorder 1, %s14
      %p324 = scmp.lt.s32.totalorder %s14, 3
      %p325 = pnand %p323, %p324
      %p326 = pneg %p325
      // Predicated region
      $region79: #{fre_layer_forward.4} parent=5 // pred_check
        _
      $region80: #{fre_layer_forward.4} parent=5 // pred_check_branch
        %328 = sbr.rel (%p325) target = $region82
      $region81: #{fre_layer_forward.4} parent=5 // pred_region
        %s329 = ssub.s32 %s14, 1
        %s330 = sand.u32 %s41, 1
        %s331 = sand.u32 %s41, 1
        %s332 = smul.addr %s331, 32
        %s333 = scalar_lea.vmem [#allocation2], %s332
        // Predicated region
        $region83: #{fre_layer_forward.4} parent=81 // pred_check
          %p334 = pneg %p54
        $region84: #{fre_layer_forward.4} parent=81 // pred_check_branch
          %336 = sbr.rel (%p334) target = $region86
        $region85: #{fre_layer_forward.4} parent=81 // pred_region
          _
        $region86: #{fre_layer_forward.4} parent=81 // pred_fallthru
          _
        %s337 = sand.u32 %s69, 1
        %s338 = sand.u32 %s69, 1
        %s339 = smul.addr %s338, 32
        %s340 = scalar_lea.vmem [#allocation3], %s339
        // Predicated region
        $region87: #{fre_layer_forward.4} parent=81 // pred_check
          %p341 = pneg %p82
        $region88: #{fre_layer_forward.4} parent=81 // pred_check_branch
          %343 = sbr.rel (%p341) target = $region90
        $region89: #{fre_layer_forward.4} parent=81 // pred_region
          _
        $region90: #{fre_layer_forward.4} parent=81 // pred_fallthru
          _
        %s344 = sand.u32 %s41, 1
        %s345 = sand.u32 %s41, 1
        %s346 = smul.addr %s345, 32
        %s347 = scalar_lea.vmem [#allocation2], %s346
        %p348 = pneg %p54
        %p349 = pneg %p51
        %s350 = sand.u32 %s69, 1
        %s351 = sand.u32 %s69, 1
        %s352 = smul.addr %s351, 32
        %s353 = scalar_lea.vmem [#allocation3], %s352
        %p354 = pneg %p82
        %p355 = pneg %p79
        %p356 = pneg %p103
        %p357 = pneg %p100
        %p358 = pneg %p124
        %p359 = pneg %p121
        %p360 = pneg %p145
        %p361 = pneg %p142
        %p362 = pneg %p166
        %p363 = pneg %p163
        %p364 = pneg %p194
        %p365 = pneg %p191
        %s366 = smul.u32 2, %s24
        %p367 = scmp.lt.s32.totalorder %s23, 1
        %s368 = scalar_select %p367, %s23, 1
        %p369 = scmp.lt.s32.totalorder %s366, 1
        %s370 = scalar_select %p369, %s366, 1
        %s371 = smul.addr %s368, 2
        %s372 = sadd.s32 %s370, %s371
        %s373 = smul.addr %s372, 8
        %s374 = scalar_lea.vmem %s6, %s373
        %p375 = pneg %p222
        %p376 = pneg %p219
        %s377 = smul.u32 2, %s24
        %p378 = scmp.lt.s32.totalorder %s23, 1
        %s379 = scalar_select %p378, %s23, 1
        %p380 = scmp.lt.s32.totalorder %s377, 1
        %s381 = scalar_select %p380, %s377, 1
        %s382 = smul.addr %s379, 2
        %s383 = sadd.s32 %s381, %s382
        %s384 = smul.addr %s383, 8
        %s385 = scalar_lea.vmem %s7, %s384
        %s386 = smul.u32 2, %s24
        %s387 = smul.u32 2, %s24
        %s388 = smul.u32 2, %s24
        %p389 = scmp.lt.s32.totalorder %s23, 1
        %s390 = scalar_select %p389, %s23, 1
        %p391 = scmp.lt.s32.totalorder %s388, 1
        %s392 = scalar_select %p391, %s388, 1
        %s393 = smul.addr %s390, 2
        %s394 = sadd.s32 %s392, %s393
        %s395 = smul.addr %s394, 8
        %s396 = scalar_lea.vmem %s6, %s395
        %s397 = smul.u32 2, %s24
        %s398 = smul.u32 2, %s24
        %p399 = scmp.lt.s32.totalorder %s23, 1
        %s400 = scalar_select %p399, %s23, 1
        %p401 = scmp.lt.s32.totalorder %s398, 1
        %s402 = scalar_select %p401, %s398, 1
        %s403 = smul.addr %s400, 2
        %s404 = sadd.s32 %s402, %s403
        %s405 = smul.addr %s404, 8
        %s406 = scalar_lea.vmem %s7, %s405
        %s407 = smul.u32 2, %s24
        %v408 = vld [vmem:[%s2] sm:$0xff]
        %v409 = vld [vmem:[%s333] sm:$0xff]
        %v410 = vld [vmem:[%s333 + $0x8] sm:$0xff]
        %s411 = scalar_lea.vmem %s2, 8
        %v412 = vld [vmem:[%s411] sm:$0xff]
        %s413 = scalar_lea.vmem %s333, 16 [#allocation2]
        %v414 = vld [vmem:[%s413] sm:$0xff]
        %v415 = vld [vmem:[%s413 + $0x8] sm:$0xff]
        %vm416 = vcmask 64512
        %v418 = vsel %vm416, %v412, 0
        %420 = vmatpush.msra.mxu0 0.0
        %421 = vmatpush.msra.mxu0 0.0
        %422 = vmatpush.msra.mxu0 0.0
        %423 = vmatpush.msra.mxu0 0.0
        %424 = vmatpush.msra.mxu0 0.0
        %425 = vmatpush.msra.mxu0 0.0
        %426 = vmatpush.msra.mxu0 0.0
        %427 = vmatpush.msra.mxu0 0.0
        %428 = vmatpush.msra.mxu0 0.0
        %429 = vmatpush.msra.mxu0 0.0
        %430 = vmatpush.msra.mxu0 0.0
        %431 = vmatpush.msra.mxu0 0.0
        %432 = vmatpush.msra.mxu0 0.0
        %433 = vmatpush.msra.mxu0 0.0
        %434 = vmatpush.msra.mxu0 0.0
        %435 = vmatpush.msra.mxu0 %v414
        %436 = vmatmul.f32.gmra.mxu0 %v418
        %v437 = vpop.f32.mrf.mxu0
        %v438 = vadd.f32 0.0, %v437
        %439 = vdwg.mxu0
        %440 = vmatpush.msra.mxu0 0.0
        %441 = vmatpush.msra.mxu0 0.0
        %442 = vmatpush.msra.mxu0 0.0
        %443 = vmatpush.msra.mxu0 0.0
        %444 = vmatpush.msra.mxu0 0.0
        %445 = vmatpush.msra.mxu0 0.0
        %446 = vmatpush.msra.mxu0 0.0
        %447 = vmatpush.msra.mxu0 0.0
        %448 = vmatpush.msra.mxu0 0.0
        %449 = vmatpush.msra.mxu0 0.0
        %450 = vmatpush.msra.mxu0 0.0
        %451 = vmatpush.msra.mxu0 0.0
        %452 = vmatpush.msra.mxu0 0.0
        %453 = vmatpush.msra.mxu0 0.0
        %454 = vmatpush.msra.mxu0 0.0
        %455 = vmatpush.msra.mxu0 %v415
        %456 = vmatmul.f32.gmra.mxu0 %v418
        %v457 = vpop.f32.mrf.mxu0
        %v458 = vadd.f32 0.0, %v457
        %459 = vdwg.mxu0
        %v461 = vsel %vm416, %v408, 0
        %463 = vmatpush.msra.mxu0 0.0
        %464 = vmatpush.msra.mxu0 0.0
        %465 = vmatpush.msra.mxu0 0.0
        %466 = vmatpush.msra.mxu0 0.0
        %467 = vmatpush.msra.mxu0 0.0
        %468 = vmatpush.msra.mxu0 0.0
        %469 = vmatpush.msra.mxu0 0.0
        %470 = vmatpush.msra.mxu0 0.0
        %471 = vmatpush.msra.mxu0 0.0
        %472 = vmatpush.msra.mxu0 0.0
        %473 = vmatpush.msra.mxu0 0.0
        %474 = vmatpush.msra.mxu0 0.0
        %475 = vmatpush.msra.mxu0 0.0
        %476 = vmatpush.msra.mxu0 0.0
        %477 = vmatpush.msra.mxu0 0.0
        %478 = vmatpush.msra.mxu0 %v409
        %479 = vmatmul.f32.gmra.mxu0 %v461
        %v480 = vpop.f32.mrf.mxu0
        %v481 = vadd.f32 %v438, %v480
        %482 = vdwg.mxu0
        %483 = vmatpush.msra.mxu0 0.0
        %484 = vmatpush.msra.mxu0 0.0
        %485 = vmatpush.msra.mxu0 0.0
        %486 = vmatpush.msra.mxu0 0.0
        %487 = vmatpush.msra.mxu0 0.0
        %488 = vmatpush.msra.mxu0 0.0
        %489 = vmatpush.msra.mxu0 0.0
        %490 = vmatpush.msra.mxu0 0.0
        %491 = vmatpush.msra.mxu0 0.0
        %492 = vmatpush.msra.mxu0 0.0
        %493 = vmatpush.msra.mxu0 0.0
        %494 = vmatpush.msra.mxu0 0.0
        %495 = vmatpush.msra.mxu0 0.0
        %496 = vmatpush.msra.mxu0 0.0
        %497 = vmatpush.msra.mxu0 0.0
        %498 = vmatpush.msra.mxu0 %v410
        %499 = vmatmul.f32.gmra.mxu0 %v461
        %v500 = vpop.f32.mrf.mxu0
        %v501 = vadd.f32 %v458, %v500
        %502 = vdwg.mxu0
        %v503 = vld [vmem:[%s3] sm:$0xff]
        %505 = vset.pattern.permute.xlu0 0
        %506 = vperm.xlu0 %505, %v503
        %v507 = vpop.permute.xlu0 %506
        %v509 = vadd.f32 %v481, %v507
        %v510 = vadd.f32 %v501, %v507
        %vm511 = vcmp.ge.f32.partialorder %v509, 0.0
        %vm512 = vcmp.ge.f32.partialorder %v510, 0.0
        %v513 = vmul.f32 %v509, 0.1
        %v514 = vmul.f32 %v510, 0.1
        %v515 = vsel %vm511, %v509, %v513
        %v516 = vsel %vm512, %v510, %v514
        %s517 = scalar_lea.vmem %s2, 16
        %v518 = vld [vmem:[%s517] sm:$0xff]
        %s519 = scalar_lea.vmem %s3, 8
        %v520 = vld [vmem:[%s519] sm:$0xff]
        %522 = vset.pattern.permute.xlu0 0
        %523 = vperm.xlu0 %522, %v520
        %v524 = vpop.permute.xlu0 %523
        %v527 = vsel %vm416, %v518, 0
        %529 = vmatpush.msra.mxu0 0.0
        %530 = vmatpush.msra.mxu0 0.0
        %531 = vmatpush.msra.mxu0 0.0
        %532 = vmatpush.msra.mxu0 0.0
        %533 = vmatpush.msra.mxu0 0.0
        %534 = vmatpush.msra.mxu0 0.0
        %535 = vmatpush.msra.mxu0 0.0
        %536 = vmatpush.msra.mxu0 0.0
        %537 = vmatpush.msra.mxu0 0.0
        %538 = vmatpush.msra.mxu0 0.0
        %539 = vmatpush.msra.mxu0 0.0
        %540 = vmatpush.msra.mxu0 0.0
        %541 = vmatpush.msra.mxu0 0.0
        %542 = vmatpush.msra.mxu0 0.0
        %543 = vmatpush.msra.mxu0 0.0
        %544 = vmatpush.msra.mxu0 %v515
        %545 = vmatmul.f32.gmra.mxu0 %v527
        %v546 = vpop.f32.mrf.mxu0
        %v547 = vadd.f32 %v524, %v546
        %548 = vdwg.mxu0
        %549 = vmatpush.msra.mxu0 0.0
        %550 = vmatpush.msra.mxu0 0.0
        %551 = vmatpush.msra.mxu0 0.0
        %552 = vmatpush.msra.mxu0 0.0
        %553 = vmatpush.msra.mxu0 0.0
        %554 = vmatpush.msra.mxu0 0.0
        %555 = vmatpush.msra.mxu0 0.0
        %556 = vmatpush.msra.mxu0 0.0
        %557 = vmatpush.msra.mxu0 0.0
        %558 = vmatpush.msra.mxu0 0.0
        %559 = vmatpush.msra.mxu0 0.0
        %560 = vmatpush.msra.mxu0 0.0
        %561 = vmatpush.msra.mxu0 0.0
        %562 = vmatpush.msra.mxu0 0.0
        %563 = vmatpush.msra.mxu0 0.0
        %564 = vmatpush.msra.mxu0 %v516
        %565 = vmatmul.f32.gmra.mxu0 %v527
        %v566 = vpop.f32.mrf.mxu0
        %v567 = vadd.f32 %v524, %v566
        %568 = vdwg.mxu0
        %v569 = vld [vmem:[%s4] sm:$0xff]
        %v570 = vld [vmem:[%s340] sm:$0xff]
        %v571 = vld [vmem:[%s340 + $0x8] sm:$0xff]
        %s572 = scalar_lea.vmem %s4, 8
        %v573 = vld [vmem:[%s572] sm:$0xff]
        %s574 = scalar_lea.vmem %s340, 16 [#allocation3]
        %v575 = vld [vmem:[%s574] sm:$0xff]
        %v576 = vld [vmem:[%s574 + $0x8] sm:$0xff]
        %v578 = vsel %vm416, %v573, 0
        %580 = vmatpush.msra.mxu0 0.0
        %581 = vmatpush.msra.mxu0 0.0
        %582 = vmatpush.msra.mxu0 0.0
        %583 = vmatpush.msra.mxu0 0.0
        %584 = vmatpush.msra.mxu0 0.0
        %585 = vmatpush.msra.mxu0 0.0
        %586 = vmatpush.msra.mxu0 0.0
        %587 = vmatpush.msra.mxu0 0.0
        %588 = vmatpush.msra.mxu0 0.0
        %589 = vmatpush.msra.mxu0 0.0
        %590 = vmatpush.msra.mxu0 0.0
        %591 = vmatpush.msra.mxu0 0.0
        %592 = vmatpush.msra.mxu0 0.0
        %593 = vmatpush.msra.mxu0 0.0
        %594 = vmatpush.msra.mxu0 0.0
        %595 = vmatpush.msra.mxu0 %v575
        %596 = vmatmul.f32.gmra.mxu0 %v578
        %v597 = vpop.f32.mrf.mxu0
        %v598 = vadd.f32 0.0, %v597
        %599 = vdwg.mxu0
        %600 = vmatpush.msra.mxu0 0.0
        %601 = vmatpush.msra.mxu0 0.0
        %602 = vmatpush.msra.mxu0 0.0
        %603 = vmatpush.msra.mxu0 0.0
        %604 = vmatpush.msra.mxu0 0.0
        %605 = vmatpush.msra.mxu0 0.0
        %606 = vmatpush.msra.mxu0 0.0
        %607 = vmatpush.msra.mxu0 0.0
        %608 = vmatpush.msra.mxu0 0.0
        %609 = vmatpush.msra.mxu0 0.0
        %610 = vmatpush.msra.mxu0 0.0
        %611 = vmatpush.msra.mxu0 0.0
        %612 = vmatpush.msra.mxu0 0.0
        %613 = vmatpush.msra.mxu0 0.0
        %614 = vmatpush.msra.mxu0 0.0
        %615 = vmatpush.msra.mxu0 %v576
        %616 = vmatmul.f32.gmra.mxu0 %v578
        %v617 = vpop.f32.mrf.mxu0
        %v618 = vadd.f32 0.0, %v617
        %619 = vdwg.mxu0
        %v621 = vsel %vm416, %v569, 0
        %623 = vmatpush.msra.mxu0 0.0
        %624 = vmatpush.msra.mxu0 0.0
        %625 = vmatpush.msra.mxu0 0.0
        %626 = vmatpush.msra.mxu0 0.0
        %627 = vmatpush.msra.mxu0 0.0
        %628 = vmatpush.msra.mxu0 0.0
        %629 = vmatpush.msra.mxu0 0.0
        %630 = vmatpush.msra.mxu0 0.0
        %631 = vmatpush.msra.mxu0 0.0
        %632 = vmatpush.msra.mxu0 0.0
        %633 = vmatpush.msra.mxu0 0.0
        %634 = vmatpush.msra.mxu0 0.0
        %635 = vmatpush.msra.mxu0 0.0
        %636 = vmatpush.msra.mxu0 0.0
        %637 = vmatpush.msra.mxu0 0.0
        %638 = vmatpush.msra.mxu0 %v570
        %639 = vmatmul.f32.gmra.mxu0 %v621
        %v640 = vpop.f32.mrf.mxu0
        %v641 = vadd.f32 %v598, %v640
        %642 = vdwg.mxu0
        %643 = vmatpush.msra.mxu0 0.0
        %644 = vmatpush.msra.mxu0 0.0
        %645 = vmatpush.msra.mxu0 0.0
        %646 = vmatpush.msra.mxu0 0.0
        %647 = vmatpush.msra.mxu0 0.0
        %648 = vmatpush.msra.mxu0 0.0
        %649 = vmatpush.msra.mxu0 0.0
        %650 = vmatpush.msra.mxu0 0.0
        %651 = vmatpush.msra.mxu0 0.0
        %652 = vmatpush.msra.mxu0 0.0
        %653 = vmatpush.msra.mxu0 0.0
        %654 = vmatpush.msra.mxu0 0.0
        %655 = vmatpush.msra.mxu0 0.0
        %656 = vmatpush.msra.mxu0 0.0
        %657 = vmatpush.msra.mxu0 0.0
        %658 = vmatpush.msra.mxu0 %v571
        %659 = vmatmul.f32.gmra.mxu0 %v621
        %v660 = vpop.f32.mrf.mxu0
        %v661 = vadd.f32 %v618, %v660
        %662 = vdwg.mxu0
        %v663 = vld [vmem:[%s5] sm:$0xff]
        %665 = vset.pattern.permute.xlu0 0
        %666 = vperm.xlu0 %665, %v663
        %v667 = vpop.permute.xlu0 %666
        %v669 = vadd.f32 %v641, %v667
        %v670 = vadd.f32 %v661, %v667
        %vm671 = vcmp.ge.f32.partialorder %v669, 0.0
        %vm672 = vcmp.ge.f32.partialorder %v670, 0.0
        %v673 = vmul.f32 %v669, 0.1
        %v674 = vmul.f32 %v670, 0.1
        %v675 = vsel %vm671, %v669, %v673
        %v676 = vsel %vm672, %v670, %v674
        %s677 = scalar_lea.vmem %s4, 16
        %v678 = vld [vmem:[%s677] sm:$0xff]
        %s679 = scalar_lea.vmem %s5, 8
        %v680 = vld [vmem:[%s679] sm:$0xff]
        %682 = vset.pattern.permute.xlu0 0
        %683 = vperm.xlu0 %682, %v680
        %v684 = vpop.permute.xlu0 %683
        %v687 = vsel %vm416, %v678, 0
        %689 = vmatpush.msra.mxu0 0.0
        %690 = vmatpush.msra.mxu0 0.0
        %691 = vmatpush.msra.mxu0 0.0
        %692 = vmatpush.msra.mxu0 0.0
        %693 = vmatpush.msra.mxu0 0.0
        %694 = vmatpush.msra.mxu0 0.0
        %695 = vmatpush.msra.mxu0 0.0
        %696 = vmatpush.msra.mxu0 0.0
        %697 = vmatpush.msra.mxu0 0.0
        %698 = vmatpush.msra.mxu0 0.0
        %699 = vmatpush.msra.mxu0 0.0
        %700 = vmatpush.msra.mxu0 0.0
        %701 = vmatpush.msra.mxu0 0.0
        %702 = vmatpush.msra.mxu0 0.0
        %703 = vmatpush.msra.mxu0 0.0
        %704 = vmatpush.msra.mxu0 %v675
        %705 = vmatmul.f32.gmra.mxu0 %v687
        %v706 = vpop.f32.mrf.mxu0
        %v707 = vadd.f32 %v684, %v706
        %708 = vdwg.mxu0
        %709 = vmatpush.msra.mxu0 0.0
        %710 = vmatpush.msra.mxu0 0.0
        %711 = vmatpush.msra.mxu0 0.0
        %712 = vmatpush.msra.mxu0 0.0
        %713 = vmatpush.msra.mxu0 0.0
        %714 = vmatpush.msra.mxu0 0.0
        %715 = vmatpush.msra.mxu0 0.0
        %716 = vmatpush.msra.mxu0 0.0
        %717 = vmatpush.msra.mxu0 0.0
        %718 = vmatpush.msra.mxu0 0.0
        %719 = vmatpush.msra.mxu0 0.0
        %720 = vmatpush.msra.mxu0 0.0
        %721 = vmatpush.msra.mxu0 0.0
        %722 = vmatpush.msra.mxu0 0.0
        %723 = vmatpush.msra.mxu0 0.0
        %724 = vmatpush.msra.mxu0 %v676
        %725 = vmatmul.f32.gmra.mxu0 %v687
        %v726 = vpop.f32.mrf.mxu0
        %v727 = vadd.f32 %v684, %v726
        %728 = vdwg.mxu0
        %v729 = vand.u32 2147483647, %v707
        %vm730 = vcmp.le.f32.partialorder %v729, 0.7853982
        %vm731 = vcmp.lt.s32.totalorder %v707, 0
        %v732 = vand.u32 %v707, 2139095040
        %v733 = vshrl.u32 %v732, 23
        %v734 = vsub.s32 %v733, 127
        %v735 = vand.u32 2147483647, %v707
        %v736 = vand.u32 %v735, 8388607
        %v737 = vor.u32 %v736, 8388608
        %v738 = vsub.s32 0, %v737
        %v739 = vadd.s32 %v734, 1
        %vm740 = vcmp.gt.s32.totalorder %v739, 0
        %v741 = vsel %vm740, %v739, 0
        %v742 = vshrl.u32 %v741, 5
        %v743 = vand.u32 %v741, 31
        %v744 = vsub.s32 32, %v743
        %v745 = vshrl.u32 683565275, %v744
        %v746 = vshll.u32 683565275, %v743
        %v747 = vshrl.u32 2475754826, %v744
        %v748 = vor.u32 %v746, %v747
        %v749 = vshll.u32 2475754826, %v743
        %v750 = vshrl.u32 2131351028, %v744
        %v751 = vor.u32 %v749, %v750
        %v752 = vshll.u32 2131351028, %v743
        %v753 = vshrl.u32 2102212464, %v744
        %v754 = vor.u32 %v752, %v753
        %v755 = vshll.u32 2102212464, %v743
        %v756 = vshrl.u32 920167782, %v744
        %v757 = vor.u32 %v755, %v756
        %v758 = vshll.u32 920167782, %v743
        %v759 = vshrl.u32 1326507024, %v744
        %v760 = vor.u32 %v758, %v759
        %vm761 = vcmp.lt.s32.totalorder %v742, 1
        %vm762 = vcmp.lt.s32.totalorder %v742, 2
        %vm763 = vcmp.lt.s32.totalorder %v742, 3
        %vm764 = vcmp.lt.s32.totalorder %v742, 4
        %v765 = vsel %vm761, %v745, %v748
        %v766 = vsel %vm764, %v754, 2102212464
        %v767 = vsel %vm763, %v751, %v766
        %v768 = vsel %vm762, %v765, %v767
        %v769 = vsel %vm761, %v748, %v751
        %v770 = vsel %vm764, %v757, 920167782
        %v771 = vsel %vm763, %v754, %v770
        %v772 = vsel %vm762, %v769, %v771
        %v773 = vsel %vm761, %v751, %v754
        %v774 = vsel %vm764, %v760, 1326507024
        %v775 = vsel %vm763, %v757, %v774
        %v776 = vsel %vm762, %v773, %v775
        %v777 = vshll.u32 %v737, 8
        %v778 = vand.u32 %v777, 65535
        %v779 = vshrl.u32 %v777, 16
        %v780 = vand.u32 %v776, 65535
        %v781 = vshrl.u32 %v776, 16
        %v782 = vmul.u32 %v778, %v780
        %v783 = vmul.u32 %v778, %v781
        %v784 = vmul.u32 %v779, %v780
        %v785 = vmul.u32 %v779, %v781
        %v786 = vshll.u32 %v783, 16
        %v787 = vshrl.u32 %v783, 16
        %v788 = vshll.u32 %v784, 16
        %v789 = vshrl.u32 %v784, 16
        %vm790 = vc.u32 %v782, %v786
        %v791 = vsel %vm790, 1, 0
        %v792 = vadd.s32 %v782, %v786
        %v793 = vadd.s32 %v785, %v791
        %vm794 = vc.u32 %v792, %v788
        %v795 = vsel %vm794, 1, 0
        %v796 = vadd.s32 %v792, %v788
        %v797 = vadd.s32 %v793, %v795
        %v798 = vadd.s32 %v797, %v787
        %v799 = vadd.s32 %v798, %v789
        %v800 = vand.u32 %v777, 65535
        %v801 = vshrl.u32 %v777, 16
        %v802 = vand.u32 %v772, 65535
        %v803 = vshrl.u32 %v772, 16
        %v804 = vmul.u32 %v800, %v802
        %v805 = vmul.u32 %v800, %v803
        %v806 = vmul.u32 %v801, %v802
        %v807 = vmul.u32 %v801, %v803
        %v808 = vshll.u32 %v805, 16
        %v809 = vshrl.u32 %v805, 16
        %v810 = vshll.u32 %v806, 16
        %v811 = vshrl.u32 %v806, 16
        %vm812 = vc.u32 %v804, %v808
        %v813 = vsel %vm812, 1, 0
        %v814 = vadd.s32 %v804, %v808
        %v815 = vadd.s32 %v807, %v813
        %vm816 = vc.u32 %v814, %v810
        %v817 = vsel %vm816, 1, 0
        %v818 = vadd.s32 %v814, %v810
        %v819 = vadd.s32 %v815, %v817
        %v820 = vadd.s32 %v819, %v809
        %v821 = vadd.s32 %v820, %v811
        %v822 = vmul.u32 %v777, %v768
        %v823 = vadd.s32 %v799, %v818
        %vm824 = vc.u32 %v799, %v818
        %v825 = vadd.s32 %v821, 1
        %v826 = vsel %vm824, %v825, %v821
        %v827 = vadd.s32 %v822, %v826
        %v828 = vadd.s32 %v827, 536870912
        %v829 = vshrl.u32 %v828, 30
        %v830 = vshll.u32 %v829, 30
        %v831 = vsub.s32 %v827, %v830
        %vm832 = vcmp.lt.s32.totalorder %v831, 0
        %v833 = vsub.s32 0, %v831
        %v834 = vsel %vm832, %v833, %v831
        %v835 = vclz %v834
        %v836 = vsub.s32 %v835, 2
        %vm837 = vcmp.gt.s32.totalorder 0, %v836
        %v838 = vsel %vm837, 0, %v836
        %v839 = vsub.s32 32, %v838
        %v840 = vshll.u32 %v831, %v838
        %v841 = vshrl.u32 %v823, %v839
        %v842 = vor.u32 %v840, %v841
        %v843 = vsub.s32 4294967266, %v838
        %v844 = vadd.s32 %v843, 127
        %v845 = vshll.u32 %v844, 23
        %v846 = vor.u32 4788187, %v845
        %v847 = vand.u32 2147483647, %v846
        %v849 = vcvt.s32.f32 %v842
        %v850 = vmul.f32 %v849, %v847
        %v851 = vxor.u32 %v850, 2147483648
        %v852 = vsel %vm731, %v851, %v850
        %v853 = vsub.s32 4, %v829
        %v854 = vsel %vm731, %v853, %v829
        %v855 = vsel %vm730, %v707, %v852
        %v856 = vsel %vm730, 0, %v854
        %v857 = vmul.f32 %v855, %v855
        %v858 = vmul.f32 %v857, -0.001358992
        %v859 = vadd.f32 %v858, 0.041655596
        %v860 = vmul.f32 %v857, %v859
        %v861 = vadd.f32 %v860, -0.4999988
        %v862 = vmul.f32 %v857, %v861
        %v863 = vadd.f32 1.0, %v862
        %v864 = vmul.f32 %v855, %v855
        %v865 = vmul.f32 %v864, -0.00019511016
        %v866 = vadd.f32 %v865, 0.008332121
        %v867 = vmul.f32 %v864, %v866
        %v868 = vadd.f32 %v867, -0.16666654
        %v869 = vmul.f32 %v864, %v868
        %v870 = vadd.f32 %v869, 1.0
        %v871 = vmul.f32 %v870, %v855
        %vm872 = vweird.f32 %v707
        %v873 = vand.u32 %v856, 3
        %vm874 = vcmp.lt.s32.totalorder %v873, 2
        %vm875 = vcmp.eq.s32.totalorder %v873, 0
        %v876 = vxor.u32 %v871, 2147483648
        %v877 = vsel %vm875, %v863, %v876
        %vm878 = vcmp.eq.s32.totalorder %v873, 2
        %v879 = vxor.u32 %v863, 2147483648
        %v880 = vsel %vm878, %v879, %v871
        %v881 = vsel %vm874, %v877, %v880
        %v882 = vsel %vm872, nan, %v881
        %v883 = vand.u32 2147483647, %v727
        %vm884 = vcmp.le.f32.partialorder %v883, 0.7853982
        %vm885 = vcmp.lt.s32.totalorder %v727, 0
        %v886 = vand.u32 %v727, 2139095040
        %v887 = vshrl.u32 %v886, 23
        %v888 = vsub.s32 %v887, 127
        %v889 = vand.u32 2147483647, %v727
        %v890 = vand.u32 %v889, 8388607
        %v891 = vor.u32 %v890, 8388608
        %v892 = vsub.s32 0, %v891
        %v893 = vadd.s32 %v888, 1
        %vm894 = vcmp.gt.s32.totalorder %v893, 0
        %v895 = vsel %vm894, %v893, 0
        %v896 = vshrl.u32 %v895, 5
        %v897 = vand.u32 %v895, 31
        %v898 = vsub.s32 32, %v897
        %v899 = vshrl.u32 683565275, %v898
        %v900 = vshll.u32 683565275, %v897
        %v901 = vshrl.u32 2475754826, %v898
        %v902 = vor.u32 %v900, %v901
        %v903 = vshll.u32 2475754826, %v897
        %v904 = vshrl.u32 2131351028, %v898
        %v905 = vor.u32 %v903, %v904
        %v906 = vshll.u32 2131351028, %v897
        %v907 = vshrl.u32 2102212464, %v898
        %v908 = vor.u32 %v906, %v907
        %v909 = vshll.u32 2102212464, %v897
        %v910 = vshrl.u32 920167782, %v898
        %v911 = vor.u32 %v909, %v910
        %v912 = vshll.u32 920167782, %v897
        %v913 = vshrl.u32 1326507024, %v898
        %v914 = vor.u32 %v912, %v913
        %vm915 = vcmp.lt.s32.totalorder %v896, 1
        %vm916 = vcmp.lt.s32.totalorder %v896, 2
        %vm917 = vcmp.lt.s32.totalorder %v896, 3
        %vm918 = vcmp.lt.s32.totalorder %v896, 4
        %v919 = vsel %vm915, %v899, %v902
        %v920 = vsel %vm918, %v908, 2102212464
        %v921 = vsel %vm917, %v905, %v920
        %v922 = vsel %vm916, %v919, %v921
        %v923 = vsel %vm915, %v902, %v905
        %v924 = vsel %vm918, %v911, 920167782
        %v925 = vsel %vm917, %v908, %v924
        %v926 = vsel %vm916, %v923, %v925
        %v927 = vsel %vm915, %v905, %v908
        %v928 = vsel %vm918, %v914, 1326507024
        %v929 = vsel %vm917, %v911, %v928
        %v930 = vsel %vm916, %v927, %v929
        %v931 = vshll.u32 %v891, 8
        %v932 = vand.u32 %v931, 65535
        %v933 = vshrl.u32 %v931, 16
        %v934 = vand.u32 %v930, 65535
        %v935 = vshrl.u32 %v930, 16
        %v936 = vmul.u32 %v932, %v934
        %v937 = vmul.u32 %v932, %v935
        %v938 = vmul.u32 %v933, %v934
        %v939 = vmul.u32 %v933, %v935
        %v940 = vshll.u32 %v937, 16
        %v941 = vshrl.u32 %v937, 16
        %v942 = vshll.u32 %v938, 16
        %v943 = vshrl.u32 %v938, 16
        %vm944 = vc.u32 %v936, %v940
        %v945 = vsel %vm944, 1, 0
        %v946 = vadd.s32 %v936, %v940
        %v947 = vadd.s32 %v939, %v945
        %vm948 = vc.u32 %v946, %v942
        %v949 = vsel %vm948, 1, 0
        %v950 = vadd.s32 %v946, %v942
        %v951 = vadd.s32 %v947, %v949
        %v952 = vadd.s32 %v951, %v941
        %v953 = vadd.s32 %v952, %v943
        %v954 = vand.u32 %v931, 65535
        %v955 = vshrl.u32 %v931, 16
        %v956 = vand.u32 %v926, 65535
        %v957 = vshrl.u32 %v926, 16
        %v958 = vmul.u32 %v954, %v956
        %v959 = vmul.u32 %v954, %v957
        %v960 = vmul.u32 %v955, %v956
        %v961 = vmul.u32 %v955, %v957
        %v962 = vshll.u32 %v959, 16
        %v963 = vshrl.u32 %v959, 16
        %v964 = vshll.u32 %v960, 16
        %v965 = vshrl.u32 %v960, 16
        %vm966 = vc.u32 %v958, %v962
        %v967 = vsel %vm966, 1, 0
        %v968 = vadd.s32 %v958, %v962
        %v969 = vadd.s32 %v961, %v967
        %vm970 = vc.u32 %v968, %v964
        %v971 = vsel %vm970, 1, 0
        %v972 = vadd.s32 %v968, %v964
        %v973 = vadd.s32 %v969, %v971
        %v974 = vadd.s32 %v973, %v963
        %v975 = vadd.s32 %v974, %v965
        %v976 = vmul.u32 %v931, %v922
        %v977 = vadd.s32 %v953, %v972
        %vm978 = vc.u32 %v953, %v972
        %v979 = vadd.s32 %v975, 1
        %v980 = vsel %vm978, %v979, %v975
        %v981 = vadd.s32 %v976, %v980
        %v982 = vadd.s32 %v981, 536870912
        %v983 = vshrl.u32 %v982, 30
        %v984 = vshll.u32 %v983, 30
        %v985 = vsub.s32 %v981, %v984
        %vm986 = vcmp.lt.s32.totalorder %v985, 0
        %v987 = vsub.s32 0, %v985
        %v988 = vsel %vm986, %v987, %v985
        %v989 = vclz %v988
        %v990 = vsub.s32 %v989, 2
        %vm991 = vcmp.gt.s32.totalorder 0, %v990
        %v992 = vsel %vm991, 0, %v990
        %v993 = vsub.s32 32, %v992
        %v994 = vshll.u32 %v985, %v992
        %v995 = vshrl.u32 %v977, %v993
        %v996 = vor.u32 %v994, %v995
        %v997 = vsub.s32 4294967266, %v992
        %v998 = vadd.s32 %v997, 127
        %v999 = vshll.u32 %v998, 23
        %v1000 = vor.u32 4788187, %v999
        %v1001 = vand.u32 2147483647, %v1000
        %v1003 = vcvt.s32.f32 %v996
        %v1004 = vmul.f32 %v1003, %v1001
        %v1005 = vxor.u32 %v1004, 2147483648
        %v1006 = vsel %vm885, %v1005, %v1004
        %v1007 = vsub.s32 4, %v983
        %v1008 = vsel %vm885, %v1007, %v983
        %v1009 = vsel %vm884, %v727, %v1006
        %v1010 = vsel %vm884, 0, %v1008
        %v1011 = vmul.f32 %v1009, %v1009
        %v1012 = vmul.f32 %v1011, -0.001358992
        %v1013 = vadd.f32 %v1012, 0.041655596
        %v1014 = vmul.f32 %v1011, %v1013
        %v1015 = vadd.f32 %v1014, -0.4999988
        %v1016 = vmul.f32 %v1011, %v1015
        %v1017 = vadd.f32 1.0, %v1016
        %v1018 = vmul.f32 %v1009, %v1009
        %v1019 = vmul.f32 %v1018, -0.00019511016
        %v1020 = vadd.f32 %v1019, 0.008332121
        %v1021 = vmul.f32 %v1018, %v1020
        %v1022 = vadd.f32 %v1021, -0.16666654
        %v1023 = vmul.f32 %v1018, %v1022
        %v1024 = vadd.f32 %v1023, 1.0
        %v1025 = vmul.f32 %v1024, %v1009
        %vm1026 = vweird.f32 %v727
        %v1027 = vand.u32 %v1010, 3
        %vm1028 = vcmp.lt.s32.totalorder %v1027, 2
        %vm1029 = vcmp.eq.s32.totalorder %v1027, 0
        %v1030 = vxor.u32 %v1025, 2147483648
        %v1031 = vsel %vm1029, %v1017, %v1030
        %vm1032 = vcmp.eq.s32.totalorder %v1027, 2
        %v1033 = vxor.u32 %v1017, 2147483648
        %v1034 = vsel %vm1032, %v1033, %v1025
        %v1035 = vsel %vm1028, %v1031, %v1034
        %v1036 = vsel %vm1026, nan, %v1035
        %v1037 = vmul.f32 %v547, %v882
        %v1038 = vmul.f32 %v567, %v1036
        %v1039 = vadd.f32 %v1037, 2e-08
        %v1040 = vadd.f32 %v1038, 2e-08
        %1041 = vst [vmem:[%s396] sm:$0xff] %v1039
        %1042 = vst [vmem:[%s396 + $0x8] sm:$0xff] %v1040
        %v1043 = vand.u32 2147483647, %v707
        %vm1044 = vcmp.le.f32.partialorder %v1043, 0.7853982
        %vm1045 = vcmp.lt.s32.totalorder %v707, 0
        %v1046 = vand.u32 %v707, 2139095040
        %v1047 = vshrl.u32 %v1046, 23
        %v1048 = vsub.s32 %v1047, 127
        %v1049 = vand.u32 2147483647, %v707
        %v1050 = vand.u32 %v1049, 8388607
        %v1051 = vor.u32 %v1050, 8388608
        %v1052 = vsub.s32 0, %v1051
        %v1053 = vadd.s32 %v1048, 1
        %vm1054 = vcmp.gt.s32.totalorder %v1053, 0
        %v1055 = vsel %vm1054, %v1053, 0
        %v1056 = vshrl.u32 %v1055, 5
        %v1057 = vand.u32 %v1055, 31
        %v1058 = vsub.s32 32, %v1057
        %v1059 = vshrl.u32 683565275, %v1058
        %v1060 = vshll.u32 683565275, %v1057
        %v1061 = vshrl.u32 2475754826, %v1058
        %v1062 = vor.u32 %v1060, %v1061
        %v1063 = vshll.u32 2475754826, %v1057
        %v1064 = vshrl.u32 2131351028, %v1058
        %v1065 = vor.u32 %v1063, %v1064
        %v1066 = vshll.u32 2131351028, %v1057
        %v1067 = vshrl.u32 2102212464, %v1058
        %v1068 = vor.u32 %v1066, %v1067
        %v1069 = vshll.u32 2102212464, %v1057
        %v1070 = vshrl.u32 920167782, %v1058
        %v1071 = vor.u32 %v1069, %v1070
        %v1072 = vshll.u32 920167782, %v1057
        %v1073 = vshrl.u32 1326507024, %v1058
        %v1074 = vor.u32 %v1072, %v1073
        %vm1075 = vcmp.lt.s32.totalorder %v1056, 1
        %vm1076 = vcmp.lt.s32.totalorder %v1056, 2
        %vm1077 = vcmp.lt.s32.totalorder %v1056, 3
        %vm1078 = vcmp.lt.s32.totalorder %v1056, 4
        %v1079 = vsel %vm1075, %v1059, %v1062
        %v1080 = vsel %vm1078, %v1068, 2102212464
        %v1081 = vsel %vm1077, %v1065, %v1080
        %v1082 = vsel %vm1076, %v1079, %v1081
        %v1083 = vsel %vm1075, %v1062, %v1065
        %v1084 = vsel %vm1078, %v1071, 920167782
        %v1085 = vsel %vm1077, %v1068, %v1084
        %v1086 = vsel %vm1076, %v1083, %v1085
        %v1087 = vsel %vm1075, %v1065, %v1068
        %v1088 = vsel %vm1078, %v1074, 1326507024
        %v1089 = vsel %vm1077, %v1071, %v1088
        %v1090 = vsel %vm1076, %v1087, %v1089
        %v1091 = vshll.u32 %v1051, 8
        %v1092 = vand.u32 %v1091, 65535
        %v1093 = vshrl.u32 %v1091, 16
        %v1094 = vand.u32 %v1090, 65535
        %v1095 = vshrl.u32 %v1090, 16
        %v1096 = vmul.u32 %v1092, %v1094
        %v1097 = vmul.u32 %v1092, %v1095
        %v1098 = vmul.u32 %v1093, %v1094
        %v1099 = vmul.u32 %v1093, %v1095
        %v1100 = vshll.u32 %v1097, 16
        %v1101 = vshrl.u32 %v1097, 16
        %v1102 = vshll.u32 %v1098, 16
        %v1103 = vshrl.u32 %v1098, 16
        %vm1104 = vc.u32 %v1096, %v1100
        %v1105 = vsel %vm1104, 1, 0
        %v1106 = vadd.s32 %v1096, %v1100
        %v1107 = vadd.s32 %v1099, %v1105
        %vm1108 = vc.u32 %v1106, %v1102
        %v1109 = vsel %vm1108, 1, 0
        %v1110 = vadd.s32 %v1106, %v1102
        %v1111 = vadd.s32 %v1107, %v1109
        %v1112 = vadd.s32 %v1111, %v1101
        %v1113 = vadd.s32 %v1112, %v1103
        %v1114 = vand.u32 %v1091, 65535
        %v1115 = vshrl.u32 %v1091, 16
        %v1116 = vand.u32 %v1086, 65535
        %v1117 = vshrl.u32 %v1086, 16
        %v1118 = vmul.u32 %v1114, %v1116
        %v1119 = vmul.u32 %v1114, %v1117
        %v1120 = vmul.u32 %v1115, %v1116
        %v1121 = vmul.u32 %v1115, %v1117
        %v1122 = vshll.u32 %v1119, 16
        %v1123 = vshrl.u32 %v1119, 16
        %v1124 = vshll.u32 %v1120, 16
        %v1125 = vshrl.u32 %v1120, 16
        %vm1126 = vc.u32 %v1118, %v1122
        %v1127 = vsel %vm1126, 1, 0
        %v1128 = vadd.s32 %v1118, %v1122
        %v1129 = vadd.s32 %v1121, %v1127
        %vm1130 = vc.u32 %v1128, %v1124
        %v1131 = vsel %vm1130, 1, 0
        %v1132 = vadd.s32 %v1128, %v1124
        %v1133 = vadd.s32 %v1129, %v1131
        %v1134 = vadd.s32 %v1133, %v1123
        %v1135 = vadd.s32 %v1134, %v1125
        %v1136 = vmul.u32 %v1091, %v1082
        %v1137 = vadd.s32 %v1113, %v1132
        %vm1138 = vc.u32 %v1113, %v1132
        %v1139 = vadd.s32 %v1135, 1
        %v1140 = vsel %vm1138, %v1139, %v1135
        %v1141 = vadd.s32 %v1136, %v1140
        %v1142 = vadd.s32 %v1141, 536870912
        %v1143 = vshrl.u32 %v1142, 30
        %v1144 = vshll.u32 %v1143, 30
        %v1145 = vsub.s32 %v1141, %v1144
        %vm1146 = vcmp.lt.s32.totalorder %v1145, 0
        %v1147 = vsub.s32 0, %v1145
        %v1148 = vsel %vm1146, %v1147, %v1145
        %v1149 = vclz %v1148
        %v1150 = vsub.s32 %v1149, 2
        %vm1151 = vcmp.gt.s32.totalorder 0, %v1150
        %v1152 = vsel %vm1151, 0, %v1150
        %v1153 = vsub.s32 32, %v1152
        %v1154 = vshll.u32 %v1145, %v1152
        %v1155 = vshrl.u32 %v1137, %v1153
        %v1156 = vor.u32 %v1154, %v1155
        %v1157 = vsub.s32 4294967266, %v1152
        %v1158 = vadd.s32 %v1157, 127
        %v1159 = vshll.u32 %v1158, 23
        %v1160 = vor.u32 4788187, %v1159
        %v1161 = vand.u32 2147483647, %v1160
        %v1163 = vcvt.s32.f32 %v1156
        %v1164 = vmul.f32 %v1163, %v1161
        %v1165 = vxor.u32 %v1164, 2147483648
        %v1166 = vsel %vm1045, %v1165, %v1164
        %v1167 = vsub.s32 4, %v1143
        %v1168 = vsel %vm1045, %v1167, %v1143
        %v1169 = vsel %vm1044, %v707, %v1166
        %v1170 = vsel %vm1044, 0, %v1168
        %v1171 = vmul.f32 %v1169, %v1169
        %v1172 = vmul.f32 %v1171, -0.001358992
        %v1173 = vadd.f32 %v1172, 0.041655596
        %v1174 = vmul.f32 %v1171, %v1173
        %v1175 = vadd.f32 %v1174, -0.4999988
        %v1176 = vmul.f32 %v1171, %v1175
        %v1177 = vadd.f32 1.0, %v1176
        %v1178 = vmul.f32 %v1169, %v1169
        %v1179 = vmul.f32 %v1178, -0.00019511016
        %v1180 = vadd.f32 %v1179, 0.008332121
        %v1181 = vmul.f32 %v1178, %v1180
        %v1182 = vadd.f32 %v1181, -0.16666654
        %v1183 = vmul.f32 %v1178, %v1182
        %v1184 = vadd.f32 %v1183, 1.0
        %v1185 = vmul.f32 %v1184, %v1169
        %vm1186 = vweird.f32 %v707
        %v1187 = vadd.s32 %v1170, 3
        %v1188 = vand.u32 %v1187, 3
        %vm1189 = vcmp.lt.s32.totalorder %v1188, 2
        %vm1190 = vcmp.eq.s32.totalorder %v1188, 0
        %v1191 = vxor.u32 %v1185, 2147483648
        %v1192 = vsel %vm1190, %v1177, %v1191
        %vm1193 = vcmp.eq.s32.totalorder %v1188, 2
        %v1194 = vxor.u32 %v1177, 2147483648
        %v1195 = vsel %vm1193, %v1194, %v1185
        %v1196 = vsel %vm1189, %v1192, %v1195
        %v1197 = vsel %vm1186, nan, %v1196
        %v1198 = vand.u32 2147483647, %v727
        %vm1199 = vcmp.le.f32.partialorder %v1198, 0.7853982
        %vm1200 = vcmp.lt.s32.totalorder %v727, 0
        %v1201 = vand.u32 %v727, 2139095040
        %v1202 = vshrl.u32 %v1201, 23
        %v1203 = vsub.s32 %v1202, 127
        %v1204 = vand.u32 2147483647, %v727
        %v1205 = vand.u32 %v1204, 8388607
        %v1206 = vor.u32 %v1205, 8388608
        %v1207 = vsub.s32 0, %v1206
        %v1208 = vadd.s32 %v1203, 1
        %vm1209 = vcmp.gt.s32.totalorder %v1208, 0
        %v1210 = vsel %vm1209, %v1208, 0
        %v1211 = vshrl.u32 %v1210, 5
        %v1212 = vand.u32 %v1210, 31
        %v1213 = vsub.s32 32, %v1212
        %v1214 = vshrl.u32 683565275, %v1213
        %v1215 = vshll.u32 683565275, %v1212
        %v1216 = vshrl.u32 2475754826, %v1213
        %v1217 = vor.u32 %v1215, %v1216
        %v1218 = vshll.u32 2475754826, %v1212
        %v1219 = vshrl.u32 2131351028, %v1213
        %v1220 = vor.u32 %v1218, %v1219
        %v1221 = vshll.u32 2131351028, %v1212
        %v1222 = vshrl.u32 2102212464, %v1213
        %v1223 = vor.u32 %v1221, %v1222
        %v1224 = vshll.u32 2102212464, %v1212
        %v1225 = vshrl.u32 920167782, %v1213
        %v1226 = vor.u32 %v1224, %v1225
        %v1227 = vshll.u32 920167782, %v1212
        %v1228 = vshrl.u32 1326507024, %v1213
        %v1229 = vor.u32 %v1227, %v1228
        %vm1230 = vcmp.lt.s32.totalorder %v1211, 1
        %vm1231 = vcmp.lt.s32.totalorder %v1211, 2
        %vm1232 = vcmp.lt.s32.totalorder %v1211, 3
        %vm1233 = vcmp.lt.s32.totalorder %v1211, 4
        %v1234 = vsel %vm1230, %v1214, %v1217
        %v1235 = vsel %vm1233, %v1223, 2102212464
        %v1236 = vsel %vm1232, %v1220, %v1235
        %v1237 = vsel %vm1231, %v1234, %v1236
        %v1238 = vsel %vm1230, %v1217, %v1220
        %v1239 = vsel %vm1233, %v1226, 920167782
        %v1240 = vsel %vm1232, %v1223, %v1239
        %v1241 = vsel %vm1231, %v1238, %v1240
        %v1242 = vsel %vm1230, %v1220, %v1223
        %v1243 = vsel %vm1233, %v1229, 1326507024
        %v1244 = vsel %vm1232, %v1226, %v1243
        %v1245 = vsel %vm1231, %v1242, %v1244
        %v1246 = vshll.u32 %v1206, 8
        %v1247 = vand.u32 %v1246, 65535
        %v1248 = vshrl.u32 %v1246, 16
        %v1249 = vand.u32 %v1245, 65535
        %v1250 = vshrl.u32 %v1245, 16
        %v1251 = vmul.u32 %v1247, %v1249
        %v1252 = vmul.u32 %v1247, %v1250
        %v1253 = vmul.u32 %v1248, %v1249
        %v1254 = vmul.u32 %v1248, %v1250
        %v1255 = vshll.u32 %v1252, 16
        %v1256 = vshrl.u32 %v1252, 16
        %v1257 = vshll.u32 %v1253, 16
        %v1258 = vshrl.u32 %v1253, 16
        %vm1259 = vc.u32 %v1251, %v1255
        %v1260 = vsel %vm1259, 1, 0
        %v1261 = vadd.s32 %v1251, %v1255
        %v1262 = vadd.s32 %v1254, %v1260
        %vm1263 = vc.u32 %v1261, %v1257
        %v1264 = vsel %vm1263, 1, 0
        %v1265 = vadd.s32 %v1261, %v1257
        %v1266 = vadd.s32 %v1262, %v1264
        %v1267 = vadd.s32 %v1266, %v1256
        %v1268 = vadd.s32 %v1267, %v1258
        %v1269 = vand.u32 %v1246, 65535
        %v1270 = vshrl.u32 %v1246, 16
        %v1271 = vand.u32 %v1241, 65535
        %v1272 = vshrl.u32 %v1241, 16
        %v1273 = vmul.u32 %v1269, %v1271
        %v1274 = vmul.u32 %v1269, %v1272
        %v1275 = vmul.u32 %v1270, %v1271
        %v1276 = vmul.u32 %v1270, %v1272
        %v1277 = vshll.u32 %v1274, 16
        %v1278 = vshrl.u32 %v1274, 16
        %v1279 = vshll.u32 %v1275, 16
        %v1280 = vshrl.u32 %v1275, 16
        %vm1281 = vc.u32 %v1273, %v1277
        %v1282 = vsel %vm1281, 1, 0
        %v1283 = vadd.s32 %v1273, %v1277
        %v1284 = vadd.s32 %v1276, %v1282
        %vm1285 = vc.u32 %v1283, %v1279
        %v1286 = vsel %vm1285, 1, 0
        %v1287 = vadd.s32 %v1283, %v1279
        %v1288 = vadd.s32 %v1284, %v1286
        %v1289 = vadd.s32 %v1288, %v1278
        %v1290 = vadd.s32 %v1289, %v1280
        %v1291 = vmul.u32 %v1246, %v1237
        %v1292 = vadd.s32 %v1268, %v1287
        %vm1293 = vc.u32 %v1268, %v1287
        %v1294 = vadd.s32 %v1290, 1
        %v1295 = vsel %vm1293, %v1294, %v1290
        %v1296 = vadd.s32 %v1291, %v1295
        %v1297 = vadd.s32 %v1296, 536870912
        %v1298 = vshrl.u32 %v1297, 30
        %v1299 = vshll.u32 %v1298, 30
        %v1300 = vsub.s32 %v1296, %v1299
        %vm1301 = vcmp.lt.s32.totalorder %v1300, 0
        %v1302 = vsub.s32 0, %v1300
        %v1303 = vsel %vm1301, %v1302, %v1300
        %v1304 = vclz %v1303
        %v1305 = vsub.s32 %v1304, 2
        %vm1306 = vcmp.gt.s32.totalorder 0, %v1305
        %v1307 = vsel %vm1306, 0, %v1305
        %v1308 = vsub.s32 32, %v1307
        %v1309 = vshll.u32 %v1300, %v1307
        %v1310 = vshrl.u32 %v1292, %v1308
        %v1311 = vor.u32 %v1309, %v1310
        %v1312 = vsub.s32 4294967266, %v1307
        %v1313 = vadd.s32 %v1312, 127
        %v1314 = vshll.u32 %v1313, 23
        %v1315 = vor.u32 4788187, %v1314
        %v1316 = vand.u32 2147483647, %v1315
        %v1318 = vcvt.s32.f32 %v1311
        %v1319 = vmul.f32 %v1318, %v1316
        %v1320 = vxor.u32 %v1319, 2147483648
        %v1321 = vsel %vm1200, %v1320, %v1319
        %v1322 = vsub.s32 4, %v1298
        %v1323 = vsel %vm1200, %v1322, %v1298
        %v1324 = vsel %vm1199, %v727, %v1321
        %v1325 = vsel %vm1199, 0, %v1323
        %v1326 = vmul.f32 %v1324, %v1324
        %v1327 = vmul.f32 %v1326, -0.001358992
        %v1328 = vadd.f32 %v1327, 0.041655596
        %v1329 = vmul.f32 %v1326, %v1328
        %v1330 = vadd.f32 %v1329, -0.4999988
        %v1331 = vmul.f32 %v1326, %v1330
        %v1332 = vadd.f32 1.0, %v1331
        %v1333 = vmul.f32 %v1324, %v1324
        %v1334 = vmul.f32 %v1333, -0.00019511016
        %v1335 = vadd.f32 %v1334, 0.008332121
        %v1336 = vmul.f32 %v1333, %v1335
        %v1337 = vadd.f32 %v1336, -0.16666654
        %v1338 = vmul.f32 %v1333, %v1337
        %v1339 = vadd.f32 %v1338, 1.0
        %v1340 = vmul.f32 %v1339, %v1324
        %vm1341 = vweird.f32 %v727
        %v1342 = vadd.s32 %v1325, 3
        %v1343 = vand.u32 %v1342, 3
        %vm1344 = vcmp.lt.s32.totalorder %v1343, 2
        %vm1345 = vcmp.eq.s32.totalorder %v1343, 0
        %v1346 = vxor.u32 %v1340, 2147483648
        %v1347 = vsel %vm1345, %v1332, %v1346
        %vm1348 = vcmp.eq.s32.totalorder %v1343, 2
        %v1349 = vxor.u32 %v1332, 2147483648
        %v1350 = vsel %vm1348, %v1349, %v1340
        %v1351 = vsel %vm1344, %v1347, %v1350
        %v1352 = vsel %vm1341, nan, %v1351
        %v1353 = vmul.f32 %v547, %v1197
        %v1354 = vmul.f32 %v567, %v1352
        %v1355 = vadd.f32 %v1353, 1e-08
        %v1356 = vadd.f32 %v1354, 1e-08
        %1357 = vst [vmem:[%s406] sm:$0xff] %v1355
        %1358 = vst [vmem:[%s406 + $0x8] sm:$0xff] %v1356
        %s1359 = smul.u32 2, %s24
        %p1360 = scmp.lt.s32.totalorder %s23, 1
        %s1361 = scalar_select %p1360, %s23, 1
        %p1362 = scmp.lt.s32.totalorder %s1359, 1
        %s1363 = scalar_select %p1362, %s1359, 1
        %s1364 = smul.addr %s1361, 2
        %s1365 = sadd.s32 %s1363, %s1364
        %s1366 = smul.addr %s1365, 8
        %s1367 = scalar_lea.vmem %s6, %s1366
        %s1368 = smul.u32 2, %s24
        %p1369 = scmp.lt.s32.totalorder %s23, 1
        %s1370 = scalar_select %p1369, %s23, 1
        %p1371 = scmp.lt.s32.totalorder %s1368, 1
        %s1372 = scalar_select %p1371, %s1368, 1
        %s1373 = smul.addr %s1370, 2
        %s1374 = sadd.s32 %s1372, %s1373
        %s1375 = smul.addr %s1374, 8
        %s1376 = scalar_lea.vmem %s7, %s1375
        // Predicated region
        $region91: #{fre_layer_forward.4} parent=81 // pred_check
          %p1377 = pneg %p191
        $region92: #{fre_layer_forward.4} parent=81 // pred_check_branch
          %1379 = sbr.rel (%p1377) target = $region94
        $region93: #{fre_layer_forward.4} parent=81 // pred_region
          %s1380 = smul.u32 2, %s24
        $region94: #{fre_layer_forward.4} parent=81 // pred_fallthru
          _
        // Predicated region
        $region95: #{fre_layer_forward.4} parent=81 // pred_check
          %p1381 = pneg %p219
        $region96: #{fre_layer_forward.4} parent=81 // pred_check_branch
          %1383 = sbr.rel (%p1381) target = $region98
        $region97: #{fre_layer_forward.4} parent=81 // pred_region
          %s1384 = smul.u32 2, %s24
        $region98: #{fre_layer_forward.4} parent=81 // pred_fallthru
          _
      $region82: #{fre_layer_forward.4} parent=5 // pred_fallthru
        _
      %p1385 = scmp.le.s32.totalorder 2, %s14
      // Predicated region
      $region99: #{fre_layer_forward.4} parent=5 // pred_check
        %p1386 = pneg %p1385
      $region100: #{fre_layer_forward.4} parent=5 // pred_check_branch
        %1388 = sbr.rel (%p1386) target = $region102
      $region101: #{fre_layer_forward.4} parent=5 // pred_region
        %s1389 = ssub.s32 %s14, 2
        // Predicated region
        $region103: #{fre_layer_forward.4} parent=101 // pred_check
          %p1390 = pneg %p197
        $region104: #{fre_layer_forward.4} parent=101 // pred_check_branch
          %1392 = sbr.rel (%p1390) target = $region106
        $region105: #{fre_layer_forward.4} parent=101 // pred_region
          %s1393 = smul.u32 2, %s26
          %p1394 = scmp.lt.s32.totalorder %s25, 1
          %s1395 = scalar_select %p1394, %s25, 1
          %p1396 = scmp.lt.s32.totalorder %s1393, 1
          %s1397 = scalar_select %p1396, %s1393, 1
          %s1398 = smul.addr %s1395, 2
          %s1399 = sadd.s32 %s1397, %s1398
          %s1400 = smul.addr %s1399, 8
          %s1401 = scalar_lea.vmem %s6, %s1400
        $region106: #{fre_layer_forward.4} parent=101 // pred_fallthru
          _
        // Predicated region
        $region107: #{fre_layer_forward.4} parent=101 // pred_check
          %p1402 = pneg %p225
        $region108: #{fre_layer_forward.4} parent=101 // pred_check_branch
          %1404 = sbr.rel (%p1402) target = $region110
        $region109: #{fre_layer_forward.4} parent=101 // pred_region
          %s1405 = smul.u32 2, %s26
          %p1406 = scmp.lt.s32.totalorder %s25, 1
          %s1407 = scalar_select %p1406, %s25, 1
          %p1408 = scmp.lt.s32.totalorder %s1405, 1
          %s1409 = scalar_select %p1408, %s1405, 1
          %s1410 = smul.addr %s1407, 2
          %s1411 = sadd.s32 %s1409, %s1410
          %s1412 = smul.addr %s1411, 8
          %s1413 = scalar_lea.vmem %s7, %s1412
        $region110: #{fre_layer_forward.4} parent=101 // pred_fallthru
          _
      $region102: #{fre_layer_forward.4} parent=5 // pred_fallthru
        _
    $region6: #{fre_layer_forward.4} parent=1 // loop_footer
      %s18 = sadd.s32 1, %s14
    $region7: #{fre_layer_forward.4} parent=1 // loop_footer_branch
      %13 = sbr.rel target = $region3
    $region8: #{fre_layer_forward.4} parent=1 // loop_exit
      _

// kernel: reverse.0
$region0: #{reverse.0}
  %s0 = inlined_call_operand.vmem [shape: f32[2,8,16,7], index: 0, kind: input, shape index: {}]
  %s1 = inlined_call_operand.vmem [shape: f32[2,8,16,7], index: 1, kind: output, shape index: {}]
  $region1: #{reverse.0} parent=0
    #allocation0 [shape = 'u8[131072]{0}', space=vmem, size = 0x20000, scoped, tag = 'operand span for operand 0']
    #allocation1 [shape = 'u8[65536]{0}', space=vmem, size = 0x10000, scoped, tag = 'operand span for operand 1']
    %s2 = scalar_lea.vmem [#allocation0], 8
    // Predicated region
    $region2: #{reverse.0} parent=1 // pred_check
      _
    $region3: #{reverse.0} parent=1 // pred_check_branch
      %4 = sbr.rel (0) target = $region5
    $region4: #{reverse.0} parent=1 // pred_region
      // Predicated region
      $region6: #{reverse.0} parent=4 // pred_check
        _
      $region7: #{reverse.0} parent=4 // pred_check_branch
        %6 = sbr.rel (0) target = $region9
      $region8: #{reverse.0} parent=4 // pred_region
        // Predicated region
        $region21: #{reverse.0} parent=8 // pred_check
          _
        $region22: #{reverse.0} parent=8 // pred_check_branch
          %52 = sbr.rel (0) target = $region24
        $region23: #{reverse.0} parent=8 // pred_region
          loop: start=0, step=1, limit=1
          $region25: #{reverse.0} parent=23 // loop_pre_header
            _
          $region26: #{reverse.0} parent=23 // loop_header
            %s54 = sphi 0, %s58
            %p55 = scmp.ge.s32.totalorder %s54, 1
            %s59 = sphi %s0, %s0
            %s60 = sphi %s2, %s2
          $region27: #{reverse.0} parent=23 // loop_header_branch
            %57 = sbr.rel (%p55) target = $region31
          $region28: #{reverse.0} parent=23 // loop_body
            %v61 = vld [vmem:[%s59] sm:$0xff]
            %62 = vst [vmem:[%s60] sm:$0xff] %v61
            %v63 = vld [vmem:[%s59 + $0x8] sm:$0xff]
            %64 = vst [vmem:[%s60 + $0x10] sm:$0xff] %v63
            %v65 = vld [vmem:[%s59 + $0x10] sm:$0xff]
            %66 = vst [vmem:[%s60 + $0x20] sm:$0xff] %v65
            %v67 = vld [vmem:[%s59 + $0x18] sm:$0xff]
            %68 = vst [vmem:[%s60 + $0x30] sm:$0xff] %v67
            %v69 = vld [vmem:[%s59 + $0x20] sm:$0xff]
            %70 = vst [vmem:[%s60 + $0x40] sm:$0xff] %v69
            %v71 = vld [vmem:[%s59 + $0x28] sm:$0xff]
            %72 = vst [vmem:[%s60 + $0x50] sm:$0xff] %v71
            %v73 = vld [vmem:[%s59 + $0x30] sm:$0xff]
            %74 = vst [vmem:[%s60 + $0x60] sm:$0xff] %v73
            %v75 = vld [vmem:[%s59 + $0x38] sm:$0xff]
            %76 = vst [vmem:[%s60 + $0x70] sm:$0xff] %v75
            %v77 = vld [vmem:[%s59 + $0x40] sm:$0xff]
            %78 = vst [vmem:[%s60 + $0x80] sm:$0xff] %v77
            %v79 = vld [vmem:[%s59 + $0x48] sm:$0xff]
            %80 = vst [vmem:[%s60 + $0x90] sm:$0xff] %v79
            %v81 = vld [vmem:[%s59 + $0x50] sm:$0xff]
            %82 = vst [vmem:[%s60 + $0xa0] sm:$0xff] %v81
            %v83 = vld [vmem:[%s59 + $0x58] sm:$0xff]
            %84 = vst [vmem:[%s60 + $0xb0] sm:$0xff] %v83
            %v85 = vld [vmem:[%s59 + $0x60] sm:$0xff]
            %86 = vst [vmem:[%s60 + $0xc0] sm:$0xff] %v85
            %v87 = vld [vmem:[%s59 + $0x68] sm:$0xff]
            %88 = vst [vmem:[%s60 + $0xd0] sm:$0xff] %v87
            %v89 = vld [vmem:[%s59 + $0x70] sm:$0xff]
            %90 = vst [vmem:[%s60 + $0xe0] sm:$0xff] %v89
            %v91 = vld [vmem:[%s59 + $0x78] sm:$0xff]
            %92 = vst [vmem:[%s60 + $0xf0] sm:$0xff] %v91
          $region29: #{reverse.0} parent=23 // loop_footer
            %s58 = sadd.s32 1, %s54
          $region30: #{reverse.0} parent=23 // loop_footer_branch
            %53 = sbr.rel target = $region26
          $region31: #{reverse.0} parent=23 // loop_exit
            _
        $region24: #{reverse.0} parent=8 // pred_fallthru
          _
        // Predicated region
        $region32: #{reverse.0} parent=8 // pred_check
          _
        $region33: #{reverse.0} parent=8 // pred_check_branch
          %94 = sbr.rel target = $region35
        $region34: #{reverse.0} parent=8 // pred_region
          _
        $region35: #{reverse.0} parent=8 // pred_fallthru
          _
      $region9: #{reverse.0} parent=4 // pred_fallthru
        _
      // Predicated region
      $region10: #{reverse.0} parent=4 // pred_check
        _
      $region11: #{reverse.0} parent=4 // pred_check_branch
        %8 = sbr.rel target = $region13
      $region12: #{reverse.0} parent=4 // pred_region
        %s10 = ssub.s32 256, 1
        loop: start=0, step=1, limit=1
        $region14: #{reverse.0} parent=12 // loop_pre_header
          _
        $region15: #{reverse.0} parent=12 // loop_header
          %s12 = sphi 0, %s16
          %p13 = scmp.ge.s32.totalorder %s12, 1
          %s17 = sphi %s0, %s0
          %s18 = sphi %s2, %s2
        $region16: #{reverse.0} parent=12 // loop_header_branch
          %15 = sbr.rel (%p13) target = $region20
        $region17: #{reverse.0} parent=12 // loop_body
          %v19 = vld [vmem:[%s17] sm:%s10]
          %20 = vst [vmem:[%s18] sm:%s10] %v19
          %v21 = vld [vmem:[%s17 + $0x8] sm:%s10]
          %22 = vst [vmem:[%s18 + $0x10] sm:%s10] %v21
          %v23 = vld [vmem:[%s17 + $0x10] sm:%s10]
          %24 = vst [vmem:[%s18 + $0x20] sm:%s10] %v23
          %v25 = vld [vmem:[%s17 + $0x18] sm:%s10]
          %26 = vst [vmem:[%s18 + $0x30] sm:%s10] %v25
          %v27 = vld [vmem:[%s17 + $0x20] sm:%s10]
          %28 = vst [vmem:[%s18 + $0x40] sm:%s10] %v27
          %v29 = vld [vmem:[%s17 + $0x28] sm:%s10]
          %30 = vst [vmem:[%s18 + $0x50] sm:%s10] %v29
          %v31 = vld [vmem:[%s17 + $0x30] sm:%s10]
          %32 = vst [vmem:[%s18 + $0x60] sm:%s10] %v31
          %v33 = vld [vmem:[%s17 + $0x38] sm:%s10]
          %34 = vst [vmem:[%s18 + $0x70] sm:%s10] %v33
          %v35 = vld [vmem:[%s17 + $0x40] sm:%s10]
          %36 = vst [vmem:[%s18 + $0x80] sm:%s10] %v35
          %v37 = vld [vmem:[%s17 + $0x48] sm:%s10]
          %38 = vst [vmem:[%s18 + $0x90] sm:%s10] %v37
          %v39 = vld [vmem:[%s17 + $0x50] sm:%s10]
          %40 = vst [vmem:[%s18 + $0xa0] sm:%s10] %v39
          %v41 = vld [vmem:[%s17 + $0x58] sm:%s10]
          %42 = vst [vmem:[%s18 + $0xb0] sm:%s10] %v41
          %v43 = vld [vmem:[%s17 + $0x60] sm:%s10]
          %44 = vst [vmem:[%s18 + $0xc0] sm:%s10] %v43
          %v45 = vld [vmem:[%s17 + $0x68] sm:%s10]
          %46 = vst [vmem:[%s18 + $0xd0] sm:%s10] %v45
          %v47 = vld [vmem:[%s17 + $0x70] sm:%s10]
          %48 = vst [vmem:[%s18 + $0xe0] sm:%s10] %v47
          %v49 = vld [vmem:[%s17 + $0x78] sm:%s10]
          %50 = vst [vmem:[%s18 + $0xf0] sm:%s10] %v49
        $region18: #{reverse.0} parent=12 // loop_footer
          %s16 = sadd.s32 1, %s12
        $region19: #{reverse.0} parent=12 // loop_footer_branch
          %11 = sbr.rel target = $region15
        $region20: #{reverse.0} parent=12 // loop_exit
          _
      $region13: #{reverse.0} parent=4 // pred_fallthru
        _
    $region5: #{reverse.0} parent=1 // pred_fallthru
      _
    %95 = vnop
    %s96 = scalar_lea.vmem [#allocation0], 7
    %v97 = vld [vmem:[%s96] ss:$-1 sm:$0xff]
    %v98 = vrot.slane %v97, 1
    %99 = vst [vmem:[#allocation1] sm:$0xff] %v98
    %s100 = scalar_lea.vmem [#allocation0], 8
    %s101 = scalar_lea.vmem %s100, 7 [#allocation0]
    %v102 = vld [vmem:[%s101] ss:$-1 sm:$0xff]
    %v103 = vrot.slane %v102, 1
    %v104 = vlaneseq
    %v105 = vshrl.u32 %v104, 7
    %vm106 = vcmp.lt.s32.totalorder %v105, 7
    %107 = vst.msk [vmem:[#allocation1] sm:$0xff] %vm106, %v103
    %s108 = scalar_lea.vmem [#allocation1], 8
    %s109 = scalar_lea.vmem [#allocation0], 16
    %s110 = scalar_lea.vmem %s109, 7 [#allocation0]
    %v111 = vld [vmem:[%s110] ss:$-1 sm:$0xff]
    %v112 = vrot.slane %v111, 1
    %113 = vst [vmem:[%s108] sm:$0xff] %v112
    %s114 = scalar_lea.vmem %s109, 8 [#allocation0]
    %s115 = scalar_lea.vmem %s114, 7 [#allocation0]
    %v116 = vld [vmem:[%s115] ss:$-1 sm:$0xff]
    %v117 = vrot.slane %v116, 1
    %v118 = vlaneseq
    %v119 = vshrl.u32 %v118, 7
    %vm120 = vcmp.lt.s32.totalorder %v119, 7
    %121 = vst.msk [vmem:[%s108] sm:$0xff] %vm120, %v117
    %s122 = scalar_lea.vmem [#allocation1], 16
    %s123 = scalar_lea.vmem [#allocation0], 32
    %s124 = scalar_lea.vmem %s123, 7 [#allocation0]
    %v125 = vld [vmem:[%s124] ss:$-1 sm:$0xff]
    %v126 = vrot.slane %v125, 1
    %127 = vst [vmem:[%s122] sm:$0xff] %v126
    %s128 = scalar_lea.vmem %s123, 8 [#allocation0]
    %s129 = scalar_lea.vmem %s128, 7 [#allocation0]
    %v130 = vld [vmem:[%s129] ss:$-1 sm:$0xff]
    %v131 = vrot.slane %v130, 1
    %v132 = vlaneseq
    %v133 = vshrl.u32 %v132, 7
    %vm134 = vcmp.lt.s32.totalorder %v133, 7
    %135 = vst.msk [vmem:[%s122] sm:$0xff] %vm134, %v131
    %s136 = scalar_lea.vmem [#allocation1], 24
    %s137 = scalar_lea.vmem [#allocation0], 48
    %s138 = scalar_lea.vmem %s137, 7 [#allocation0]
    %v139 = vld [vmem:[%s138] ss:$-1 sm:$0xff]
    %v140 = vrot.slane %v139, 1
    %141 = vst [vmem:[%s136] sm:$0xff] %v140
    %s142 = scalar_lea.vmem %s137, 8 [#allocation0]
    %s143 = scalar_lea.vmem %s142, 7 [#allocation0]
    %v144 = vld [vmem:[%s143] ss:$-1 sm:$0xff]
    %v145 = vrot.slane %v144, 1
    %v146 = vlaneseq
    %v147 = vshrl.u32 %v146, 7
    %vm148 = vcmp.lt.s32.totalorder %v147, 7
    %149 = vst.msk [vmem:[%s136] sm:$0xff] %vm148, %v145
    %s150 = scalar_lea.vmem [#allocation1], 32
    %s151 = scalar_lea.vmem [#allocation0], 64
    %s152 = scalar_lea.vmem %s151, 7 [#allocation0]
    %v153 = vld [vmem:[%s152] ss:$-1 sm:$0xff]
    %v154 = vrot.slane %v153, 1
    %155 = vst [vmem:[%s150] sm:$0xff] %v154
    %s156 = scalar_lea.vmem %s151, 8 [#allocation0]
    %s157 = scalar_lea.vmem %s156, 7 [#allocation0]
    %v158 = vld [vmem:[%s157] ss:$-1 sm:$0xff]
    %v159 = vrot.slane %v158, 1
    %v160 = vlaneseq
    %v161 = vshrl.u32 %v160, 7
    %vm162 = vcmp.lt.s32.totalorder %v161, 7
    %163 = vst.msk [vmem:[%s150] sm:$0xff] %vm162, %v159
    %s164 = scalar_lea.vmem [#allocation1], 40
    %s165 = scalar_lea.vmem [#allocation0], 80
    %s166 = scalar_lea.vmem %s165, 7 [#allocation0]
    %v167 = vld [vmem:[%s166] ss:$-1 sm:$0xff]
    %v168 = vrot.slane %v167, 1
    %169 = vst [vmem:[%s164] sm:$0xff] %v168
    %s170 = scalar_lea.vmem %s165, 8 [#allocation0]
    %s171 = scalar_lea.vmem %s170, 7 [#allocation0]
    %v172 = vld [vmem:[%s171] ss:$-1 sm:$0xff]
    %v173 = vrot.slane %v172, 1
    %v174 = vlaneseq
    %v175 = vshrl.u32 %v174, 7
    %vm176 = vcmp.lt.s32.totalorder %v175, 7
    %177 = vst.msk [vmem:[%s164] sm:$0xff] %vm176, %v173
    %s178 = scalar_lea.vmem [#allocation1], 48
    %s179 = scalar_lea.vmem [#allocation0], 96
    %s180 = scalar_lea.vmem %s179, 7 [#allocation0]
    %v181 = vld [vmem:[%s180] ss:$-1 sm:$0xff]
    %v182 = vrot.slane %v181, 1
    %183 = vst [vmem:[%s178] sm:$0xff] %v182
    %s184 = scalar_lea.vmem %s179, 8 [#allocation0]
    %s185 = scalar_lea.vmem %s184, 7 [#allocation0]
    %v186 = vld [vmem:[%s185] ss:$-1 sm:$0xff]
    %v187 = vrot.slane %v186, 1
    %v188 = vlaneseq
    %v189 = vshrl.u32 %v188, 7
    %vm190 = vcmp.lt.s32.totalorder %v189, 7
    %191 = vst.msk [vmem:[%s178] sm:$0xff] %vm190, %v187
    %s192 = scalar_lea.vmem [#allocation1], 56
    %s193 = scalar_lea.vmem [#allocation0], 112
    %s194 = scalar_lea.vmem %s193, 7 [#allocation0]
    %v195 = vld [vmem:[%s194] ss:$-1 sm:$0xff]
    %v196 = vrot.slane %v195, 1
    %197 = vst [vmem:[%s192] sm:$0xff] %v196
    %s198 = scalar_lea.vmem %s193, 8 [#allocation0]
    %s199 = scalar_lea.vmem %s198, 7 [#allocation0]
    %v200 = vld [vmem:[%s199] ss:$-1 sm:$0xff]
    %v201 = vrot.slane %v200, 1
    %v202 = vlaneseq
    %v203 = vshrl.u32 %v202, 7
    %vm204 = vcmp.lt.s32.totalorder %v203, 7
    %205 = vst.msk [vmem:[%s192] sm:$0xff] %vm204, %v201
    %s206 = scalar_lea.vmem [#allocation1], 64
    %s207 = scalar_lea.vmem [#allocation0], 128
    %s208 = scalar_lea.vmem %s207, 7 [#allocation0]
    %v209 = vld [vmem:[%s208] ss:$-1 sm:$0xff]
    %v210 = vrot.slane %v209, 1
    %211 = vst [vmem:[%s206] sm:$0xff] %v210
    %s212 = scalar_lea.vmem %s207, 8 [#allocation0]
    %s213 = scalar_lea.vmem %s212, 7 [#allocation0]
    %v214 = vld [vmem:[%s213] ss:$-1 sm:$0xff]
    %v215 = vrot.slane %v214, 1
    %v216 = vlaneseq
    %v217 = vshrl.u32 %v216, 7
    %vm218 = vcmp.lt.s32.totalorder %v217, 7
    %219 = vst.msk [vmem:[%s206] sm:$0xff] %vm218, %v215
    %s220 = scalar_lea.vmem [#allocation1], 72
    %s221 = scalar_lea.vmem [#allocation0], 144
    %s222 = scalar_lea.vmem %s221, 7 [#allocation0]
    %v223 = vld [vmem:[%s222] ss:$-1 sm:$0xff]
    %v224 = vrot.slane %v223, 1
    %225 = vst [vmem:[%s220] sm:$0xff] %v224
    %s226 = scalar_lea.vmem %s221, 8 [#allocation0]
    %s227 = scalar_lea.vmem %s226, 7 [#allocation0]
    %v228 = vld [vmem:[%s227] ss:$-1 sm:$0xff]
    %v229 = vrot.slane %v228, 1
    %v230 = vlaneseq
    %v231 = vshrl.u32 %v230, 7
    %vm232 = vcmp.lt.s32.totalorder %v231, 7
    %233 = vst.msk [vmem:[%s220] sm:$0xff] %vm232, %v229
    %s234 = scalar_lea.vmem [#allocation1], 80
    %s235 = scalar_lea.vmem [#allocation0], 160
    %s236 = scalar_lea.vmem %s235, 7 [#allocation0]
    %v237 = vld [vmem:[%s236] ss:$-1 sm:$0xff]
    %v238 = vrot.slane %v237, 1
    %239 = vst [vmem:[%s234] sm:$0xff] %v238
    %s240 = scalar_lea.vmem %s235, 8 [#allocation0]
    %s241 = scalar_lea.vmem %s240, 7 [#allocation0]
    %v242 = vld [vmem:[%s241] ss:$-1 sm:$0xff]
    %v243 = vrot.slane %v242, 1
    %v244 = vlaneseq
    %v245 = vshrl.u32 %v244, 7
    %vm246 = vcmp.lt.s32.totalorder %v245, 7
    %247 = vst.msk [vmem:[%s234] sm:$0xff] %vm246, %v243
    %s248 = scalar_lea.vmem [#allocation1], 88
    %s249 = scalar_lea.vmem [#allocation0], 176
    %s250 = scalar_lea.vmem %s249, 7 [#allocation0]
    %v251 = vld [vmem:[%s250] ss:$-1 sm:$0xff]
    %v252 = vrot.slane %v251, 1
    %253 = vst [vmem:[%s248] sm:$0xff] %v252
    %s254 = scalar_lea.vmem %s249, 8 [#allocation0]
    %s255 = scalar_lea.vmem %s254, 7 [#allocation0]
    %v256 = vld [vmem:[%s255] ss:$-1 sm:$0xff]
    %v257 = vrot.slane %v256, 1
    %v258 = vlaneseq
    %v259 = vshrl.u32 %v258, 7
    %vm260 = vcmp.lt.s32.totalorder %v259, 7
    %261 = vst.msk [vmem:[%s248] sm:$0xff] %vm260, %v257
    %s262 = scalar_lea.vmem [#allocation1], 96
    %s263 = scalar_lea.vmem [#allocation0], 192
    %s264 = scalar_lea.vmem %s263, 7 [#allocation0]
    %v265 = vld [vmem:[%s264] ss:$-1 sm:$0xff]
    %v266 = vrot.slane %v265, 1
    %267 = vst [vmem:[%s262] sm:$0xff] %v266
    %s268 = scalar_lea.vmem %s263, 8 [#allocation0]
    %s269 = scalar_lea.vmem %s268, 7 [#allocation0]
    %v270 = vld [vmem:[%s269] ss:$-1 sm:$0xff]
    %v271 = vrot.slane %v270, 1
    %v272 = vlaneseq
    %v273 = vshrl.u32 %v272, 7
    %vm274 = vcmp.lt.s32.totalorder %v273, 7
    %275 = vst.msk [vmem:[%s262] sm:$0xff] %vm274, %v271
    %s276 = scalar_lea.vmem [#allocation1], 104
    %s277 = scalar_lea.vmem [#allocation0], 208
    %s278 = scalar_lea.vmem %s277, 7 [#allocation0]
    %v279 = vld [vmem:[%s278] ss:$-1 sm:$0xff]
    %v280 = vrot.slane %v279, 1
    %281 = vst [vmem:[%s276] sm:$0xff] %v280
    %s282 = scalar_lea.vmem %s277, 8 [#allocation0]
    %s283 = scalar_lea.vmem %s282, 7 [#allocation0]
    %v284 = vld [vmem:[%s283] ss:$-1 sm:$0xff]
    %v285 = vrot.slane %v284, 1
    %v286 = vlaneseq
    %v287 = vshrl.u32 %v286, 7
    %vm288 = vcmp.lt.s32.totalorder %v287, 7
    %289 = vst.msk [vmem:[%s276] sm:$0xff] %vm288, %v285
    %s290 = scalar_lea.vmem [#allocation1], 112
    %s291 = scalar_lea.vmem [#allocation0], 224
    %s292 = scalar_lea.vmem %s291, 7 [#allocation0]
    %v293 = vld [vmem:[%s292] ss:$-1 sm:$0xff]
    %v294 = vrot.slane %v293, 1
    %295 = vst [vmem:[%s290] sm:$0xff] %v294
    %s296 = scalar_lea.vmem %s291, 8 [#allocation0]
    %s297 = scalar_lea.vmem %s296, 7 [#allocation0]
    %v298 = vld [vmem:[%s297] ss:$-1 sm:$0xff]
    %v299 = vrot.slane %v298, 1
    %v300 = vlaneseq
    %v301 = vshrl.u32 %v300, 7
    %vm302 = vcmp.lt.s32.totalorder %v301, 7
    %303 = vst.msk [vmem:[%s290] sm:$0xff] %vm302, %v299
    %s304 = scalar_lea.vmem [#allocation1], 120
    %s305 = scalar_lea.vmem [#allocation0], 240
    %s306 = scalar_lea.vmem %s305, 7 [#allocation0]
    %v307 = vld [vmem:[%s306] ss:$-1 sm:$0xff]
    %v308 = vrot.slane %v307, 1
    %309 = vst [vmem:[%s304] sm:$0xff] %v308
    %s310 = scalar_lea.vmem %s305, 8 [#allocation0]
    %s311 = scalar_lea.vmem %s310, 7 [#allocation0]
    %v312 = vld [vmem:[%s311] ss:$-1 sm:$0xff]
    %v313 = vrot.slane %v312, 1
    %v314 = vlaneseq
    %v315 = vshrl.u32 %v314, 7
    %vm316 = vcmp.lt.s32.totalorder %v315, 7
    %317 = vst.msk [vmem:[%s304] sm:$0xff] %vm316, %v313
    // Predicated region
    $region36: #{reverse.0} parent=1 // pred_check
      _
    $region37: #{reverse.0} parent=1 // pred_check_branch
      %319 = sbr.rel (0) target = $region39
    $region38: #{reverse.0} parent=1 // pred_region
      // Predicated region
      $region40: #{reverse.0} parent=38 // pred_check
        _
      $region41: #{reverse.0} parent=38 // pred_check_branch
        %321 = sbr.rel (0) target = $region43
      $region42: #{reverse.0} parent=38 // pred_region
        // Predicated region
        $region55: #{reverse.0} parent=42 // pred_check
          _
        $region56: #{reverse.0} parent=42 // pred_check_branch
          %367 = sbr.rel (0) target = $region58
        $region57: #{reverse.0} parent=42 // pred_region
          loop: start=0, step=1, limit=1
          $region59: #{reverse.0} parent=57 // loop_pre_header
            _
          $region60: #{reverse.0} parent=57 // loop_header
            %s369 = sphi 0, %s373
            %p370 = scmp.ge.s32.totalorder %s369, 1
            %s374 = sphi [#allocation1], [#allocation1]
            %s375 = sphi %s1, %s1
          $region61: #{reverse.0} parent=57 // loop_header_branch
            %372 = sbr.rel (%p370) target = $region65
          $region62: #{reverse.0} parent=57 // loop_body
            %v376 = vld [vmem:[%s374] sm:$0xff]
            %377 = vst [vmem:[%s375] sm:$0xff] %v376
            %v378 = vld [vmem:[%s374 + $0x8] sm:$0xff]
            %379 = vst [vmem:[%s375 + $0x8] sm:$0xff] %v378
            %v380 = vld [vmem:[%s374 + $0x10] sm:$0xff]
            %381 = vst [vmem:[%s375 + $0x10] sm:$0xff] %v380
            %v382 = vld [vmem:[%s374 + $0x18] sm:$0xff]
            %383 = vst [vmem:[%s375 + $0x18] sm:$0xff] %v382
            %v384 = vld [vmem:[%s374 + $0x20] sm:$0xff]
            %385 = vst [vmem:[%s375 + $0x20] sm:$0xff] %v384
            %v386 = vld [vmem:[%s374 + $0x28] sm:$0xff]
            %387 = vst [vmem:[%s375 + $0x28] sm:$0xff] %v386
            %v388 = vld [vmem:[%s374 + $0x30] sm:$0xff]
            %389 = vst [vmem:[%s375 + $0x30] sm:$0xff] %v388
            %v390 = vld [vmem:[%s374 + $0x38] sm:$0xff]
            %391 = vst [vmem:[%s375 + $0x38] sm:$0xff] %v390
            %v392 = vld [vmem:[%s374 + $0x40] sm:$0xff]
            %393 = vst [vmem:[%s375 + $0x40] sm:$0xff] %v392
            %v394 = vld [vmem:[%s374 + $0x48] sm:$0xff]
            %395 = vst [vmem:[%s375 + $0x48] sm:$0xff] %v394
            %v396 = vld [vmem:[%s374 + $0x50] sm:$0xff]
            %397 = vst [vmem:[%s375 + $0x50] sm:$0xff] %v396
            %v398 = vld [vmem:[%s374 + $0x58] sm:$0xff]
            %399 = vst [vmem:[%s375 + $0x58] sm:$0xff] %v398
            %v400 = vld [vmem:[%s374 + $0x60] sm:$0xff]
            %401 = vst [vmem:[%s375 + $0x60] sm:$0xff] %v400
            %v402 = vld [vmem:[%s374 + $0x68] sm:$0xff]
            %403 = vst [vmem:[%s375 + $0x68] sm:$0xff] %v402
            %v404 = vld [vmem:[%s374 + $0x70] sm:$0xff]
            %405 = vst [vmem:[%s375 + $0x70] sm:$0xff] %v404
            %v406 = vld [vmem:[%s374 + $0x78] sm:$0xff]
            %407 = vst [vmem:[%s375 + $0x78] sm:$0xff] %v406
          $region63: #{reverse.0} parent=57 // loop_footer
            %s373 = sadd.s32 1, %s369
          $region64: #{reverse.0} parent=57 // loop_footer_branch
            %368 = sbr.rel target = $region60
          $region65: #{reverse.0} parent=57 // loop_exit
            _
        $region58: #{reverse.0} parent=42 // pred_fallthru
          _
        // Predicated region
        $region66: #{reverse.0} parent=42 // pred_check
          _
        $region67: #{reverse.0} parent=42 // pred_check_branch
          %409 = sbr.rel target = $region69
        $region68: #{reverse.0} parent=42 // pred_region
          _
        $region69: #{reverse.0} parent=42 // pred_fallthru
          _
      $region43: #{reverse.0} parent=38 // pred_fallthru
        _
      // Predicated region
      $region44: #{reverse.0} parent=38 // pred_check
        _
      $region45: #{reverse.0} parent=38 // pred_check_branch
        %323 = sbr.rel target = $region47
      $region46: #{reverse.0} parent=38 // pred_region
        %s325 = ssub.s32 256, 1
        loop: start=0, step=1, limit=1
        $region48: #{reverse.0} parent=46 // loop_pre_header
          _
        $region49: #{reverse.0} parent=46 // loop_header
          %s327 = sphi 0, %s331
          %p328 = scmp.ge.s32.totalorder %s327, 1
          %s332 = sphi [#allocation1], [#allocation1]
          %s333 = sphi %s1, %s1
        $region50: #{reverse.0} parent=46 // loop_header_branch
          %330 = sbr.rel (%p328) target = $region54
        $region51: #{reverse.0} parent=46 // loop_body
          %v334 = vld [vmem:[%s332] sm:%s325]
          %335 = vst [vmem:[%s333] sm:%s325] %v334
          %v336 = vld [vmem:[%s332 + $0x8] sm:%s325]
          %337 = vst [vmem:[%s333 + $0x8] sm:%s325] %v336
          %v338 = vld [vmem:[%s332 + $0x10] sm:%s325]
          %339 = vst [vmem:[%s333 + $0x10] sm:%s325] %v338
          %v340 = vld [vmem:[%s332 + $0x18] sm:%s325]
          %341 = vst [vmem:[%s333 + $0x18] sm:%s325] %v340
          %v342 = vld [vmem:[%s332 + $0x20] sm:%s325]
          %343 = vst [vmem:[%s333 + $0x20] sm:%s325] %v342
          %v344 = vld [vmem:[%s332 + $0x28] sm:%s325]
          %345 = vst [vmem:[%s333 + $0x28] sm:%s325] %v344
          %v346 = vld [vmem:[%s332 + $0x30] sm:%s325]
          %347 = vst [vmem:[%s333 + $0x30] sm:%s325] %v346
          %v348 = vld [vmem:[%s332 + $0x38] sm:%s325]
          %349 = vst [vmem:[%s333 + $0x38] sm:%s325] %v348
          %v350 = vld [vmem:[%s332 + $0x40] sm:%s325]
          %351 = vst [vmem:[%s333 + $0x40] sm:%s325] %v350
          %v352 = vld [vmem:[%s332 + $0x48] sm:%s325]
          %353 = vst [vmem:[%s333 + $0x48] sm:%s325] %v352
          %v354 = vld [vmem:[%s332 + $0x50] sm:%s325]
          %355 = vst [vmem:[%s333 + $0x50] sm:%s325] %v354
          %v356 = vld [vmem:[%s332 + $0x58] sm:%s325]
          %357 = vst [vmem:[%s333 + $0x58] sm:%s325] %v356
          %v358 = vld [vmem:[%s332 + $0x60] sm:%s325]
          %359 = vst [vmem:[%s333 + $0x60] sm:%s325] %v358
          %v360 = vld [vmem:[%s332 + $0x68] sm:%s325]
          %361 = vst [vmem:[%s333 + $0x68] sm:%s325] %v360
          %v362 = vld [vmem:[%s332 + $0x70] sm:%s325]
          %363 = vst [vmem:[%s333 + $0x70] sm:%s325] %v362
          %v364 = vld [vmem:[%s332 + $0x78] sm:%s325]
          %365 = vst [vmem:[%s333 + $0x78] sm:%s325] %v364
        $region52: #{reverse.0} parent=46 // loop_footer
          %s331 = sadd.s32 1, %s327
        $region53: #{reverse.0} parent=46 // loop_footer_branch
          %326 = sbr.rel target = $region49
        $region54: #{reverse.0} parent=46 // loop_exit
          _
      $region47: #{reverse.0} parent=38 // pred_fallthru
        _
    $region39: #{reverse.0} parent=1 // pred_fallthru
      _
    %410 = vnop

// kernel: fre_layer_forward.5
$region0: #{fre_layer_forward.5}
  #allocation0 [shape = 'u32[]', space=smem, size = 0x4, offset = 0x4, fixed_abs, tag = 'smem constant byte address 0x4 - core index']
  #allocation1 [shape = 'u32[72,128]{1,0:T(1,128)}', space=vmem, size = 0x9000, scoped, tag = 'internal scratch']
  %s0 = inlined_call_operand.vmem [shape: f32[2,8,256], index: 0, kind: input, shape index: {}]
  %s1 = inlined_call_operand.vmem [shape: f32[8,8], index: 1, kind: input, shape index: {}]
  %s2 = inlined_call_operand.vmem [shape: f32[8,1], index: 2, kind: input, shape index: {}]
  %s3 = inlined_call_operand.vmem [shape: f32[2,8,256], index: 3, kind: output, shape index: {}]
  %s4 = sld [smem:[#allocation0]]
  $region45: #{fre_layer_forward.5} parent=0
    _
  %s6 = ssub.s32 1, %s4
  %s7 = scalar_select 0, %s6, %s4
  loop: start=0, step=1, limit=4
  $region2: #{fre_layer_forward.5} parent=0 // loop_pre_header
    _
  $region3: #{fre_layer_forward.5} parent=0 // loop_header
    %s9 = sphi 0, %s13
    %p10 = scmp.ge.s32.totalorder %s9, 4
    %s16 = sphi 0, %s28
    %s17 = sphi 0, %s24
    %s18 = sphi 0, %s16
    %s19 = sphi 0, %s17
    %s20 = sphi 0, %s18
    %s21 = sphi 0, %s19
    %s33 = sphi 0, %s35
    %s36 = sphi 0, %s33
    %s37 = sphi 0, %s36
    %s53 = sphi 0, %s37
    %s57 = sphi 0, %s57
    %s59 = sphi 0, %s57
    %s60 = sphi 0, %s59
    %s74 = sphi 0, %s60
    %s78 = sphi 0, %s78
    %s80 = sphi 0, %s78
    %s81 = sphi 0, %s80
    %s95 = sphi 0, %s81
    %s103 = sphi 0, %s105
    %s106 = sphi 0, %s103
    %s107 = sphi 0, %s106
    %s123 = sphi 0, %s107
  $region4: #{fre_layer_forward.5} parent=0 // loop_header_branch
    %12 = sbr.rel (%p10) target = $region8
  $region5: #{fre_layer_forward.5} parent=0 // loop_body
    %s14 = ssub.s32 %s9, 1
    %s15 = ssub.s32 %s9, 2
    %s22 = sadd.s32 1, %s17
    %p23 = scmp.ge.s32.totalorder %s22, 1
    %s24 = scalar_select %p23, 0, %s22
    %s25 = sadd.s32 1, %s16
    %s26 = scalar_select %p23, %s25, %s16
    %p27 = scmp.ge.s32.totalorder %s26, 2
    %s28 = scalar_select %p27, 0, %s26
    %s29 = ssub.s32 %s16, %s28
    %s30 = ssub.s32 %s17, %s24
    %s31 = sor.u32 %s29, %s30
    %p32 = scmp.eq.s32.totalorder %s31, 0
    %s34 = sadd.s32 %s33, 1
    %s35 = scalar_select %p32, %s33, %s34
    %p38 = pneg %p32
    %p39 = scmp.eq.s32.totalorder %s9, 1
    %p40 = por %p38, %p39
    %p41 = scmp.ne.s32.totalorder %s33, %s36
    %p42 = scmp.eq.s32.totalorder %s9, 0
    %p43 = por %p41, %p42
    %p44 = scmp.ne.s32.totalorder %s33, %s36
    %p45 = scmp.eq.s32.totalorder %s14, 1
    %p46 = por %p44, %p45
    %p47 = scmp.ne.s32.totalorder %s36, %s37
    %p48 = scmp.eq.s32.totalorder %s14, 0
    %p49 = por %p47, %p48
    %p50 = scmp.ne.s32.totalorder %s36, %s37
    %p51 = scmp.eq.s32.totalorder %s15, 1
    %p52 = por %p50, %p51
    %p54 = scmp.ne.s32.totalorder %s37, %s53
    %p55 = scmp.eq.s32.totalorder %s15, 0
    %p56 = por %p54, %p55
    %s58 = sadd.s32 %s57, 1
    %p61 = scmp.eq.s32.totalorder %s9, 1
    %p62 = scmp.ne.s32.totalorder %s57, %s59
    %p63 = scmp.eq.s32.totalorder %s9, 0
    %p64 = por %p62, %p63
    %p65 = scmp.ne.s32.totalorder %s57, %s59
    %p66 = scmp.eq.s32.totalorder %s14, 1
    %p67 = por %p65, %p66
    %p68 = scmp.ne.s32.totalorder %s59, %s60
    %p69 = scmp.eq.s32.totalorder %s14, 0
    %p70 = por %p68, %p69
    %p71 = scmp.ne.s32.totalorder %s59, %s60
    %p72 = scmp.eq.s32.totalorder %s15, 1
    %p73 = por %p71, %p72
    %p75 = scmp.ne.s32.totalorder %s60, %s74
    %p76 = scmp.eq.s32.totalorder %s15, 0
    %p77 = por %p75, %p76
    %s79 = sadd.s32 %s78, 1
    %p82 = scmp.eq.s32.totalorder %s9, 1
    %p83 = scmp.ne.s32.totalorder %s78, %s80
    %p84 = scmp.eq.s32.totalorder %s9, 0
    %p85 = por %p83, %p84
    %p86 = scmp.ne.s32.totalorder %s78, %s80
    %p87 = scmp.eq.s32.totalorder %s14, 1
    %p88 = por %p86, %p87
    %p89 = scmp.ne.s32.totalorder %s80, %s81
    %p90 = scmp.eq.s32.totalorder %s14, 0
    %p91 = por %p89, %p90
    %p92 = scmp.ne.s32.totalorder %s80, %s81
    %p93 = scmp.eq.s32.totalorder %s15, 1
    %p94 = por %p92, %p93
    %p96 = scmp.ne.s32.totalorder %s81, %s95
    %p97 = scmp.eq.s32.totalorder %s15, 0
    %p98 = por %p96, %p97
    %s99 = ssub.s32 %s16, %s28
    %s100 = ssub.s32 %s17, %s24
    %s101 = sor.u32 %s99, %s100
    %p102 = scmp.eq.s32.totalorder %s101, 0
    %s104 = sadd.s32 %s103, 1
    %s105 = scalar_select %p102, %s103, %s104
    %p108 = pneg %p102
    %p109 = scmp.eq.s32.totalorder %s9, 1
    %p110 = por %p108, %p109
    %p111 = scmp.ne.s32.totalorder %s103, %s106
    %p112 = scmp.eq.s32.totalorder %s9, 0
    %p113 = por %p111, %p112
    %p114 = scmp.ne.s32.totalorder %s103, %s106
    %p115 = scmp.eq.s32.totalorder %s14, 1
    %p116 = por %p114, %p115
    %p117 = scmp.ne.s32.totalorder %s106, %s107
    %p118 = scmp.eq.s32.totalorder %s14, 0
    %p119 = por %p117, %p118
    %p120 = scmp.ne.s32.totalorder %s106, %s107
    %p121 = scmp.eq.s32.totalorder %s15, 1
    %p122 = por %p120, %p121
    %p124 = scmp.ne.s32.totalorder %s107, %s123
    %p125 = scmp.eq.s32.totalorder %s15, 0
    %p126 = por %p124, %p125
    %p127 = scmp.le.s32.totalorder 1, %s9
    %p128 = scmp.lt.s32.totalorder %s9, 3
    %p129 = pnand %p127, %p128
    %p130 = pneg %p129
    // Predicated region
    $region9: #{fre_layer_forward.5} parent=5 // pred_check
      _
    $region10: #{fre_layer_forward.5} parent=5 // pred_check_branch
      %132 = sbr.rel (%p129) target = $region12
    $region11: #{fre_layer_forward.5} parent=5 // pred_region
      %s133 = ssub.s32 %s9, 1
      // Predicated region
      $region13: #{fre_layer_forward.5} parent=11 // pred_check
        %p134 = pneg %p70
      $region14: #{fre_layer_forward.5} parent=11 // pred_check_branch
        %136 = sbr.rel (%p134) target = $region16
      $region15: #{fre_layer_forward.5} parent=11 // pred_region
        _
      $region16: #{fre_layer_forward.5} parent=11 // pred_fallthru
        _
      // Predicated region
      $region17: #{fre_layer_forward.5} parent=11 // pred_check
        %p137 = pneg %p91
      $region18: #{fre_layer_forward.5} parent=11 // pred_check_branch
        %139 = sbr.rel (%p137) target = $region20
      $region19: #{fre_layer_forward.5} parent=11 // pred_region
        _
      $region20: #{fre_layer_forward.5} parent=11 // pred_fallthru
        _
    $region12: #{fre_layer_forward.5} parent=5 // pred_fallthru
      _
    %p140 = scmp.lt.s32.totalorder %s9, 2
    // Predicated region
    $region21: #{fre_layer_forward.5} parent=5 // pred_check
      %p141 = pneg %p140
    $region22: #{fre_layer_forward.5} parent=5 // pred_check_branch
      %143 = sbr.rel (%p141) target = $region24
    $region23: #{fre_layer_forward.5} parent=5 // pred_region
      // Predicated region
      $region25: #{fre_layer_forward.5} parent=23 // pred_check
        %p144 = pneg %p43
      $region26: #{fre_layer_forward.5} parent=23 // pred_check_branch
        %146 = sbr.rel (%p144) target = $region28
      $region27: #{fre_layer_forward.5} parent=23 // pred_region
        %s147 = smul.u32 2, %s17
        %p148 = scmp.lt.s32.totalorder %s16, 1
        %s149 = scalar_select %p148, %s16, 1
        %p150 = scmp.lt.s32.totalorder %s147, 1
        %s151 = scalar_select %p150, %s147, 1
        %s152 = smul.addr %s149, 2
        %s153 = sadd.s32 %s151, %s152
        %s154 = smul.addr %s153, 8
        %s155 = scalar_lea.vmem %s0, %s154
        %s156 = smul.u32 2, %s17
      $region28: #{fre_layer_forward.5} parent=23 // pred_fallthru
        _
    $region24: #{fre_layer_forward.5} parent=5 // pred_fallthru
      _
    %p157 = scmp.le.s32.totalorder 1, %s9
    %p158 = scmp.lt.s32.totalorder %s9, 3
    %p159 = pnand %p157, %p158
    %p160 = pneg %p159
    // Predicated region
    $region29: #{fre_layer_forward.5} parent=5 // pred_check
      _
    $region30: #{fre_layer_forward.5} parent=5 // pred_check_branch
      %162 = sbr.rel (%p159) target = $region32
    $region31: #{fre_layer_forward.5} parent=5 // pred_region
      %s163 = ssub.s32 %s9, 1
      %s164 = smul.u32 2, %s19
      %p165 = scmp.lt.s32.totalorder %s18, 1
      %s166 = scalar_select %p165, %s18, 1
      %p167 = scmp.lt.s32.totalorder %s164, 1
      %s168 = scalar_select %p167, %s164, 1
      %s169 = smul.addr %s166, 2
      %s170 = sadd.s32 %s168, %s169
      %s171 = smul.addr %s170, 8
      %s172 = scalar_lea.vmem %s0, %s171
      %p173 = pneg %p49
      %p174 = pneg %p46
      %p175 = pneg %p70
      %p176 = pneg %p67
      %p177 = pneg %p91
      %p178 = pneg %p88
      %p179 = pneg %p119
      %p180 = pneg %p116
      %s181 = smul.u32 2, %s19
      %p182 = scmp.lt.s32.totalorder %s18, 1
      %s183 = scalar_select %p182, %s18, 1
      %p184 = scmp.lt.s32.totalorder %s181, 1
      %s185 = scalar_select %p184, %s181, 1
      %s186 = smul.addr %s183, 2
      %s187 = sadd.s32 %s185, %s186
      %s188 = smul.addr %s187, 8
      %s189 = scalar_lea.vmem %s3, %s188
      %s190 = smul.u32 2, %s19
      %p191 = scmp.lt.s32.totalorder %s18, 1
      %s192 = scalar_select %p191, %s18, 1
      %p193 = scmp.lt.s32.totalorder %s190, 1
      %s194 = scalar_select %p193, %s190, 1
      %s195 = smul.addr %s192, 2
      %s196 = sadd.s32 %s194, %s195
      %s197 = smul.addr %s196, 8
      %s198 = scalar_lea.vmem %s0, %s197
      %s199 = smul.u32 2, %s19
      %s200 = smul.u32 2, %s19
      %p201 = scmp.lt.s32.totalorder %s18, 1
      %s202 = scalar_select %p201, %s18, 1
      %p203 = scmp.lt.s32.totalorder %s200, 1
      %s204 = scalar_select %p203, %s200, 1
      %s205 = smul.addr %s202, 2
      %s206 = sadd.s32 %s204, %s205
      %s207 = smul.addr %s206, 8
      %s208 = scalar_lea.vmem %s3, %s207
      %s209 = smul.u32 2, %s19
      %v210 = vld [vmem:[%s198] sm:$0xff]
      %v211 = vld [vmem:[%s198 + $0x8] sm:$0xff]
      %v212 = vand.u32 2147483647, %v210
      %v213 = vand.u32 2147483647, %v211
      %v214 = vld [vmem:[%s1] sm:$0xff]
      %v215 = vld [vmem:[%s2] sm:$0xff]
      %217 = vset.pattern.permute.xlu0 0
      %218 = vperm.xlu0 %217, %v215
      %v219 = vpop.permute.xlu0 %218
      %vm221 = vcmask 64512
      %v223 = vsel %vm221, %v214, 0
      %225 = vmatpush.msra.mxu0 0.0
      %226 = vmatpush.msra.mxu0 0.0
      %227 = vmatpush.msra.mxu0 0.0
      %228 = vmatpush.msra.mxu0 0.0
      %229 = vmatpush.msra.mxu0 0.0
      %230 = vmatpush.msra.mxu0 0.0
      %231 = vmatpush.msra.mxu0 0.0
      %232 = vmatpush.msra.mxu0 0.0
      %233 = vmatpush.msra.mxu0 0.0
      %234 = vmatpush.msra.mxu0 0.0
      %235 = vmatpush.msra.mxu0 0.0
      %236 = vmatpush.msra.mxu0 0.0
      %237 = vmatpush.msra.mxu0 0.0
      %238 = vmatpush.msra.mxu0 0.0
      %239 = vmatpush.msra.mxu0 0.0
      %240 = vmatpush.msra.mxu0 %v212
      %241 = vmatmul.f32.gmra.mxu0 %v223
      %v242 = vpop.f32.mrf.mxu0
      %v243 = vadd.f32 %v219, %v242
      %244 = vdwg.mxu0
      %245 = vmatpush.msra.mxu0 0.0
      %246 = vmatpush.msra.mxu0 0.0
      %247 = vmatpush.msra.mxu0 0.0
      %248 = vmatpush.msra.mxu0 0.0
      %249 = vmatpush.msra.mxu0 0.0
      %250 = vmatpush.msra.mxu0 0.0
      %251 = vmatpush.msra.mxu0 0.0
      %252 = vmatpush.msra.mxu0 0.0
      %253 = vmatpush.msra.mxu0 0.0
      %254 = vmatpush.msra.mxu0 0.0
      %255 = vmatpush.msra.mxu0 0.0
      %256 = vmatpush.msra.mxu0 0.0
      %257 = vmatpush.msra.mxu0 0.0
      %258 = vmatpush.msra.mxu0 0.0
      %259 = vmatpush.msra.mxu0 0.0
      %260 = vmatpush.msra.mxu0 %v213
      %261 = vmatmul.f32.gmra.mxu0 %v223
      %v262 = vpop.f32.mrf.mxu0
      %v263 = vadd.f32 %v219, %v262
      %264 = vdwg.mxu0
      %265 = vst [vmem:[%s208] sm:$0xff] %v243
      %266 = vst [vmem:[%s208 + $0x8] sm:$0xff] %v263
      %s267 = smul.u32 2, %s19
      %p268 = scmp.lt.s32.totalorder %s18, 1
      %s269 = scalar_select %p268, %s18, 1
      %p270 = scmp.lt.s32.totalorder %s267, 1
      %s271 = scalar_select %p270, %s267, 1
      %s272 = smul.addr %s269, 2
      %s273 = sadd.s32 %s271, %s272
      %s274 = smul.addr %s273, 8
      %s275 = scalar_lea.vmem %s3, %s274
      // Predicated region
      $region33: #{fre_layer_forward.5} parent=31 // pred_check
        %p276 = pneg %p116
      $region34: #{fre_layer_forward.5} parent=31 // pred_check_branch
        %278 = sbr.rel (%p276) target = $region36
      $region35: #{fre_layer_forward.5} parent=31 // pred_region
        %s279 = smul.u32 2, %s19
      $region36: #{fre_layer_forward.5} parent=31 // pred_fallthru
        _
    $region32: #{fre_layer_forward.5} parent=5 // pred_fallthru
      _
    %p280 = scmp.le.s32.totalorder 2, %s9
    // Predicated region
    $region37: #{fre_layer_forward.5} parent=5 // pred_check
      %p281 = pneg %p280
    $region38: #{fre_layer_forward.5} parent=5 // pred_check_branch
      %283 = sbr.rel (%p281) target = $region40
    $region39: #{fre_layer_forward.5} parent=5 // pred_region
      %s284 = ssub.s32 %s9, 2
      // Predicated region
      $region41: #{fre_layer_forward.5} parent=39 // pred_check
        %p285 = pneg %p122
      $region42: #{fre_layer_forward.5} parent=39 // pred_check_branch
        %287 = sbr.rel (%p285) target = $region44
      $region43: #{fre_layer_forward.5} parent=39 // pred_region
        %s288 = smul.u32 2, %s21
        %p289 = scmp.lt.s32.totalorder %s20, 1
        %s290 = scalar_select %p289, %s20, 1
        %p291 = scmp.lt.s32.totalorder %s288, 1
        %s292 = scalar_select %p291, %s288, 1
        %s293 = smul.addr %s290, 2
        %s294 = sadd.s32 %s292, %s293
        %s295 = smul.addr %s294, 8
        %s296 = scalar_lea.vmem %s3, %s295
      $region44: #{fre_layer_forward.5} parent=39 // pred_fallthru
        _
    $region40: #{fre_layer_forward.5} parent=5 // pred_fallthru
      _
  $region6: #{fre_layer_forward.5} parent=0 // loop_footer
    %s13 = sadd.s32 1, %s9
  $region7: #{fre_layer_forward.5} parent=0 // loop_footer_branch
    %8 = sbr.rel target = $region3
  $region8: #{fre_layer_forward.5} parent=0 // loop_exit
    _

</llo_original>
